<compile_context>
chip_gen: v7x
topology: tpu7x:2x2x1
jax: 0.10.0
libtpu: 0.0.40
codegen_flags: <defaults>
</compile_context>

<pallas_src>
import functools

import numpy as np

import jax
import jax.numpy as jnp
from jax.experimental import pallas as pl
from jax.experimental.pallas import tpu as pltpu

HIDDEN = 512
NEG_SLOPE = 0.01   # torch.nn.LeakyReLU default
EPS = 1e-5         # torch.nn.LayerNorm default


def _leaky_relu(v):
    return jnp.where(v >= 0, v, NEG_SLOPE * v)


def _group_layernorm(h, G, inv_n):
    """LayerNorm([L, 512], elementwise_affine=False) per batch item on a
    (rows, 512) f32 tile.  h is first reduced to per-row lane sums (rows, 1);
    the per-group (= per batch item) sums are then gathered/broadcast with a
    tiny block-diagonal (rows, rows) @ (rows, 1) matmul (G is a grid-invariant
    0/1 input), so no quadratic-in-rows VPU work and no full-width G matmuls."""
    row_sum = jnp.sum(h, axis=-1, keepdims=True)                          # (rows, 1)
    mean = jnp.dot(G, row_sum, preferred_element_type=jnp.float32) * inv_n
    c = h - mean
    row_sq = jnp.sum(c * c, axis=-1, keepdims=True)                       # (rows, 1)
    var = jnp.dot(G, row_sq, preferred_element_type=jnp.float32) * inv_n
    return c * jax.lax.rsqrt(var + EPS)


def _modulation_kernel(x_ref, emb_ref, g_ref, wfc_ref, w1_ref, gw2_ref, bw2_ref,
                       v512_ref, v1024_ref, out_ref, *, inv_n):
    wdt = wfc_ref.dtype                      # MXU operand dtype (bf16 or f32)
    x = x_ref[...]                           # (rows, 512) f32
    emb = emb_ref[...]                       # (rows, 512) f32
    G = g_ref[...]                           # (rows, rows) f32, block-diag ones
    v512 = v512_ref[...]                     # (3, 512) f32: [fc_b, g_b2, b_b2]
    v1024 = v1024_ref[...]                   # (3, 1024) f32: [b1, ln_w, ln_b] (gamma|beta)

    fc_b = v512[0:1]
    g_b2 = v512[1:2]
    b_b2 = v512[2:3]
    b1_cat = v1024[0:1]
    lnw_cat = v1024[1:2]
    lnb_cat = v1024[2:3]

    # fc: Linear(512, 512), then joint LayerNorm over (L, 512) per batch item.
    h = (jnp.dot(x.astype(wdt), wfc_ref[...], preferred_element_type=jnp.float32)
         + fc_b)
    xn = _group_layernorm(h, G, inv_n)

    # One matmul computes both branch pre-activations (w1_cat = [g_w1 | b_w1]);
    # both biases are applied in one fused add over the 1024-lane block.
    pre = (jnp.dot(emb.astype(wdt), w1_ref[...], preferred_element_type=jnp.float32)
           + b1_cat)                                                    # (rows, 1024)

    def branch_tail(t, lnw, lnb, w2, b2):
        # LayerNorm([512]) affine -> LeakyReLU -> Linear (f32 elementwise, bf16 dot)
        m = jnp.mean(t, axis=-1, keepdims=True)
        c = t - m
        v = jnp.mean(c * c, axis=-1, keepdims=True)
        a = _leaky_relu(c * jax.lax.rsqrt(v + EPS) * lnw + lnb)
        return jnp.dot(a.astype(w2.dtype), w2, preferred_element_type=jnp.float32) + b2

    gamma = branch_tail(pre[:, :HIDDEN], lnw_cat[:, :HIDDEN], lnb_cat[:, :HIDDEN],
                        gw2_ref[...], g_b2)
    beta = branch_tail(pre[:, HIDDEN:], lnw_cat[:, HIDDEN:], lnb_cat[:, HIDDEN:],
                       bw2_ref[...], b_b2)

    out = xn * (1.0 + gamma) + beta
    out_ref[...] = _leaky_relu(out).astype(out_ref.dtype)


def _cut_kernel(x_ref, wfc_ref, bfc_ref, g_ref, out_ref, *, inv_n):
    # Lean cut_flag==1 path: fc + joint LayerNorm only (no embedding / branch weights).
    wdt = wfc_ref.dtype
    h = (jnp.dot(x_ref[...].astype(wdt), wfc_ref[...],
                 preferred_element_type=jnp.float32) + bfc_ref[...])
    out_ref[...] = _group_layernorm(h, g_ref[...], inv_n).astype(out_ref.dtype)


@functools.lru_cache(maxsize=None)
def _group_matrix(bt, L):
    """(rows, rows) f32 block-diagonal ones: row r belongs to group r // L."""
    rows = bt * L
    gid = np.arange(rows) // L
    return jnp.asarray((gid[:, None] == gid[None, :]).astype(np.float32))


def _pick_batch_tile(B, L, target_rows=512):
    """Batch items per grid step.

    Constraints: Bt divides B and Bt*L rows are sublane-aligned (multiple of 8)
    unless the tile covers the whole array.  Prefers up to ~target_rows rows per
    step (fills the MXU M dimension, amortizes per-step overhead).  The grid is
    only split into multiple steps when the problem is large enough that every
    step still has >= 256 rows — splitting tiny problems just doubles per-step
    overhead on single-TensorCore v5e/v6e with no parallelism gain."""
    best = B
    for bt in range(B, 0, -1):
        if B % bt:
            continue
        rows = bt * L
        if rows % 8 != 0 and bt != B:
            continue
        if rows <= target_rows:
            best = bt
            break
    if best == B and B * L >= 512:   # big problem, one step: split for megacore
        for bt in range(B // 2, 0, -1):
            if B % bt == 0 and (bt * L) % 8 == 0 and bt * L >= 256:
                best = bt
                break
    return best


def pack_params(params, mxu_dtype=jnp.bfloat16):
    """One-time packing: bf16 (or f32) MXU weights, concatenated branch first
    layer, and two small f32 vector blocks. Call once, reuse every forward."""
    wd = mxu_dtype
    v512 = jnp.concatenate([params["fc_b"], params["g_b2"], params["b_b2"]], axis=0)
    v1024 = jnp.concatenate(
        [jnp.concatenate([params["g_b1"], params["b_b1"]], axis=1),
         jnp.concatenate([params["g_lnw"], params["b_lnw"]], axis=1),
         jnp.concatenate([params["g_lnb"], params["b_lnb"]], axis=1)], axis=0)
    return {
        "fc_w": params["fc_w"].astype(wd),
        "w1_cat": jnp.concatenate([params["g_w1"], params["b_w1"]], axis=1).astype(wd),
        "g_w2": params["g_w2"].astype(wd),
        "b_w2": params["b_w2"].astype(wd),
        "fc_b": params["fc_b"].astype(jnp.float32),     # (1, 512) f32 (cut path)
        "v512": v512.astype(jnp.float32),               # (3, 512)
        "v1024": v1024.astype(jnp.float32),             # (3, 1024)
    }


def modulation_module(x, embedding, packed, cut_flag=0):
    B, L, H = x.shape
    assert H == HIDDEN and embedding.shape == (B, L, HIDDEN)

    bt = _pick_batch_tile(B, L)
    rows = bt * L
    M = B * L
    grid = (M // rows,)
    inv_n = 1.0 / (L * HIDDEN)

    blk = pl.BlockSpec((rows, H), lambda i: (i, 0))

    def full(shape):  # grid-invariant (weights / packed vectors / G): DMA'd once
        return pl.BlockSpec(shape, lambda i: (0,) * len(shape))

    cparams = pltpu.CompilerParams(
        dimension_semantics=("parallel",),
        vmem_limit_bytes=32 * 1024 * 1024,   # fits v7x's 64 MiB/TC VMEM; ~14 MiB used
    )

    x2 = x.reshape(M, H).astype(jnp.float32)
    G = _group_matrix(bt, L)

    if cut_flag == 1:
        out = pl.pallas_call(
            functools.partial(_cut_kernel, inv_n=inv_n),
            out_shape=jax.ShapeDtypeStruct((M, H), jnp.float32),
            grid_spec=pltpu.PrefetchScalarGridSpec(
                num_scalar_prefetch=0,
                grid=grid,
                in_specs=[blk, full((H, H)), full((1, H)), full((rows, rows))],
                out_specs=blk,
            ),
            compiler_params=cparams,
        )(x2, packed["fc_w"], packed["fc_b"], G)
        return out.reshape(B, L, H)

    emb2 = embedding.reshape(M, H).astype(jnp.float32)

    out = pl.pallas_call(
        functools.partial(_modulation_kernel, inv_n=inv_n),
        out_shape=jax.ShapeDtypeStruct((M, H), jnp.float32),
        grid_spec=pltpu.PrefetchScalarGridSpec(
            num_scalar_prefetch=0,
            grid=grid,
            in_specs=[blk, blk,
                      full((rows, rows)),
                      full((H, H)), full((H, 2 * H)),
                      full((H, H)), full((H, H)),
                      full((3, H)), full((3, 2 * H))],
            out_specs=blk,
        ),
        compiler_params=cparams,
    )(x2, emb2, G, packed["fc_w"], packed["w1_cat"],
      packed["g_w2"], packed["b_w2"], packed["v512"], packed["v1024"])
    return out.reshape(B, L, H)


def _reference(x, emb, p, cut_flag):
    h = x @ p["fc_w"] + p["fc_b"]
    mean = h.mean(axis=(1, 2), keepdims=True)
    var = ((h - mean) ** 2).mean(axis=(1, 2), keepdims=True)
    xn = (h - mean) / jnp.sqrt(var + EPS)
    if cut_flag == 1:
        return xn

    def branch(w1, b1, lnw, lnb, w2, b2):
        t = emb @ w1 + b1
        m = t.mean(-1, keepdims=True)
        v = ((t - m) ** 2).mean(-1, keepdims=True)
        t = (t - m) / jnp.sqrt(v + EPS) * lnw + lnb
        t = jnp.where(t >= 0, t, NEG_SLOPE * t)
        return t @ w2 + b2

    gamma = branch(p["g_w1"], p["g_b1"], p["g_lnw"], p["g_lnb"], p["g_w2"], p["g_b2"])
    beta = branch(p["b_w1"], p["b_b1"], p["b_lnw"], p["b_lnb"], p["b_w2"], p["b_b2"])
    out = xn * (1.0 + gamma) + beta
    return jnp.where(out >= 0, out, NEG_SLOPE * out)


def _init_params(key):
    bound = 1.0 / jnp.sqrt(HIDDEN)
    names_mat = ["fc_w", "g_w1", "g_w2", "b_w1", "b_w2"]
    names_vec = ["fc_b", "g_b1", "g_b2", "b_b1", "b_b2"]
    keys = jax.random.split(key, len(names_mat) + len(names_vec))
    p = {}
    for i, n in enumerate(names_mat):
        # stored as (in, out): the transpose of torch's (out, in) weight
        p[n] = jax.random.uniform(keys[i], (HIDDEN, HIDDEN), jnp.float32, -bound, bound)
    for j, n in enumerate(names_vec):
        p[n] = jax.random.uniform(keys[len(names_mat) + j], (1, HIDDEN),
                                  jnp.float32, -bound, bound)
    # LayerNorm([512]) affine params: PyTorch init (weight=1, bias=0)
    p["g_lnw"] = jnp.ones((1, HIDDEN), jnp.float32)
    p["g_lnb"] = jnp.zeros((1, HIDDEN), jnp.float32)
    p["b_lnw"] = jnp.ones((1, HIDDEN), jnp.float32)
    p["b_lnb"] = jnp.zeros((1, HIDDEN), jnp.float32)
    return p


if __name__ == "__main__":
    key = jax.random.PRNGKey(0)
    k_x, k_e, k_p = jax.random.split(key, 3)

    B, L = 4, 4  # batch=4, layernum=4 (hidden fixed at 512 by the module)
    x = jax.random.normal(k_x, (B, L, HIDDEN), jnp.float32)
    embedding = jax.random.normal(k_e, (B, L, HIDDEN), jnp.float32)
    params = _init_params(k_p)

    ref = _reference(x, embedding, params, cut_flag=0)
    ref_cut = _reference(x, embedding, params, cut_flag=1)

    # --- f32 MXU operands: exact-parity check against the f32 reference ---
    packed_f32 = pack_params(params, mxu_dtype=jnp.float32)
    out = modulation_module(x, embedding, packed_f32, cut_flag=0)
    jax.block_until_ready(out)
    assert jnp.allclose(out, ref, rtol=1e-4, atol=1e-4), float(jnp.max(jnp.abs(out - ref)))

    out_cut = modulation_module(x, embedding, packed_f32, cut_flag=1)
    jax.block_until_ready(out_cut)
    assert jnp.allclose(out_cut, ref_cut, rtol=1e-4, atol=1e-4), \
        float(jnp.max(jnp.abs(out_cut - ref_cut)))

    # --- bf16 MXU operands (default / fast path): relaxed tolerance ---
    packed_bf16 = pack_params(params, mxu_dtype=jnp.bfloat16)
    out_b = modulation_module(x, embedding, packed_bf16, cut_flag=0)
    jax.block_until_ready(out_b)
    assert jnp.allclose(out_b, ref, rtol=5e-2, atol=5e-2), \
        float(jnp.max(jnp.abs(out_b - ref)))

    out_bc = modulation_module(x, embedding, packed_bf16, cut_flag=1)
    jax.block_until_ready(out_bc)
    assert jnp.allclose(out_bc, ref_cut, rtol=5e-2, atol=5e-2), \
        float(jnp.max(jnp.abs(out_bc - ref_cut)))

    print("KERNEL_OK")
</pallas_src>

<mosaic_0001>
module attributes {stable_mosaic.version = 11 : i64} {
  func.func @_modulation_kernel(%arg0: i32, %arg1: memref<16x512xf32, #tpu.memory_space<vmem>>, %arg2: memref<16x512xf32, #tpu.memory_space<vmem>>, %arg3: memref<16x16xf32, #tpu.memory_space<vmem>>, %arg4: memref<512x512xf32, #tpu.memory_space<vmem>>, %arg5: memref<512x1024xf32, #tpu.memory_space<vmem>>, %arg6: memref<512x512xf32, #tpu.memory_space<vmem>>, %arg7: memref<512x512xf32, #tpu.memory_space<vmem>>, %arg8: memref<3x512xf32, #tpu.memory_space<vmem>>, %arg9: memref<3x1024xf32, #tpu.memory_space<vmem>>, %arg10: memref<16x512xf32, #tpu.memory_space<vmem>>) attributes {dimension_semantics = [#tpu.dimension_semantics<parallel>], iteration_bounds = array<i64: 1>, scalar_prefetch = 0 : i64, scratch_operands = 0 : i64, tpu.core_type = #tpu.core_type<tc>, window_params = [{transform_indices = @transform_0, window_bounds = array<i64: 16, 512>}, {transform_indices = @transform_1, window_bounds = array<i64: 16, 512>}, {pipeline_mode = #tpu.pipeline_mode<synchronous>, transform_indices = @transform_2, window_bounds = array<i64: 16, 16>}, {pipeline_mode = #tpu.pipeline_mode<synchronous>, transform_indices = @transform_3, window_bounds = array<i64: 512, 512>}, {pipeline_mode = #tpu.pipeline_mode<synchronous>, transform_indices = @transform_4, window_bounds = array<i64: 512, 1024>}, {pipeline_mode = #tpu.pipeline_mode<synchronous>, transform_indices = @transform_5, window_bounds = array<i64: 512, 512>}, {pipeline_mode = #tpu.pipeline_mode<synchronous>, transform_indices = @transform_6, window_bounds = array<i64: 512, 512>}, {pipeline_mode = #tpu.pipeline_mode<synchronous>, transform_indices = @transform_7, window_bounds = array<i64: 3, 512>}, {pipeline_mode = #tpu.pipeline_mode<synchronous>, transform_indices = @transform_8, window_bounds = array<i64: 3, 1024>}, {transform_indices = @transform_9, window_bounds = array<i64: 16, 512>}]} {
    %c0 = arith.constant 0 : index
    %c0_0 = arith.constant 0 : index
    %0 = vector.load %arg1[%c0, %c0_0] : memref<16x512xf32, #tpu.memory_space<vmem>>, vector<16x512xf32>
    %c0_1 = arith.constant 0 : index
    %c0_2 = arith.constant 0 : index
    %1 = vector.load %arg2[%c0_1, %c0_2] : memref<16x512xf32, #tpu.memory_space<vmem>>, vector<16x512xf32>
    %c0_3 = arith.constant 0 : index
    %c0_4 = arith.constant 0 : index
    %2 = vector.load %arg3[%c0_3, %c0_4] : memref<16x16xf32, #tpu.memory_space<vmem>>, vector<16x16xf32>
    %c0_5 = arith.constant 0 : index
    %c0_6 = arith.constant 0 : index
    %3 = vector.load %arg8[%c0_5, %c0_6] : memref<3x512xf32, #tpu.memory_space<vmem>>, vector<3x512xf32>
    %c0_7 = arith.constant 0 : index
    %c0_8 = arith.constant 0 : index
    %4 = vector.load %arg9[%c0_7, %c0_8] : memref<3x1024xf32, #tpu.memory_space<vmem>>, vector<3x1024xf32>
    %5 = vector.extract_strided_slice %3 {offsets = [0, 0], sizes = [1, 512], strides = [1, 1]} : vector<3x512xf32> to vector<1x512xf32>
    %6 = vector.extract_strided_slice %3 {offsets = [1, 0], sizes = [1, 512], strides = [1, 1]} : vector<3x512xf32> to vector<1x512xf32>
    %7 = vector.extract_strided_slice %3 {offsets = [2, 0], sizes = [1, 512], strides = [1, 1]} : vector<3x512xf32> to vector<1x512xf32>
    %8 = vector.extract_strided_slice %4 {offsets = [0, 0], sizes = [1, 1024], strides = [1, 1]} : vector<3x1024xf32> to vector<1x1024xf32>
    %9 = vector.extract_strided_slice %4 {offsets = [1, 0], sizes = [1, 1024], strides = [1, 1]} : vector<3x1024xf32> to vector<1x1024xf32>
    %10 = vector.extract_strided_slice %4 {offsets = [2, 0], sizes = [1, 1024], strides = [1, 1]} : vector<3x1024xf32> to vector<1x1024xf32>
    %c0_9 = arith.constant 0 : index
    %c0_10 = arith.constant 0 : index
    %11 = vector.load %arg4[%c0_9, %c0_10] : memref<512x512xf32, #tpu.memory_space<vmem>>, vector<512x512xf32>
    %cst = arith.constant dense<0.000000e+00> : vector<16x512xf32>
    %12 = tpu.matmul %0, %11, %cst {dimension_numbers = #tpu.dot_dimension_numbers<[1], [0], [0], [1], [0, 0, 1, 1], [], []>} : vector<16x512xf32>, vector<512x512xf32>, vector<16x512xf32> -> vector<16x512xf32>
    %13 = vector.broadcast %5 : vector<1x512xf32> to vector<16x512xf32>
    %14 = arith.addf %12, %13 : vector<16x512xf32>
    %cst_11 = arith.constant dense<0.000000e+00> : vector<16xf32>
    %15 = vector.multi_reduction <add>, %14, %cst_11 [1] : vector<16x512xf32> to vector<16xf32>
    %16 = vector.shape_cast %15 : vector<16xf32> to vector<16x1xf32>
    %cst_12 = arith.constant dense<0.000000e+00> : vector<16x1xf32>
    %17 = tpu.matmul %2, %16, %cst_12 {dimension_numbers = #tpu.dot_dimension_numbers<[1], [0], [0], [1], [0, 0, 1, 1], [], []>} : vector<16x16xf32>, vector<16x1xf32>, vector<16x1xf32> -> vector<16x1xf32>
    %cst_13 = arith.constant 4.8828125E-4 : f32
    %18 = vector.broadcast %cst_13 : f32 to vector<16x1xf32>
    %19 = arith.mulf %17, %18 : vector<16x1xf32>
    %20 = vector.broadcast %19 : vector<16x1xf32> to vector<16x512xf32>
    %21 = arith.subf %14, %20 : vector<16x512xf32>
    %22 = arith.mulf %21, %21 : vector<16x512xf32>
    %cst_14 = arith.constant dense<0.000000e+00> : vector<16xf32>
    %23 = vector.multi_reduction <add>, %22, %cst_14 [1] : vector<16x512xf32> to vector<16xf32>
    %24 = vector.shape_cast %23 : vector<16xf32> to vector<16x1xf32>
    %cst_15 = arith.constant dense<0.000000e+00> : vector<16x1xf32>
    %25 = tpu.matmul %2, %24, %cst_15 {dimension_numbers = #tpu.dot_dimension_numbers<[1], [0], [0], [1], [0, 0, 1, 1], [], []>} : vector<16x16xf32>, vector<16x1xf32>, vector<16x1xf32> -> vector<16x1xf32>
    %cst_16 = arith.constant 4.8828125E-4 : f32
    %26 = vector.broadcast %cst_16 : f32 to vector<16x1xf32>
    %27 = arith.mulf %25, %26 : vector<16x1xf32>
    %cst_17 = arith.constant 9.99999974E-6 : f32
    %28 = vector.broadcast %cst_17 : f32 to vector<16x1xf32>
    %29 = arith.addf %27, %28 : vector<16x1xf32>
    %30 = math.rsqrt %29 : vector<16x1xf32>
    %31 = vector.broadcast %30 : vector<16x1xf32> to vector<16x512xf32>
    %32 = arith.mulf %21, %31 : vector<16x512xf32>
    %c0_18 = arith.constant 0 : index
    %c0_19 = arith.constant 0 : index
    %33 = vector.load %arg5[%c0_18, %c0_19] : memref<512x1024xf32, #tpu.memory_space<vmem>>, vector<512x1024xf32>
    %cst_20 = arith.constant dense<0.000000e+00> : vector<16x1024xf32>
    %34 = tpu.matmul %1, %33, %cst_20 {dimension_numbers = #tpu.dot_dimension_numbers<[1], [0], [0], [1], [0, 0, 1, 1], [], []>} : vector<16x512xf32>, vector<512x1024xf32>, vector<16x1024xf32> -> vector<16x1024xf32>
    %35 = vector.broadcast %8 : vector<1x1024xf32> to vector<16x1024xf32>
    %36 = arith.addf %34, %35 : vector<16x1024xf32>
    %37 = vector.extract_strided_slice %36 {offsets = [0, 0], sizes = [16, 512], strides = [1, 1]} : vector<16x1024xf32> to vector<16x512xf32>
    %38 = vector.extract_strided_slice %9 {offsets = [0, 0], sizes = [1, 512], strides = [1, 1]} : vector<1x1024xf32> to vector<1x512xf32>
    %39 = vector.extract_strided_slice %10 {offsets = [0, 0], sizes = [1, 512], strides = [1, 1]} : vector<1x1024xf32> to vector<1x512xf32>
    %c0_21 = arith.constant 0 : index
    %c0_22 = arith.constant 0 : index
    %40 = vector.load %arg6[%c0_21, %c0_22] : memref<512x512xf32, #tpu.memory_space<vmem>>, vector<512x512xf32>
    %cst_23 = arith.constant dense<0.000000e+00> : vector<16xf32>
    %41 = vector.multi_reduction <add>, %37, %cst_23 [1] : vector<16x512xf32> to vector<16xf32>
    %42 = vector.shape_cast %41 : vector<16xf32> to vector<16x1xf32>
    %cst_24 = arith.constant 5.120000e+02 : f32
    %43 = vector.broadcast %cst_24 : f32 to vector<16x1xf32>
    %44 = arith.divf %42, %43 : vector<16x1xf32>
    %45 = vector.broadcast %44 : vector<16x1xf32> to vector<16x512xf32>
    %46 = arith.subf %37, %45 : vector<16x512xf32>
    %47 = arith.mulf %46, %46 : vector<16x512xf32>
    %cst_25 = arith.constant dense<0.000000e+00> : vector<16xf32>
    %48 = vector.multi_reduction <add>, %47, %cst_25 [1] : vector<16x512xf32> to vector<16xf32>
    %49 = vector.shape_cast %48 : vector<16xf32> to vector<16x1xf32>
    %cst_26 = arith.constant 5.120000e+02 : f32
    %50 = vector.broadcast %cst_26 : f32 to vector<16x1xf32>
    %51 = arith.divf %49, %50 : vector<16x1xf32>
    %cst_27 = arith.constant 9.99999974E-6 : f32
    %52 = vector.broadcast %cst_27 : f32 to vector<16x1xf32>
    %53 = arith.addf %51, %52 : vector<16x1xf32>
    %54 = math.rsqrt %53 : vector<16x1xf32>
    %55 = vector.broadcast %54 : vector<16x1xf32> to vector<16x512xf32>
    %56 = arith.mulf %46, %55 : vector<16x512xf32>
    %57 = vector.broadcast %38 : vector<1x512xf32> to vector<16x512xf32>
    %58 = arith.mulf %56, %57 : vector<16x512xf32>
    %59 = vector.broadcast %39 : vector<1x512xf32> to vector<16x512xf32>
    %60 = arith.addf %58, %59 : vector<16x512xf32>
    %cst_28 = arith.constant 0.000000e+00 : f32
    %61 = vector.broadcast %cst_28 : f32 to vector<16x512xf32>
    %62 = arith.cmpf oge, %60, %61 : vector<16x512xf32>
    %cst_29 = arith.constant 0.00999999977 : f32
    %63 = vector.broadcast %cst_29 : f32 to vector<16x512xf32>
    %64 = arith.mulf %63, %60 : vector<16x512xf32>
    %65 = arith.select %62, %60, %64 : vector<16x512xi1>, vector<16x512xf32>
    %cst_30 = arith.constant dense<0.000000e+00> : vector<16x512xf32>
    %66 = tpu.matmul %65, %40, %cst_30 {dimension_numbers = #tpu.dot_dimension_numbers<[1], [0], [0], [1], [0, 0, 1, 1], [], []>} : vector<16x512xf32>, vector<512x512xf32>, vector<16x512xf32> -> vector<16x512xf32>
    %67 = vector.broadcast %6 : vector<1x512xf32> to vector<16x512xf32>
    %68 = arith.addf %66, %67 : vector<16x512xf32>
    %69 = vector.extract_strided_slice %36 {offsets = [0, 512], sizes = [16, 512], strides = [1, 1]} : vector<16x1024xf32> to vector<16x512xf32>
    %70 = vector.extract_strided_slice %9 {offsets = [0, 512], sizes = [1, 512], strides = [1, 1]} : vector<1x1024xf32> to vector<1x512xf32>
    %71 = vector.extract_strided_slice %10 {offsets = [0, 512], sizes = [1, 512], strides = [1, 1]} : vector<1x1024xf32> to vector<1x512xf32>
    %c0_31 = arith.constant 0 : index
    %c0_32 = arith.constant 0 : index
    %72 = vector.load %arg7[%c0_31, %c0_32] : memref<512x512xf32, #tpu.memory_space<vmem>>, vector<512x512xf32>
    %cst_33 = arith.constant dense<0.000000e+00> : vector<16xf32>
    %73 = vector.multi_reduction <add>, %69, %cst_33 [1] : vector<16x512xf32> to vector<16xf32>
    %74 = vector.shape_cast %73 : vector<16xf32> to vector<16x1xf32>
    %cst_34 = arith.constant 5.120000e+02 : f32
    %75 = vector.broadcast %cst_34 : f32 to vector<16x1xf32>
    %76 = arith.divf %74, %75 : vector<16x1xf32>
    %77 = vector.broadcast %76 : vector<16x1xf32> to vector<16x512xf32>
    %78 = arith.subf %69, %77 : vector<16x512xf32>
    %79 = arith.mulf %78, %78 : vector<16x512xf32>
    %cst_35 = arith.constant dense<0.000000e+00> : vector<16xf32>
    %80 = vector.multi_reduction <add>, %79, %cst_35 [1] : vector<16x512xf32> to vector<16xf32>
    %81 = vector.shape_cast %80 : vector<16xf32> to vector<16x1xf32>
    %cst_36 = arith.constant 5.120000e+02 : f32
    %82 = vector.broadcast %cst_36 : f32 to vector<16x1xf32>
    %83 = arith.divf %81, %82 : vector<16x1xf32>
    %cst_37 = arith.constant 9.99999974E-6 : f32
    %84 = vector.broadcast %cst_37 : f32 to vector<16x1xf32>
    %85 = arith.addf %83, %84 : vector<16x1xf32>
    %86 = math.rsqrt %85 : vector<16x1xf32>
    %87 = vector.broadcast %86 : vector<16x1xf32> to vector<16x512xf32>
    %88 = arith.mulf %78, %87 : vector<16x512xf32>
    %89 = vector.broadcast %70 : vector<1x512xf32> to vector<16x512xf32>
    %90 = arith.mulf %88, %89 : vector<16x512xf32>
    %91 = vector.broadcast %71 : vector<1x512xf32> to vector<16x512xf32>
    %92 = arith.addf %90, %91 : vector<16x512xf32>
    %cst_38 = arith.constant 0.000000e+00 : f32
    %93 = vector.broadcast %cst_38 : f32 to vector<16x512xf32>
    %94 = arith.cmpf oge, %92, %93 : vector<16x512xf32>
    %cst_39 = arith.constant 0.00999999977 : f32
    %95 = vector.broadcast %cst_39 : f32 to vector<16x512xf32>
    %96 = arith.mulf %95, %92 : vector<16x512xf32>
    %97 = arith.select %94, %92, %96 : vector<16x512xi1>, vector<16x512xf32>
    %cst_40 = arith.constant dense<0.000000e+00> : vector<16x512xf32>
    %98 = tpu.matmul %97, %72, %cst_40 {dimension_numbers = #tpu.dot_dimension_numbers<[1], [0], [0], [1], [0, 0, 1, 1], [], []>} : vector<16x512xf32>, vector<512x512xf32>, vector<16x512xf32> -> vector<16x512xf32>
    %99 = vector.broadcast %7 : vector<1x512xf32> to vector<16x512xf32>
    %100 = arith.addf %98, %99 : vector<16x512xf32>
    %cst_41 = arith.constant 1.000000e+00 : f32
    %101 = vector.broadcast %cst_41 : f32 to vector<16x512xf32>
    %102 = arith.addf %101, %68 : vector<16x512xf32>
    %103 = arith.mulf %32, %102 : vector<16x512xf32>
    %104 = arith.addf %103, %100 : vector<16x512xf32>
    %cst_42 = arith.constant 0.000000e+00 : f32
    %105 = vector.broadcast %cst_42 : f32 to vector<16x512xf32>
    %106 = arith.cmpf oge, %104, %105 : vector<16x512xf32>
    %cst_43 = arith.constant 0.00999999977 : f32
    %107 = vector.broadcast %cst_43 : f32 to vector<16x512xf32>
    %108 = arith.mulf %107, %104 : vector<16x512xf32>
    %109 = arith.select %106, %104, %108 : vector<16x512xi1>, vector<16x512xf32>
    %c0_44 = arith.constant 0 : index
    %c0_45 = arith.constant 0 : index
    %110 = vector.load %arg10[%c0_44, %c0_45] : memref<16x512xf32, #tpu.memory_space<vmem>>, vector<16x512xf32>
    tpu.vector_store %arg10[%c0_44, %c0_45], %109 {strides = array<i32>} : memref<16x512xf32, #tpu.memory_space<vmem>>, vector<16x512xf32>,
    return
  }
  func.func @transform_0(%arg0: i32) -> (i32, i32) {
    %c0_i32 = arith.constant 0 : i32
    %c0_i32_0 = arith.constant 0 : i32
    return %arg0, %c0_i32 : i32, i32
  }
  func.func @transform_1(%arg0: i32) -> (i32, i32) {
    %c0_i32 = arith.constant 0 : i32
    %c0_i32_0 = arith.constant 0 : i32
    return %arg0, %c0_i32 : i32, i32
  }
  func.func @transform_2(%arg0: i32) -> (i32, i32) {
    %c0_i32 = arith.constant 0 : i32
    %c0_i32_0 = arith.constant 0 : i32
    %c0_i32_1 = arith.constant 0 : i32
    return %c0_i32, %c0_i32_0 : i32, i32
  }
  func.func @transform_3(%arg0: i32) -> (i32, i32) {
    %c0_i32 = arith.constant 0 : i32
    %c0_i32_0 = arith.constant 0 : i32
    %c0_i32_1 = arith.constant 0 : i32
    return %c0_i32, %c0_i32_0 : i32, i32
  }
  func.func @transform_4(%arg0: i32) -> (i32, i32) {
    %c0_i32 = arith.constant 0 : i32
    %c0_i32_0 = arith.constant 0 : i32
    %c0_i32_1 = arith.constant 0 : i32
    return %c0_i32, %c0_i32_0 : i32, i32
  }
  func.func @transform_5(%arg0: i32) -> (i32, i32) {
    %c0_i32 = arith.constant 0 : i32
    %c0_i32_0 = arith.constant 0 : i32
    %c0_i32_1 = arith.constant 0 : i32
    return %c0_i32, %c0_i32_0 : i32, i32
  }
  func.func @transform_6(%arg0: i32) -> (i32, i32) {
    %c0_i32 = arith.constant 0 : i32
    %c0_i32_0 = arith.constant 0 : i32
    %c0_i32_1 = arith.constant 0 : i32
    return %c0_i32, %c0_i32_0 : i32, i32
  }
  func.func @transform_7(%arg0: i32) -> (i32, i32) {
    %c0_i32 = arith.constant 0 : i32
    %c0_i32_0 = arith.constant 0 : i32
    %c0_i32_1 = arith.constant 0 : i32
    return %c0_i32, %c0_i32_0 : i32, i32
  }
  func.func @transform_8(%arg0: i32) -> (i32, i32) {
    %c0_i32 = arith.constant 0 : i32
    %c0_i32_0 = arith.constant 0 : i32
    %c0_i32_1 = arith.constant 0 : i32
    return %c0_i32, %c0_i32_0 : i32, i32
  }
  func.func @transform_9(%arg0: i32) -> (i32, i32) {
    %c0_i32 = arith.constant 0 : i32
    %c0_i32_0 = arith.constant 0 : i32
    return %arg0, %c0_i32 : i32, i32
  }
}

</mosaic_0001>

<llo_original>
// kernel: tpu_custom_call.1
$region0: #{tpu_custom_call.1}
  #allocation0 [shape = 'u32[]', space=smem, size = 0x4, offset = 0x4, fixed_abs, tag = 'smem constant byte address 0x4 - core index']
  #allocation1 [shape = 'u32[144,128]{1,0:T(1,128)}', space=vmem, size = 0x12000, scoped, tag = 'internal scratch']
  %s0 = inlined_call_operand.hbm [shape: f32[16,512], index: 0, kind: input, shape index: {}]
  %s1 = inlined_call_operand.hbm [shape: f32[16,512], index: 1, kind: input, shape index: {}]
  %s2 = inlined_call_operand.hbm [shape: f32[16,16], index: 2, kind: input, shape index: {}]
  %s3 = inlined_call_operand.hbm [shape: f32[512,512], index: 3, kind: input, shape index: {}]
  %s4 = inlined_call_operand.hbm [shape: f32[512,1024], index: 4, kind: input, shape index: {}]
  %s5 = inlined_call_operand.hbm [shape: f32[512,512], index: 5, kind: input, shape index: {}]
  %s6 = inlined_call_operand.hbm [shape: f32[512,512], index: 6, kind: input, shape index: {}]
  %s7 = inlined_call_operand.hbm [shape: f32[3,512], index: 7, kind: input, shape index: {}]
  %s8 = inlined_call_operand.hbm [shape: f32[3,1024], index: 8, kind: input, shape index: {}]
  %s9 = inlined_call_operand.hbm [shape: f32[16,512], index: 9, kind: output, shape index: {}]
  %s10 = sld [smem:[#allocation0]]
  $region82: #{tpu_custom_call.1} parent=0
    _
  %s12 = ssub.s32 1, %s10
  %s13 = scalar_select 0, %s12, %s10
  $region1: #{tpu_custom_call.1} parent=0
    #allocation2 [shape = 'u8[32768]{0}', space=vmem, size = 0x8000, scoped, tag = 'input window, operand 0, single buffered']
    #allocation3 [shape = 's32[1]{0}', space=sflag, size = 0x4, scoped, tag = 'scoped memory for tpu_custom_call.1']
    #allocation4 [shape = 's32[1]{0}', space=sflag, size = 0x4, scoped, tag = 'scoped memory for tpu_custom_call.1']
    #allocation5 [shape = 'u8[32768]{0}', space=vmem, size = 0x8000, scoped, tag = 'input window, operand 1, single buffered']
    #allocation6 [shape = 's32[1]{0}', space=sflag, size = 0x4, scoped, tag = 'scoped memory for tpu_custom_call.1']
    #allocation7 [shape = 'u8[8192]{0}', space=vmem, size = 0x2000, scoped, tag = 'input window, operand 2, single buffered']
    #allocation8 [shape = 'u8[1048576]{0}', space=vmem, size = 0x100000, scoped, tag = 'input window, operand 3, single buffered']
    #allocation9 [shape = 's32[1]{0}', space=sflag, size = 0x4, scoped, tag = 'scoped memory for tpu_custom_call.1']
    #allocation10 [shape = 'u8[2097152]{0}', space=vmem, size = 0x200000, scoped, tag = 'input window, operand 4, single buffered']
    #allocation11 [shape = 'u8[1048576]{0}', space=vmem, size = 0x100000, scoped, tag = 'input window, operand 5, single buffered']
    #allocation12 [shape = 's32[1]{0}', space=sflag, size = 0x4, scoped, tag = 'scoped memory for tpu_custom_call.1']
    #allocation13 [shape = 'u8[1048576]{0}', space=vmem, size = 0x100000, scoped, tag = 'input window, operand 6, single buffered']
    #allocation14 [shape = 'u8[8192]{0}', space=vmem, size = 0x2000, scoped, tag = 'input window, operand 7, single buffered']
    #allocation15 [shape = 's32[1]{0}', space=sflag, size = 0x4, scoped, tag = 'scoped memory for tpu_custom_call.1']
    #allocation16 [shape = 'u8[16384]{0}', space=vmem, size = 0x4000, scoped, tag = 'input window, operand 8, single buffered']
    #allocation17 [shape = 'u8[32768]{0}', space=vmem, size = 0x8000, scoped, tag = 'output window, operand 0, single buffered']
    %14 = vsyncpa [#allocation3], 0
    %15 = vsyncpa [#allocation6], 0
    %16 = vsyncpa [#allocation9], 0
    %17 = vsyncpa [#allocation12], 0
    %18 = vsyncpa [#allocation15], 0
    %19 = vsyncpa [#allocation4], 0
    // Predicated region
    $region2: #{tpu_custom_call.1} parent=1 // pred_check
      _
    $region3: #{tpu_custom_call.1} parent=1 // pred_check_branch
      %21 = sbr.rel (0) target = $region5
    $region4: #{tpu_custom_call.1} parent=1 // pred_region
      %s23 = ssub.s32 1024, 1024
      %24 = vsyncadd [#allocation3], %s23
      %s25 = sshll.u32 [#allocation2], 4
      %s26 = int_to_ptr.vmem [resolvable:$true] %s25
      %31 = dma.hbm_to_vmem [thread:$0]  %s0, 1024, %s26, [#allocation3], 512, 512, 32
    $region5: #{tpu_custom_call.1} parent=1 // pred_fallthru
      _
    // Predicated region
    $region6: #{tpu_custom_call.1} parent=1 // pred_check
      _
    $region7: #{tpu_custom_call.1} parent=1 // pred_check_branch
      %33 = sbr.rel (0) target = $region9
    $region8: #{tpu_custom_call.1} parent=1 // pred_region
      %s35 = ssub.s32 1024, 1024
      %36 = vsyncadd [#allocation6], %s35
      %s37 = sshll.u32 [#allocation5], 4
      %s38 = int_to_ptr.vmem [resolvable:$true] %s37
      %43 = dma.hbm_to_vmem [thread:$0]  %s1, 1024, %s38, [#allocation6], 512, 512, 32
    $region9: #{tpu_custom_call.1} parent=1 // pred_fallthru
      _
    // Predicated region
    $region10: #{tpu_custom_call.1} parent=1 // pred_check
      _
    $region11: #{tpu_custom_call.1} parent=1 // pred_check_branch
      %45 = sbr.rel (0) target = $region13
    $region12: #{tpu_custom_call.1} parent=1 // pred_region
      %s47 = ssub.s32 256, 256
      %48 = vsyncadd [#allocation6], %s47
      %s49 = sshll.u32 [#allocation7], 4
      %s50 = int_to_ptr.vmem [resolvable:$true] %s49
      %55 = dma.hbm_to_vmem [thread:$0]  %s2, 256, %s50, [#allocation6], 128, 128, 8
    $region13: #{tpu_custom_call.1} parent=1 // pred_fallthru
      _
    // Predicated region
    $region14: #{tpu_custom_call.1} parent=1 // pred_check
      _
    $region15: #{tpu_custom_call.1} parent=1 // pred_check_branch
      %57 = sbr.rel (0) target = $region17
    $region16: #{tpu_custom_call.1} parent=1 // pred_region
      %s59 = ssub.s32 32768, 32768
      %60 = vsyncadd [#allocation9], %s59
      %s61 = sshll.u32 [#allocation8], 4
      %s62 = int_to_ptr.vmem [resolvable:$true] %s61
      %67 = dma.hbm_to_vmem [thread:$0]  %s3, 32768, %s62, [#allocation9], 512, 512, 32
    $region17: #{tpu_custom_call.1} parent=1 // pred_fallthru
      _
    // Predicated region
    $region18: #{tpu_custom_call.1} parent=1 // pred_check
      _
    $region19: #{tpu_custom_call.1} parent=1 // pred_check_branch
      %69 = sbr.rel (0) target = $region21
    $region20: #{tpu_custom_call.1} parent=1 // pred_region
      %s71 = ssub.s32 65536, 65536
      %72 = vsyncadd [#allocation9], %s71
      %s73 = sshll.u32 [#allocation10], 4
      %s74 = int_to_ptr.vmem [resolvable:$true] %s73
      %79 = dma.hbm_to_vmem [thread:$0]  %s4, 65536, %s74, [#allocation9], 1024, 1024, 64
    $region21: #{tpu_custom_call.1} parent=1 // pred_fallthru
      _
    // Predicated region
    $region22: #{tpu_custom_call.1} parent=1 // pred_check
      _
    $region23: #{tpu_custom_call.1} parent=1 // pred_check_branch
      %81 = sbr.rel (0) target = $region25
    $region24: #{tpu_custom_call.1} parent=1 // pred_region
      %s83 = ssub.s32 32768, 32768
      %84 = vsyncadd [#allocation12], %s83
      %s85 = sshll.u32 [#allocation11], 4
      %s86 = int_to_ptr.vmem [resolvable:$true] %s85
      %91 = dma.hbm_to_vmem [thread:$0]  %s5, 32768, %s86, [#allocation12], 512, 512, 32
    $region25: #{tpu_custom_call.1} parent=1 // pred_fallthru
      _
    // Predicated region
    $region26: #{tpu_custom_call.1} parent=1 // pred_check
      _
    $region27: #{tpu_custom_call.1} parent=1 // pred_check_branch
      %93 = sbr.rel (0) target = $region29
    $region28: #{tpu_custom_call.1} parent=1 // pred_region
      %s95 = ssub.s32 32768, 32768
      %96 = vsyncadd [#allocation12], %s95
      %s97 = sshll.u32 [#allocation13], 4
      %s98 = int_to_ptr.vmem [resolvable:$true] %s97
      %103 = dma.hbm_to_vmem [thread:$0]  %s6, 32768, %s98, [#allocation12], 512, 512, 32
    $region29: #{tpu_custom_call.1} parent=1 // pred_fallthru
      _
    // Predicated region
    $region30: #{tpu_custom_call.1} parent=1 // pred_check
      _
    $region31: #{tpu_custom_call.1} parent=1 // pred_check_branch
      %105 = sbr.rel (0) target = $region33
    $region32: #{tpu_custom_call.1} parent=1 // pred_region
      %s107 = ssub.s32 256, 256
      %108 = vsyncadd [#allocation15], %s107
      %s110 = sshll.u32 [#allocation14], 4
      %s111 = int_to_ptr.vmem [resolvable:$true] %s110
      %113 = dma.hbm_to_vmem [thread:$0]  %s7, 256, %s111, [#allocation15]
    $region33: #{tpu_custom_call.1} parent=1 // pred_fallthru
      _
    // Predicated region
    $region34: #{tpu_custom_call.1} parent=1 // pred_check
      _
    $region35: #{tpu_custom_call.1} parent=1 // pred_check_branch
      %115 = sbr.rel (0) target = $region37
    $region36: #{tpu_custom_call.1} parent=1 // pred_region
      %s117 = ssub.s32 512, 512
      %118 = vsyncadd [#allocation15], %s117
      %s120 = sshll.u32 [#allocation16], 4
      %s121 = int_to_ptr.vmem [resolvable:$true] %s120
      %123 = dma.hbm_to_vmem [thread:$0]  %s8, 512, %s121, [#allocation15]
    $region37: #{tpu_custom_call.1} parent=1 // pred_fallthru
      _
    // Predicated region
    $region38: #{tpu_custom_call.1} parent=1 // pred_check
      _
    $region39: #{tpu_custom_call.1} parent=1 // pred_check_branch
      %125 = sbr.rel (0) target = $region41
    $region40: #{tpu_custom_call.1} parent=1 // pred_region
      %126 = dma.done [#allocation3], 1024
    $region41: #{tpu_custom_call.1} parent=1 // pred_fallthru
      _
    // Predicated region
    $region42: #{tpu_custom_call.1} parent=1 // pred_check
      _
    $region43: #{tpu_custom_call.1} parent=1 // pred_check_branch
      %128 = sbr.rel (0) target = $region45
    $region44: #{tpu_custom_call.1} parent=1 // pred_region
      %129 = dma.done [#allocation6], 1024
    $region45: #{tpu_custom_call.1} parent=1 // pred_fallthru
      _
    // Predicated region
    $region46: #{tpu_custom_call.1} parent=1 // pred_check
      _
    $region47: #{tpu_custom_call.1} parent=1 // pred_check_branch
      %131 = sbr.rel (0) target = $region49
    $region48: #{tpu_custom_call.1} parent=1 // pred_region
      %132 = dma.done [#allocation6], 256
    $region49: #{tpu_custom_call.1} parent=1 // pred_fallthru
      _
    // Predicated region
    $region50: #{tpu_custom_call.1} parent=1 // pred_check
      _
    $region51: #{tpu_custom_call.1} parent=1 // pred_check_branch
      %134 = sbr.rel (0) target = $region53
    $region52: #{tpu_custom_call.1} parent=1 // pred_region
      %135 = dma.done [#allocation9], 32768
    $region53: #{tpu_custom_call.1} parent=1 // pred_fallthru
      _
    // Predicated region
    $region54: #{tpu_custom_call.1} parent=1 // pred_check
      _
    $region55: #{tpu_custom_call.1} parent=1 // pred_check_branch
      %137 = sbr.rel (0) target = $region57
    $region56: #{tpu_custom_call.1} parent=1 // pred_region
      %138 = dma.done [#allocation9], 65536
    $region57: #{tpu_custom_call.1} parent=1 // pred_fallthru
      _
    // Predicated region
    $region58: #{tpu_custom_call.1} parent=1 // pred_check
      _
    $region59: #{tpu_custom_call.1} parent=1 // pred_check_branch
      %140 = sbr.rel (0) target = $region61
    $region60: #{tpu_custom_call.1} parent=1 // pred_region
      %141 = dma.done [#allocation12], 32768
    $region61: #{tpu_custom_call.1} parent=1 // pred_fallthru
      _
    // Predicated region
    $region62: #{tpu_custom_call.1} parent=1 // pred_check
      _
    $region63: #{tpu_custom_call.1} parent=1 // pred_check_branch
      %143 = sbr.rel (0) target = $region65
    $region64: #{tpu_custom_call.1} parent=1 // pred_region
      %144 = dma.done [#allocation12], 32768
    $region65: #{tpu_custom_call.1} parent=1 // pred_fallthru
      _
    // Predicated region
    $region66: #{tpu_custom_call.1} parent=1 // pred_check
      _
    $region67: #{tpu_custom_call.1} parent=1 // pred_check_branch
      %146 = sbr.rel (0) target = $region69
    $region68: #{tpu_custom_call.1} parent=1 // pred_region
      %147 = dma.done [#allocation15], 256
    $region69: #{tpu_custom_call.1} parent=1 // pred_fallthru
      _
    // Predicated region
    $region70: #{tpu_custom_call.1} parent=1 // pred_check
      _
    $region71: #{tpu_custom_call.1} parent=1 // pred_check_branch
      %149 = sbr.rel (0) target = $region73
    $region72: #{tpu_custom_call.1} parent=1 // pred_region
      %150 = dma.done [#allocation15], 512
    $region73: #{tpu_custom_call.1} parent=1 // pred_fallthru
      _
    %v151 = vld [vmem:[#allocation2] sm:$0xff]
    %v152 = vld [vmem:[#allocation2 + $0x8] sm:$0xff]
    %v153 = vld [vmem:[#allocation2 + $0x10] sm:$0xff]
    %v154 = vld [vmem:[#allocation2 + $0x18] sm:$0xff]
    %v155 = vld [vmem:[#allocation2 + $0x20] sm:$0xff]
    %v156 = vld [vmem:[#allocation2 + $0x28] sm:$0xff]
    %v157 = vld [vmem:[#allocation2 + $0x30] sm:$0xff]
    %v158 = vld [vmem:[#allocation2 + $0x38] sm:$0xff]
    %v159 = vld [vmem:[#allocation5] sm:$0xff]
    %v160 = vld [vmem:[#allocation5 + $0x8] sm:$0xff]
    %v161 = vld [vmem:[#allocation5 + $0x10] sm:$0xff]
    %v162 = vld [vmem:[#allocation5 + $0x18] sm:$0xff]
    %v163 = vld [vmem:[#allocation5 + $0x20] sm:$0xff]
    %v164 = vld [vmem:[#allocation5 + $0x28] sm:$0xff]
    %v165 = vld [vmem:[#allocation5 + $0x30] sm:$0xff]
    %v166 = vld [vmem:[#allocation5 + $0x38] sm:$0xff]
    %v167 = vld [vmem:[#allocation7] sm:$0xff]
    %v168 = vld [vmem:[#allocation7 + $0x8] sm:$0xff]
    %v169 = vld [vmem:[#allocation14] sm:$0x77]
    %v170 = vld [vmem:[#allocation14 + $0x8] sm:$0x77]
    %v171 = vld [vmem:[#allocation16] sm:$0x77]
    %v172 = vld [vmem:[#allocation16 + $0x8] sm:$0x77]
    %v173 = vld [vmem:[#allocation16 + $0x10] sm:$0x77]
    %v174 = vld [vmem:[#allocation16 + $0x18] sm:$0x77]
    %v175 = vld [vmem:[#allocation8] sm:$0xff]
    %v176 = vld [vmem:[#allocation8 + $0x8] sm:$0xff]
    %v177 = vld [vmem:[#allocation8 + $0x10] sm:$0xff]
    %v178 = vld [vmem:[#allocation8 + $0x18] sm:$0xff]
    %v179 = vld [vmem:[#allocation8 + $0x20] sm:$0xff]
    %v180 = vld [vmem:[#allocation8 + $0x28] sm:$0xff]
    %v181 = vld [vmem:[#allocation8 + $0x30] sm:$0xff]
    %v182 = vld [vmem:[#allocation8 + $0x38] sm:$0xff]
    %v183 = vld [vmem:[#allocation8 + $0x40] sm:$0xff]
    %v184 = vld [vmem:[#allocation8 + $0x48] sm:$0xff]
    %v185 = vld [vmem:[#allocation8 + $0x50] sm:$0xff]
    %v186 = vld [vmem:[#allocation8 + $0x58] sm:$0xff]
    %v187 = vld [vmem:[#allocation8 + $0x60] sm:$0xff]
    %v188 = vld [vmem:[#allocation8 + $0x68] sm:$0xff]
    %v189 = vld [vmem:[#allocation8 + $0x70] sm:$0xff]
    %v190 = vld [vmem:[#allocation8 + $0x78] sm:$0xff]
    %v191 = vld [vmem:[#allocation8 + $0x80] sm:$0xff]
    %v192 = vld [vmem:[#allocation8 + $0x88] sm:$0xff]
    %v193 = vld [vmem:[#allocation8 + $0x90] sm:$0xff]
    %v194 = vld [vmem:[#allocation8 + $0x98] sm:$0xff]
    %v195 = vld [vmem:[#allocation8 + $0xa0] sm:$0xff]
    %v196 = vld [vmem:[#allocation8 + $0xa8] sm:$0xff]
    %v197 = vld [vmem:[#allocation8 + $0xb0] sm:$0xff]
    %v198 = vld [vmem:[#allocation8 + $0xb8] sm:$0xff]
    %v199 = vld [vmem:[#allocation8 + $0xc0] sm:$0xff]
    %v200 = vld [vmem:[#allocation8 + $0xc8] sm:$0xff]
    %v201 = vld [vmem:[#allocation8 + $0xd0] sm:$0xff]
    %v202 = vld [vmem:[#allocation8 + $0xd8] sm:$0xff]
    %v203 = vld [vmem:[#allocation8 + $0xe0] sm:$0xff]
    %v204 = vld [vmem:[#allocation8 + $0xe8] sm:$0xff]
    %v205 = vld [vmem:[#allocation8 + $0xf0] sm:$0xff]
    %v206 = vld [vmem:[#allocation8 + $0xf8] sm:$0xff]
    %v207 = vld [vmem:[#allocation8 + $0x100] sm:$0xff]
    %v208 = vld [vmem:[#allocation8 + $0x108] sm:$0xff]
    %v209 = vld [vmem:[#allocation8 + $0x110] sm:$0xff]
    %v210 = vld [vmem:[#allocation8 + $0x118] sm:$0xff]
    %v211 = vld [vmem:[#allocation8 + $0x120] sm:$0xff]
    %v212 = vld [vmem:[#allocation8 + $0x128] sm:$0xff]
    %v213 = vld [vmem:[#allocation8 + $0x130] sm:$0xff]
    %v214 = vld [vmem:[#allocation8 + $0x138] sm:$0xff]
    %v215 = vld [vmem:[#allocation8 + $0x140] sm:$0xff]
    %v216 = vld [vmem:[#allocation8 + $0x148] sm:$0xff]
    %v217 = vld [vmem:[#allocation8 + $0x150] sm:$0xff]
    %v218 = vld [vmem:[#allocation8 + $0x158] sm:$0xff]
    %v219 = vld [vmem:[#allocation8 + $0x160] sm:$0xff]
    %v220 = vld [vmem:[#allocation8 + $0x168] sm:$0xff]
    %v221 = vld [vmem:[#allocation8 + $0x170] sm:$0xff]
    %v222 = vld [vmem:[#allocation8 + $0x178] sm:$0xff]
    %v223 = vld [vmem:[#allocation8 + $0x180] sm:$0xff]
    %v224 = vld [vmem:[#allocation8 + $0x188] sm:$0xff]
    %v225 = vld [vmem:[#allocation8 + $0x190] sm:$0xff]
    %v226 = vld [vmem:[#allocation8 + $0x198] sm:$0xff]
    %v227 = vld [vmem:[#allocation8 + $0x1a0] sm:$0xff]
    %v228 = vld [vmem:[#allocation8 + $0x1a8] sm:$0xff]
    %v229 = vld [vmem:[#allocation8 + $0x1b0] sm:$0xff]
    %v230 = vld [vmem:[#allocation8 + $0x1b8] sm:$0xff]
    %v231 = vld [vmem:[#allocation8 + $0x1c0] sm:$0xff]
    %v232 = vld [vmem:[#allocation8 + $0x1c8] sm:$0xff]
    %v233 = vld [vmem:[#allocation8 + $0x1d0] sm:$0xff]
    %v234 = vld [vmem:[#allocation8 + $0x1d8] sm:$0xff]
    %v235 = vld [vmem:[#allocation8 + $0x1e0] sm:$0xff]
    %v236 = vld [vmem:[#allocation8 + $0x1e8] sm:$0xff]
    %v237 = vld [vmem:[#allocation8 + $0x1f0] sm:$0xff]
    %v238 = vld [vmem:[#allocation8 + $0x1f8] sm:$0xff]
    %v239 = vld [vmem:[#allocation8 + $0x200] sm:$0xff]
    %v240 = vld [vmem:[#allocation8 + $0x208] sm:$0xff]
    %v241 = vld [vmem:[#allocation8 + $0x210] sm:$0xff]
    %v242 = vld [vmem:[#allocation8 + $0x218] sm:$0xff]
    %v243 = vld [vmem:[#allocation8 + $0x220] sm:$0xff]
    %v244 = vld [vmem:[#allocation8 + $0x228] sm:$0xff]
    %v245 = vld [vmem:[#allocation8 + $0x230] sm:$0xff]
    %v246 = vld [vmem:[#allocation8 + $0x238] sm:$0xff]
    %v247 = vld [vmem:[#allocation8 + $0x240] sm:$0xff]
    %v248 = vld [vmem:[#allocation8 + $0x248] sm:$0xff]
    %v249 = vld [vmem:[#allocation8 + $0x250] sm:$0xff]
    %v250 = vld [vmem:[#allocation8 + $0x258] sm:$0xff]
    %v251 = vld [vmem:[#allocation8 + $0x260] sm:$0xff]
    %v252 = vld [vmem:[#allocation8 + $0x268] sm:$0xff]
    %v253 = vld [vmem:[#allocation8 + $0x270] sm:$0xff]
    %v254 = vld [vmem:[#allocation8 + $0x278] sm:$0xff]
    %v255 = vld [vmem:[#allocation8 + $0x280] sm:$0xff]
    %v256 = vld [vmem:[#allocation8 + $0x288] sm:$0xff]
    %v257 = vld [vmem:[#allocation8 + $0x290] sm:$0xff]
    %v258 = vld [vmem:[#allocation8 + $0x298] sm:$0xff]
    %v259 = vld [vmem:[#allocation8 + $0x2a0] sm:$0xff]
    %v260 = vld [vmem:[#allocation8 + $0x2a8] sm:$0xff]
    %v261 = vld [vmem:[#allocation8 + $0x2b0] sm:$0xff]
    %v262 = vld [vmem:[#allocation8 + $0x2b8] sm:$0xff]
    %v263 = vld [vmem:[#allocation8 + $0x2c0] sm:$0xff]
    %v264 = vld [vmem:[#allocation8 + $0x2c8] sm:$0xff]
    %v265 = vld [vmem:[#allocation8 + $0x2d0] sm:$0xff]
    %v266 = vld [vmem:[#allocation8 + $0x2d8] sm:$0xff]
    %v267 = vld [vmem:[#allocation8 + $0x2e0] sm:$0xff]
    %v268 = vld [vmem:[#allocation8 + $0x2e8] sm:$0xff]
    %v269 = vld [vmem:[#allocation8 + $0x2f0] sm:$0xff]
    %v270 = vld [vmem:[#allocation8 + $0x2f8] sm:$0xff]
    %v271 = vld [vmem:[#allocation8 + $0x300] sm:$0xff]
    %v272 = vld [vmem:[#allocation8 + $0x308] sm:$0xff]
    %v273 = vld [vmem:[#allocation8 + $0x310] sm:$0xff]
    %v274 = vld [vmem:[#allocation8 + $0x318] sm:$0xff]
    %v275 = vld [vmem:[#allocation8 + $0x320] sm:$0xff]
    %v276 = vld [vmem:[#allocation8 + $0x328] sm:$0xff]
    %v277 = vld [vmem:[#allocation8 + $0x330] sm:$0xff]
    %v278 = vld [vmem:[#allocation8 + $0x338] sm:$0xff]
    %v279 = vld [vmem:[#allocation8 + $0x340] sm:$0xff]
    %v280 = vld [vmem:[#allocation8 + $0x348] sm:$0xff]
    %v281 = vld [vmem:[#allocation8 + $0x350] sm:$0xff]
    %v282 = vld [vmem:[#allocation8 + $0x358] sm:$0xff]
    %v283 = vld [vmem:[#allocation8 + $0x360] sm:$0xff]
    %v284 = vld [vmem:[#allocation8 + $0x368] sm:$0xff]
    %v285 = vld [vmem:[#allocation8 + $0x370] sm:$0xff]
    %v286 = vld [vmem:[#allocation8 + $0x378] sm:$0xff]
    %v287 = vld [vmem:[#allocation8 + $0x380] sm:$0xff]
    %v288 = vld [vmem:[#allocation8 + $0x388] sm:$0xff]
    %v289 = vld [vmem:[#allocation8 + $0x390] sm:$0xff]
    %v290 = vld [vmem:[#allocation8 + $0x398] sm:$0xff]
    %v291 = vld [vmem:[#allocation8 + $0x3a0] sm:$0xff]
    %v292 = vld [vmem:[#allocation8 + $0x3a8] sm:$0xff]
    %v293 = vld [vmem:[#allocation8 + $0x3b0] sm:$0xff]
    %v294 = vld [vmem:[#allocation8 + $0x3b8] sm:$0xff]
    %v295 = vld [vmem:[#allocation8 + $0x3c0] sm:$0xff]
    %v296 = vld [vmem:[#allocation8 + $0x3c8] sm:$0xff]
    %v297 = vld [vmem:[#allocation8 + $0x3d0] sm:$0xff]
    %v298 = vld [vmem:[#allocation8 + $0x3d8] sm:$0xff]
    %v299 = vld [vmem:[#allocation8 + $0x3e0] sm:$0xff]
    %v300 = vld [vmem:[#allocation8 + $0x3e8] sm:$0xff]
    %v301 = vld [vmem:[#allocation8 + $0x3f0] sm:$0xff]
    %v302 = vld [vmem:[#allocation8 + $0x3f8] sm:$0xff]
    %v303 = vld [vmem:[#allocation8 + $0x400] sm:$0xff]
    %v304 = vld [vmem:[#allocation8 + $0x408] sm:$0xff]
    %v305 = vld [vmem:[#allocation8 + $0x410] sm:$0xff]
    %v306 = vld [vmem:[#allocation8 + $0x418] sm:$0xff]
    %v307 = vld [vmem:[#allocation8 + $0x420] sm:$0xff]
    %v308 = vld [vmem:[#allocation8 + $0x428] sm:$0xff]
    %v309 = vld [vmem:[#allocation8 + $0x430] sm:$0xff]
    %v310 = vld [vmem:[#allocation8 + $0x438] sm:$0xff]
    %v311 = vld [vmem:[#allocation8 + $0x440] sm:$0xff]
    %v312 = vld [vmem:[#allocation8 + $0x448] sm:$0xff]
    %v313 = vld [vmem:[#allocation8 + $0x450] sm:$0xff]
    %v314 = vld [vmem:[#allocation8 + $0x458] sm:$0xff]
    %v315 = vld [vmem:[#allocation8 + $0x460] sm:$0xff]
    %v316 = vld [vmem:[#allocation8 + $0x468] sm:$0xff]
    %v317 = vld [vmem:[#allocation8 + $0x470] sm:$0xff]
    %v318 = vld [vmem:[#allocation8 + $0x478] sm:$0xff]
    %v319 = vld [vmem:[#allocation8 + $0x480] sm:$0xff]
    %v320 = vld [vmem:[#allocation8 + $0x488] sm:$0xff]
    %v321 = vld [vmem:[#allocation8 + $0x490] sm:$0xff]
    %v322 = vld [vmem:[#allocation8 + $0x498] sm:$0xff]
    %v323 = vld [vmem:[#allocation8 + $0x4a0] sm:$0xff]
    %v324 = vld [vmem:[#allocation8 + $0x4a8] sm:$0xff]
    %v325 = vld [vmem:[#allocation8 + $0x4b0] sm:$0xff]
    %v326 = vld [vmem:[#allocation8 + $0x4b8] sm:$0xff]
    %v327 = vld [vmem:[#allocation8 + $0x4c0] sm:$0xff]
    %v328 = vld [vmem:[#allocation8 + $0x4c8] sm:$0xff]
    %v329 = vld [vmem:[#allocation8 + $0x4d0] sm:$0xff]
    %v330 = vld [vmem:[#allocation8 + $0x4d8] sm:$0xff]
    %v331 = vld [vmem:[#allocation8 + $0x4e0] sm:$0xff]
    %v332 = vld [vmem:[#allocation8 + $0x4e8] sm:$0xff]
    %v333 = vld [vmem:[#allocation8 + $0x4f0] sm:$0xff]
    %v334 = vld [vmem:[#allocation8 + $0x4f8] sm:$0xff]
    %v335 = vld [vmem:[#allocation8 + $0x500] sm:$0xff]
    %v336 = vld [vmem:[#allocation8 + $0x508] sm:$0xff]
    %v337 = vld [vmem:[#allocation8 + $0x510] sm:$0xff]
    %v338 = vld [vmem:[#allocation8 + $0x518] sm:$0xff]
    %v339 = vld [vmem:[#allocation8 + $0x520] sm:$0xff]
    %v340 = vld [vmem:[#allocation8 + $0x528] sm:$0xff]
    %v341 = vld [vmem:[#allocation8 + $0x530] sm:$0xff]
    %v342 = vld [vmem:[#allocation8 + $0x538] sm:$0xff]
    %v343 = vld [vmem:[#allocation8 + $0x540] sm:$0xff]
    %v344 = vld [vmem:[#allocation8 + $0x548] sm:$0xff]
    %v345 = vld [vmem:[#allocation8 + $0x550] sm:$0xff]
    %v346 = vld [vmem:[#allocation8 + $0x558] sm:$0xff]
    %v347 = vld [vmem:[#allocation8 + $0x560] sm:$0xff]
    %v348 = vld [vmem:[#allocation8 + $0x568] sm:$0xff]
    %v349 = vld [vmem:[#allocation8 + $0x570] sm:$0xff]
    %v350 = vld [vmem:[#allocation8 + $0x578] sm:$0xff]
    %v351 = vld [vmem:[#allocation8 + $0x580] sm:$0xff]
    %v352 = vld [vmem:[#allocation8 + $0x588] sm:$0xff]
    %v353 = vld [vmem:[#allocation8 + $0x590] sm:$0xff]
    %v354 = vld [vmem:[#allocation8 + $0x598] sm:$0xff]
    %v355 = vld [vmem:[#allocation8 + $0x5a0] sm:$0xff]
    %v356 = vld [vmem:[#allocation8 + $0x5a8] sm:$0xff]
    %v357 = vld [vmem:[#allocation8 + $0x5b0] sm:$0xff]
    %v358 = vld [vmem:[#allocation8 + $0x5b8] sm:$0xff]
    %v359 = vld [vmem:[#allocation8 + $0x5c0] sm:$0xff]
    %v360 = vld [vmem:[#allocation8 + $0x5c8] sm:$0xff]
    %v361 = vld [vmem:[#allocation8 + $0x5d0] sm:$0xff]
    %v362 = vld [vmem:[#allocation8 + $0x5d8] sm:$0xff]
    %v363 = vld [vmem:[#allocation8 + $0x5e0] sm:$0xff]
    %v364 = vld [vmem:[#allocation8 + $0x5e8] sm:$0xff]
    %v365 = vld [vmem:[#allocation8 + $0x5f0] sm:$0xff]
    %v366 = vld [vmem:[#allocation8 + $0x5f8] sm:$0xff]
    %v367 = vld [vmem:[#allocation8 + $0x600] sm:$0xff]
    %v368 = vld [vmem:[#allocation8 + $0x608] sm:$0xff]
    %v369 = vld [vmem:[#allocation8 + $0x610] sm:$0xff]
    %v370 = vld [vmem:[#allocation8 + $0x618] sm:$0xff]
    %v371 = vld [vmem:[#allocation8 + $0x620] sm:$0xff]
    %v372 = vld [vmem:[#allocation8 + $0x628] sm:$0xff]
    %v373 = vld [vmem:[#allocation8 + $0x630] sm:$0xff]
    %v374 = vld [vmem:[#allocation8 + $0x638] sm:$0xff]
    %v375 = vld [vmem:[#allocation8 + $0x640] sm:$0xff]
    %v376 = vld [vmem:[#allocation8 + $0x648] sm:$0xff]
    %v377 = vld [vmem:[#allocation8 + $0x650] sm:$0xff]
    %v378 = vld [vmem:[#allocation8 + $0x658] sm:$0xff]
    %v379 = vld [vmem:[#allocation8 + $0x660] sm:$0xff]
    %v380 = vld [vmem:[#allocation8 + $0x668] sm:$0xff]
    %v381 = vld [vmem:[#allocation8 + $0x670] sm:$0xff]
    %v382 = vld [vmem:[#allocation8 + $0x678] sm:$0xff]
    %v383 = vld [vmem:[#allocation8 + $0x680] sm:$0xff]
    %v384 = vld [vmem:[#allocation8 + $0x688] sm:$0xff]
    %v385 = vld [vmem:[#allocation8 + $0x690] sm:$0xff]
    %v386 = vld [vmem:[#allocation8 + $0x698] sm:$0xff]
    %v387 = vld [vmem:[#allocation8 + $0x6a0] sm:$0xff]
    %v388 = vld [vmem:[#allocation8 + $0x6a8] sm:$0xff]
    %v389 = vld [vmem:[#allocation8 + $0x6b0] sm:$0xff]
    %v390 = vld [vmem:[#allocation8 + $0x6b8] sm:$0xff]
    %v391 = vld [vmem:[#allocation8 + $0x6c0] sm:$0xff]
    %v392 = vld [vmem:[#allocation8 + $0x6c8] sm:$0xff]
    %v393 = vld [vmem:[#allocation8 + $0x6d0] sm:$0xff]
    %v394 = vld [vmem:[#allocation8 + $0x6d8] sm:$0xff]
    %v395 = vld [vmem:[#allocation8 + $0x6e0] sm:$0xff]
    %v396 = vld [vmem:[#allocation8 + $0x6e8] sm:$0xff]
    %v397 = vld [vmem:[#allocation8 + $0x6f0] sm:$0xff]
    %v398 = vld [vmem:[#allocation8 + $0x6f8] sm:$0xff]
    %v399 = vld [vmem:[#allocation8 + $0x700] sm:$0xff]
    %v400 = vld [vmem:[#allocation8 + $0x708] sm:$0xff]
    %v401 = vld [vmem:[#allocation8 + $0x710] sm:$0xff]
    %v402 = vld [vmem:[#allocation8 + $0x718] sm:$0xff]
    %v403 = vld [vmem:[#allocation8 + $0x720] sm:$0xff]
    %v404 = vld [vmem:[#allocation8 + $0x728] sm:$0xff]
    %v405 = vld [vmem:[#allocation8 + $0x730] sm:$0xff]
    %v406 = vld [vmem:[#allocation8 + $0x738] sm:$0xff]
    %v407 = vld [vmem:[#allocation8 + $0x740] sm:$0xff]
    %v408 = vld [vmem:[#allocation8 + $0x748] sm:$0xff]
    %v409 = vld [vmem:[#allocation8 + $0x750] sm:$0xff]
    %v410 = vld [vmem:[#allocation8 + $0x758] sm:$0xff]
    %v411 = vld [vmem:[#allocation8 + $0x760] sm:$0xff]
    %v412 = vld [vmem:[#allocation8 + $0x768] sm:$0xff]
    %v413 = vld [vmem:[#allocation8 + $0x770] sm:$0xff]
    %v414 = vld [vmem:[#allocation8 + $0x778] sm:$0xff]
    %v415 = vld [vmem:[#allocation8 + $0x780] sm:$0xff]
    %v416 = vld [vmem:[#allocation8 + $0x788] sm:$0xff]
    %v417 = vld [vmem:[#allocation8 + $0x790] sm:$0xff]
    %v418 = vld [vmem:[#allocation8 + $0x798] sm:$0xff]
    %v419 = vld [vmem:[#allocation8 + $0x7a0] sm:$0xff]
    %v420 = vld [vmem:[#allocation8 + $0x7a8] sm:$0xff]
    %v421 = vld [vmem:[#allocation8 + $0x7b0] sm:$0xff]
    %v422 = vld [vmem:[#allocation8 + $0x7b8] sm:$0xff]
    %v423 = vld [vmem:[#allocation8 + $0x7c0] sm:$0xff]
    %v424 = vld [vmem:[#allocation8 + $0x7c8] sm:$0xff]
    %v425 = vld [vmem:[#allocation8 + $0x7d0] sm:$0xff]
    %v426 = vld [vmem:[#allocation8 + $0x7d8] sm:$0xff]
    %v427 = vld [vmem:[#allocation8 + $0x7e0] sm:$0xff]
    %v428 = vld [vmem:[#allocation8 + $0x7e8] sm:$0xff]
    %v429 = vld [vmem:[#allocation8 + $0x7f0] sm:$0xff]
    %v430 = vld [vmem:[#allocation8 + $0x7f8] sm:$0xff]
    %v433 = vlaneseq
    %v434 = vshrl.u32 %v433, 7
    %v435 = vsub.s32 0, %v434
    %v436 = vrot.slane %v169, %v435
    %v437 = vlaneseq
    %v438 = vshrl.u32 %v437, 7
    %v439 = vsub.s32 4, %v438
    %v440 = vrot.slane %v169, %v439
    %v441 = vlaneseq
    %v442 = vshrl.u32 %v441, 7
    %v443 = vsub.s32 0, %v442
    %v444 = vrot.slane %v170, %v443
    %v445 = vlaneseq
    %v446 = vshrl.u32 %v445, 7
    %v447 = vsub.s32 4, %v446
    %v448 = vrot.slane %v170, %v447
    %v453 = vlaneseq
    %v454 = vshrl.u32 %v453, 7
    %v455 = vsub.s32 0, %v454
    %v456 = vrot.slane %v436, %v455
    %v457 = vlaneseq
    %v458 = vshrl.u32 %v457, 7
    %v459 = vsub.s32 0, %v458
    %v460 = vrot.slane %v440, %v459
    %v461 = vlaneseq
    %v462 = vshrl.u32 %v461, 7
    %v463 = vsub.s32 0, %v462
    %v464 = vrot.slane %v444, %v463
    %v465 = vlaneseq
    %v466 = vshrl.u32 %v465, 7
    %v467 = vsub.s32 0, %v466
    %v468 = vrot.slane %v448, %v467
    %469 = vmatprep.subr.mxu0 %v176
    %470 = vmatpush1.msra.mxu0 %v175
    %471 = vmatprep.subr.mxu0 %v180
    %472 = vmatpush1.msra.mxu0 %v179
    %473 = vmatprep.subr.mxu0 %v184
    %474 = vmatpush1.msra.mxu0 %v183
    %475 = vmatprep.subr.mxu0 %v188
    %476 = vmatpush1.msra.mxu0 %v187
    %477 = vmatprep.subr.mxu0 %v192
    %478 = vmatpush1.msra.mxu0 %v191
    %479 = vmatprep.subr.mxu0 %v196
    %480 = vmatpush1.msra.mxu0 %v195
    %481 = vmatprep.subr.mxu0 %v200
    %482 = vmatpush1.msra.mxu0 %v199
    %483 = vmatprep.subr.mxu0 %v204
    %484 = vmatpush1.msra.mxu0 %v203
    %485 = vmatprep.subr.mxu0 %v208
    %486 = vmatpush1.msra.mxu0 %v207
    %487 = vmatprep.subr.mxu0 %v212
    %488 = vmatpush1.msra.mxu0 %v211
    %489 = vmatprep.subr.mxu0 %v216
    %490 = vmatpush1.msra.mxu0 %v215
    %491 = vmatprep.subr.mxu0 %v220
    %492 = vmatpush1.msra.mxu0 %v219
    %493 = vmatprep.subr.mxu0 %v224
    %494 = vmatpush1.msra.mxu0 %v223
    %495 = vmatprep.subr.mxu0 %v228
    %496 = vmatpush1.msra.mxu0 %v227
    %497 = vmatprep.subr.mxu0 %v232
    %498 = vmatpush1.msra.mxu0 %v231
    %499 = vmatprep.subr.mxu0 %v236
    %500 = vmatpush1.msra.mxu0 %v235
    %501 = vmatprep.subr.mxu0 %v240
    %502 = vmatpush1.msra.mxu0 %v239
    %503 = vmatprep.subr.mxu0 %v244
    %504 = vmatpush1.msra.mxu0 %v243
    %505 = vmatprep.subr.mxu0 %v248
    %506 = vmatpush1.msra.mxu0 %v247
    %507 = vmatprep.subr.mxu0 %v252
    %508 = vmatpush1.msra.mxu0 %v251
    %509 = vmatprep.subr.mxu0 %v256
    %510 = vmatpush1.msra.mxu0 %v255
    %511 = vmatprep.subr.mxu0 %v260
    %512 = vmatpush1.msra.mxu0 %v259
    %513 = vmatprep.subr.mxu0 %v264
    %514 = vmatpush1.msra.mxu0 %v263
    %515 = vmatprep.subr.mxu0 %v268
    %516 = vmatpush1.msra.mxu0 %v267
    %517 = vmatprep.subr.mxu0 %v272
    %518 = vmatpush1.msra.mxu0 %v271
    %519 = vmatprep.subr.mxu0 %v276
    %520 = vmatpush1.msra.mxu0 %v275
    %521 = vmatprep.subr.mxu0 %v280
    %522 = vmatpush1.msra.mxu0 %v279
    %523 = vmatprep.subr.mxu0 %v284
    %524 = vmatpush1.msra.mxu0 %v283
    %525 = vmatprep.subr.mxu0 %v288
    %526 = vmatpush1.msra.mxu0 %v287
    %527 = vmatprep.subr.mxu0 %v292
    %528 = vmatpush1.msra.mxu0 %v291
    %529 = vmatprep.subr.mxu0 %v296
    %530 = vmatpush1.msra.mxu0 %v295
    %531 = vmatprep.subr.mxu0 %v300
    %532 = vmatpush1.msra.mxu0 %v299
    %533 = vmatprep.mubr.f32.mxu0 %v152
    %534 = vmatmul.mubr.f32.gmra.mrb[0].mxu0 %v151
    %v535 = vpop.f32.mrb[0].mxu0
    %v536 = vadd.f32 %v456, %v535
    %v537 = vpop.f32.mrb[0].mxu0
    %v538 = vadd.f32 %v460, %v537
    %539 = vmatprep.mubr.f32.mxu0 %v156
    %540 = vmatmul.mubr.f32.gmra.mrb[0].mxu0 %v155
    %v541 = vpop.f32.mrb[0].mxu0
    %v542 = vadd.f32 %v456, %v541
    %v543 = vpop.f32.mrb[0].mxu0
    %v544 = vadd.f32 %v460, %v543
    %545 = vdwg.mxu0
    %546 = vmatprep.subr.mxu0 %v304
    %547 = vmatpush1.msra.mxu0 %v303
    %548 = vmatprep.subr.mxu0 %v308
    %549 = vmatpush1.msra.mxu0 %v307
    %550 = vmatprep.subr.mxu0 %v312
    %551 = vmatpush1.msra.mxu0 %v311
    %552 = vmatprep.subr.mxu0 %v316
    %553 = vmatpush1.msra.mxu0 %v315
    %554 = vmatprep.subr.mxu0 %v320
    %555 = vmatpush1.msra.mxu0 %v319
    %556 = vmatprep.subr.mxu0 %v324
    %557 = vmatpush1.msra.mxu0 %v323
    %558 = vmatprep.subr.mxu0 %v328
    %559 = vmatpush1.msra.mxu0 %v327
    %560 = vmatprep.subr.mxu0 %v332
    %561 = vmatpush1.msra.mxu0 %v331
    %562 = vmatprep.subr.mxu0 %v336
    %563 = vmatpush1.msra.mxu0 %v335
    %564 = vmatprep.subr.mxu0 %v340
    %565 = vmatpush1.msra.mxu0 %v339
    %566 = vmatprep.subr.mxu0 %v344
    %567 = vmatpush1.msra.mxu0 %v343
    %568 = vmatprep.subr.mxu0 %v348
    %569 = vmatpush1.msra.mxu0 %v347
    %570 = vmatprep.subr.mxu0 %v352
    %571 = vmatpush1.msra.mxu0 %v351
    %572 = vmatprep.subr.mxu0 %v356
    %573 = vmatpush1.msra.mxu0 %v355
    %574 = vmatprep.subr.mxu0 %v360
    %575 = vmatpush1.msra.mxu0 %v359
    %576 = vmatprep.subr.mxu0 %v364
    %577 = vmatpush1.msra.mxu0 %v363
    %578 = vmatprep.subr.mxu0 %v368
    %579 = vmatpush1.msra.mxu0 %v367
    %580 = vmatprep.subr.mxu0 %v372
    %581 = vmatpush1.msra.mxu0 %v371
    %582 = vmatprep.subr.mxu0 %v376
    %583 = vmatpush1.msra.mxu0 %v375
    %584 = vmatprep.subr.mxu0 %v380
    %585 = vmatpush1.msra.mxu0 %v379
    %586 = vmatprep.subr.mxu0 %v384
    %587 = vmatpush1.msra.mxu0 %v383
    %588 = vmatprep.subr.mxu0 %v388
    %589 = vmatpush1.msra.mxu0 %v387
    %590 = vmatprep.subr.mxu0 %v392
    %591 = vmatpush1.msra.mxu0 %v391
    %592 = vmatprep.subr.mxu0 %v396
    %593 = vmatpush1.msra.mxu0 %v395
    %594 = vmatprep.subr.mxu0 %v400
    %595 = vmatpush1.msra.mxu0 %v399
    %596 = vmatprep.subr.mxu0 %v404
    %597 = vmatpush1.msra.mxu0 %v403
    %598 = vmatprep.subr.mxu0 %v408
    %599 = vmatpush1.msra.mxu0 %v407
    %600 = vmatprep.subr.mxu0 %v412
    %601 = vmatpush1.msra.mxu0 %v411
    %602 = vmatprep.subr.mxu0 %v416
    %603 = vmatpush1.msra.mxu0 %v415
    %604 = vmatprep.subr.mxu0 %v420
    %605 = vmatpush1.msra.mxu0 %v419
    %606 = vmatprep.subr.mxu0 %v424
    %607 = vmatpush1.msra.mxu0 %v423
    %608 = vmatprep.subr.mxu0 %v428
    %609 = vmatpush1.msra.mxu0 %v427
    %610 = vmatprep.mubr.f32.mxu0 %v154
    %611 = vmatmul.mubr.f32.gmra.mrb[0].mxu0 %v153
    %v612 = vpop.f32.mrb[0].mxu0
    %v613 = vadd.f32 %v536, %v612
    %v614 = vpop.f32.mrb[0].mxu0
    %v615 = vadd.f32 %v538, %v614
    %616 = vmatprep.mubr.f32.mxu0 %v158
    %617 = vmatmul.mubr.f32.gmra.mrb[0].mxu0 %v157
    %v618 = vpop.f32.mrb[0].mxu0
    %v619 = vadd.f32 %v542, %v618
    %v620 = vpop.f32.mrb[0].mxu0
    %v621 = vadd.f32 %v544, %v620
    %622 = vdwg.mxu0
    %623 = vmatprep.subr.mxu0 %v178
    %624 = vmatpush1.msra.mxu0 %v177
    %625 = vmatprep.subr.mxu0 %v182
    %626 = vmatpush1.msra.mxu0 %v181
    %627 = vmatprep.subr.mxu0 %v186
    %628 = vmatpush1.msra.mxu0 %v185
    %629 = vmatprep.subr.mxu0 %v190
    %630 = vmatpush1.msra.mxu0 %v189
    %631 = vmatprep.subr.mxu0 %v194
    %632 = vmatpush1.msra.mxu0 %v193
    %633 = vmatprep.subr.mxu0 %v198
    %634 = vmatpush1.msra.mxu0 %v197
    %635 = vmatprep.subr.mxu0 %v202
    %636 = vmatpush1.msra.mxu0 %v201
    %637 = vmatprep.subr.mxu0 %v206
    %638 = vmatpush1.msra.mxu0 %v205
    %639 = vmatprep.subr.mxu0 %v210
    %640 = vmatpush1.msra.mxu0 %v209
    %641 = vmatprep.subr.mxu0 %v214
    %642 = vmatpush1.msra.mxu0 %v213
    %643 = vmatprep.subr.mxu0 %v218
    %644 = vmatpush1.msra.mxu0 %v217
    %645 = vmatprep.subr.mxu0 %v222
    %646 = vmatpush1.msra.mxu0 %v221
    %647 = vmatprep.subr.mxu0 %v226
    %648 = vmatpush1.msra.mxu0 %v225
    %649 = vmatprep.subr.mxu0 %v230
    %650 = vmatpush1.msra.mxu0 %v229
    %651 = vmatprep.subr.mxu0 %v234
    %652 = vmatpush1.msra.mxu0 %v233
    %653 = vmatprep.subr.mxu0 %v238
    %654 = vmatpush1.msra.mxu0 %v237
    %655 = vmatprep.subr.mxu0 %v242
    %656 = vmatpush1.msra.mxu0 %v241
    %657 = vmatprep.subr.mxu0 %v246
    %658 = vmatpush1.msra.mxu0 %v245
    %659 = vmatprep.subr.mxu0 %v250
    %660 = vmatpush1.msra.mxu0 %v249
    %661 = vmatprep.subr.mxu0 %v254
    %662 = vmatpush1.msra.mxu0 %v253
    %663 = vmatprep.subr.mxu0 %v258
    %664 = vmatpush1.msra.mxu0 %v257
    %665 = vmatprep.subr.mxu0 %v262
    %666 = vmatpush1.msra.mxu0 %v261
    %667 = vmatprep.subr.mxu0 %v266
    %668 = vmatpush1.msra.mxu0 %v265
    %669 = vmatprep.subr.mxu0 %v270
    %670 = vmatpush1.msra.mxu0 %v269
    %671 = vmatprep.subr.mxu0 %v274
    %672 = vmatpush1.msra.mxu0 %v273
    %673 = vmatprep.subr.mxu0 %v278
    %674 = vmatpush1.msra.mxu0 %v277
    %675 = vmatprep.subr.mxu0 %v282
    %676 = vmatpush1.msra.mxu0 %v281
    %677 = vmatprep.subr.mxu0 %v286
    %678 = vmatpush1.msra.mxu0 %v285
    %679 = vmatprep.subr.mxu0 %v290
    %680 = vmatpush1.msra.mxu0 %v289
    %681 = vmatprep.subr.mxu0 %v294
    %682 = vmatpush1.msra.mxu0 %v293
    %683 = vmatprep.subr.mxu0 %v298
    %684 = vmatpush1.msra.mxu0 %v297
    %685 = vmatprep.subr.mxu0 %v302
    %686 = vmatpush1.msra.mxu0 %v301
    %687 = vmatprep.mubr.f32.mxu0 %v152
    %688 = vmatmul.mubr.f32.gmra.mrb[0].mxu0 %v151
    %v689 = vpop.f32.mrb[0].mxu0
    %v690 = vadd.f32 %v464, %v689
    %v691 = vpop.f32.mrb[0].mxu0
    %v692 = vadd.f32 %v468, %v691
    %693 = vmatprep.mubr.f32.mxu0 %v156
    %694 = vmatmul.mubr.f32.gmra.mrb[0].mxu0 %v155
    %v695 = vpop.f32.mrb[0].mxu0
    %v696 = vadd.f32 %v464, %v695
    %v697 = vpop.f32.mrb[0].mxu0
    %v698 = vadd.f32 %v468, %v697
    %699 = vdwg.mxu0
    %700 = vmatprep.subr.mxu0 %v306
    %701 = vmatpush1.msra.mxu0 %v305
    %702 = vmatprep.subr.mxu0 %v310
    %703 = vmatpush1.msra.mxu0 %v309
    %704 = vmatprep.subr.mxu0 %v314
    %705 = vmatpush1.msra.mxu0 %v313
    %706 = vmatprep.subr.mxu0 %v318
    %707 = vmatpush1.msra.mxu0 %v317
    %708 = vmatprep.subr.mxu0 %v322
    %709 = vmatpush1.msra.mxu0 %v321
    %710 = vmatprep.subr.mxu0 %v326
    %711 = vmatpush1.msra.mxu0 %v325
    %712 = vmatprep.subr.mxu0 %v330
    %713 = vmatpush1.msra.mxu0 %v329
    %714 = vmatprep.subr.mxu0 %v334
    %715 = vmatpush1.msra.mxu0 %v333
    %716 = vmatprep.subr.mxu0 %v338
    %717 = vmatpush1.msra.mxu0 %v337
    %718 = vmatprep.subr.mxu0 %v342
    %719 = vmatpush1.msra.mxu0 %v341
    %720 = vmatprep.subr.mxu0 %v346
    %721 = vmatpush1.msra.mxu0 %v345
    %722 = vmatprep.subr.mxu0 %v350
    %723 = vmatpush1.msra.mxu0 %v349
    %724 = vmatprep.subr.mxu0 %v354
    %725 = vmatpush1.msra.mxu0 %v353
    %726 = vmatprep.subr.mxu0 %v358
    %727 = vmatpush1.msra.mxu0 %v357
    %728 = vmatprep.subr.mxu0 %v362
    %729 = vmatpush1.msra.mxu0 %v361
    %730 = vmatprep.subr.mxu0 %v366
    %731 = vmatpush1.msra.mxu0 %v365
    %732 = vmatprep.subr.mxu0 %v370
    %733 = vmatpush1.msra.mxu0 %v369
    %734 = vmatprep.subr.mxu0 %v374
    %735 = vmatpush1.msra.mxu0 %v373
    %736 = vmatprep.subr.mxu0 %v378
    %737 = vmatpush1.msra.mxu0 %v377
    %738 = vmatprep.subr.mxu0 %v382
    %739 = vmatpush1.msra.mxu0 %v381
    %740 = vmatprep.subr.mxu0 %v386
    %741 = vmatpush1.msra.mxu0 %v385
    %742 = vmatprep.subr.mxu0 %v390
    %743 = vmatpush1.msra.mxu0 %v389
    %744 = vmatprep.subr.mxu0 %v394
    %745 = vmatpush1.msra.mxu0 %v393
    %746 = vmatprep.subr.mxu0 %v398
    %747 = vmatpush1.msra.mxu0 %v397
    %748 = vmatprep.subr.mxu0 %v402
    %749 = vmatpush1.msra.mxu0 %v401
    %750 = vmatprep.subr.mxu0 %v406
    %751 = vmatpush1.msra.mxu0 %v405
    %752 = vmatprep.subr.mxu0 %v410
    %753 = vmatpush1.msra.mxu0 %v409
    %754 = vmatprep.subr.mxu0 %v414
    %755 = vmatpush1.msra.mxu0 %v413
    %756 = vmatprep.subr.mxu0 %v418
    %757 = vmatpush1.msra.mxu0 %v417
    %758 = vmatprep.subr.mxu0 %v422
    %759 = vmatpush1.msra.mxu0 %v421
    %760 = vmatprep.subr.mxu0 %v426
    %761 = vmatpush1.msra.mxu0 %v425
    %762 = vmatprep.subr.mxu0 %v430
    %763 = vmatpush1.msra.mxu0 %v429
    %764 = vmatprep.mubr.f32.mxu0 %v154
    %765 = vmatmul.mubr.f32.gmra.mrb[0].mxu0 %v153
    %v766 = vpop.f32.mrb[0].mxu0
    %v767 = vadd.f32 %v690, %v766
    %v768 = vpop.f32.mrb[0].mxu0
    %v769 = vadd.f32 %v692, %v768
    %770 = vmatprep.mubr.f32.mxu0 %v158
    %771 = vmatmul.mubr.f32.gmra.mrb[0].mxu0 %v157
    %v772 = vpop.f32.mrb[0].mxu0
    %v773 = vadd.f32 %v696, %v772
    %v774 = vpop.f32.mrb[0].mxu0
    %v775 = vadd.f32 %v698, %v774
    %776 = vdwg.mxu0
    %v777 = vadd.f32 %v613, %v615
    %v778 = vadd.f32 %v777, %v767
    %v779 = vadd.f32 %v778, %v769
    %780 = vadd.xlane.f32.xlu0 %v779
    %v781 = vpop.xlane.xlu0 %780
    %v782 = vadd.f32 %v619, %v621
    %v783 = vadd.f32 %v782, %v773
    %v784 = vadd.f32 %v783, %v775
    %785 = vadd.xlane.f32.xlu0 %v784
    %v786 = vpop.xlane.xlu0 %785
    %vm787 = vcmask 130048
    %v789 = vsel %vm787, %v167, 0
    %v792 = vsel %vm787, %v168, 0
    %794 = vmatprep.subr.mxu0 0.0
    %795 = vmatpush1.msra.mxu0 %v781
    %796 = vmatprep.subr.mxu0 0.0
    %797 = vmatpush1.msra.mxu0 %v786
    %798 = vmatprep.subr.mxu0 0.0
    %799 = vmatpush1.msra.mxu0 0.0
    %800 = vmatprep.subr.mxu0 0.0
    %801 = vmatpush1.msra.mxu0 0.0
    %802 = vmatprep.subr.mxu0 0.0
    %803 = vmatpush1.msra.mxu0 0.0
    %804 = vmatprep.subr.mxu0 0.0
    %805 = vmatpush1.msra.mxu0 0.0
    %806 = vmatprep.subr.mxu0 0.0
    %807 = vmatpush1.msra.mxu0 0.0
    %808 = vmatprep.subr.mxu0 0.0
    %809 = vmatpush1.msra.mxu0 0.0
    %810 = vmatprep.subr.mxu0 0.0
    %811 = vmatpush1.msra.mxu0 0.0
    %812 = vmatprep.subr.mxu0 0.0
    %813 = vmatpush1.msra.mxu0 0.0
    %814 = vmatprep.subr.mxu0 0.0
    %815 = vmatpush1.msra.mxu0 0.0
    %816 = vmatprep.subr.mxu0 0.0
    %817 = vmatpush1.msra.mxu0 0.0
    %818 = vmatprep.subr.mxu0 0.0
    %819 = vmatpush1.msra.mxu0 0.0
    %820 = vmatprep.subr.mxu0 0.0
    %821 = vmatpush1.msra.mxu0 0.0
    %822 = vmatprep.subr.mxu0 0.0
    %823 = vmatpush1.msra.mxu0 0.0
    %824 = vmatprep.subr.mxu0 0.0
    %825 = vmatpush1.msra.mxu0 0.0
    %826 = vmatprep.subr.mxu0 0.0
    %827 = vmatpush1.msra.mxu0 0.0
    %828 = vmatprep.subr.mxu0 0.0
    %829 = vmatpush1.msra.mxu0 0.0
    %830 = vmatprep.subr.mxu0 0.0
    %831 = vmatpush1.msra.mxu0 0.0
    %832 = vmatprep.subr.mxu0 0.0
    %833 = vmatpush1.msra.mxu0 0.0
    %834 = vmatprep.subr.mxu0 0.0
    %835 = vmatpush1.msra.mxu0 0.0
    %836 = vmatprep.subr.mxu0 0.0
    %837 = vmatpush1.msra.mxu0 0.0
    %838 = vmatprep.subr.mxu0 0.0
    %839 = vmatpush1.msra.mxu0 0.0
    %840 = vmatprep.subr.mxu0 0.0
    %841 = vmatpush1.msra.mxu0 0.0
    %842 = vmatprep.subr.mxu0 0.0
    %843 = vmatpush1.msra.mxu0 0.0
    %844 = vmatprep.subr.mxu0 0.0
    %845 = vmatpush1.msra.mxu0 0.0
    %846 = vmatprep.subr.mxu0 0.0
    %847 = vmatpush1.msra.mxu0 0.0
    %848 = vmatprep.subr.mxu0 0.0
    %849 = vmatpush1.msra.mxu0 0.0
    %850 = vmatprep.subr.mxu0 0.0
    %851 = vmatpush1.msra.mxu0 0.0
    %852 = vmatprep.subr.mxu0 0.0
    %853 = vmatpush1.msra.mxu0 0.0
    %854 = vmatprep.subr.mxu0 0.0
    %855 = vmatpush1.msra.mxu0 0.0
    %856 = vmatprep.subr.mxu0 0.0
    %857 = vmatpush1.msra.mxu0 0.0
    %858 = vmatprep.mubr.f32.mxu0 0.0
    %859 = vmatmul.mubr.f32.gmra.mrb[0].mxu0 %v789
    %v860 = vpop.f32.mrb[0].mxu0
    %v861 = vadd.f32 0.0, %v860
    %v862 = vpop.f32.mrb[0].mxu0
    %863 = vmatprep.mubr.f32.mxu0 0.0
    %864 = vmatmul.mubr.f32.gmra.mrb[0].mxu0 %v792
    %v865 = vpop.f32.mrb[0].mxu0
    %v866 = vadd.f32 0.0, %v865
    %v867 = vpop.f32.mrb[0].mxu0
    %868 = vdwg.mxu0
    %v869 = vmul.f32 %v861, 0.00048828125
    %v870 = vmul.f32 %v866, 0.00048828125
    %872 = vset.pattern.permute.xlu0 0
    %873 = vperm.xlu0 %872, %v869
    %v874 = vpop.permute.xlu0 %873
    %877 = vset.pattern.permute.xlu0 0
    %878 = vperm.xlu0 %877, %v870
    %v879 = vpop.permute.xlu0 %878
    %v881 = vsub.f32 %v613, %v874
    %v882 = vsub.f32 %v615, %v874
    %v883 = vsub.f32 %v767, %v874
    %v884 = vsub.f32 %v769, %v874
    %v885 = vsub.f32 %v619, %v879
    %v886 = vsub.f32 %v621, %v879
    %v887 = vsub.f32 %v773, %v879
    %v888 = vsub.f32 %v775, %v879
    %v889 = vmul.f32 %v881, %v881
    %v890 = vmul.f32 %v882, %v882
    %v891 = vmul.f32 %v883, %v883
    %v892 = vmul.f32 %v884, %v884
    %v893 = vmul.f32 %v885, %v885
    %v894 = vmul.f32 %v886, %v886
    %v895 = vmul.f32 %v887, %v887
    %v896 = vmul.f32 %v888, %v888
    %v897 = vadd.f32 %v889, %v890
    %v898 = vadd.f32 %v897, %v891
    %v899 = vadd.f32 %v898, %v892
    %900 = vadd.xlane.f32.xlu0 %v899
    %v901 = vpop.xlane.xlu0 %900
    %v902 = vadd.f32 %v893, %v894
    %v903 = vadd.f32 %v902, %v895
    %v904 = vadd.f32 %v903, %v896
    %905 = vadd.xlane.f32.xlu0 %v904
    %v906 = vpop.xlane.xlu0 %905
    %907 = vmatprep.subr.mxu0 0.0
    %908 = vmatpush1.msra.mxu0 %v901
    %909 = vmatprep.subr.mxu0 0.0
    %910 = vmatpush1.msra.mxu0 %v906
    %911 = vmatprep.subr.mxu0 0.0
    %912 = vmatpush1.msra.mxu0 0.0
    %913 = vmatprep.subr.mxu0 0.0
    %914 = vmatpush1.msra.mxu0 0.0
    %915 = vmatprep.subr.mxu0 0.0
    %916 = vmatpush1.msra.mxu0 0.0
    %917 = vmatprep.subr.mxu0 0.0
    %918 = vmatpush1.msra.mxu0 0.0
    %919 = vmatprep.subr.mxu0 0.0
    %920 = vmatpush1.msra.mxu0 0.0
    %921 = vmatprep.subr.mxu0 0.0
    %922 = vmatpush1.msra.mxu0 0.0
    %923 = vmatprep.subr.mxu0 0.0
    %924 = vmatpush1.msra.mxu0 0.0
    %925 = vmatprep.subr.mxu0 0.0
    %926 = vmatpush1.msra.mxu0 0.0
    %927 = vmatprep.subr.mxu0 0.0
    %928 = vmatpush1.msra.mxu0 0.0
    %929 = vmatprep.subr.mxu0 0.0
    %930 = vmatpush1.msra.mxu0 0.0
    %931 = vmatprep.subr.mxu0 0.0
    %932 = vmatpush1.msra.mxu0 0.0
    %933 = vmatprep.subr.mxu0 0.0
    %934 = vmatpush1.msra.mxu0 0.0
    %935 = vmatprep.subr.mxu0 0.0
    %936 = vmatpush1.msra.mxu0 0.0
    %937 = vmatprep.subr.mxu0 0.0
    %938 = vmatpush1.msra.mxu0 0.0
    %939 = vmatprep.subr.mxu0 0.0
    %940 = vmatpush1.msra.mxu0 0.0
    %941 = vmatprep.subr.mxu0 0.0
    %942 = vmatpush1.msra.mxu0 0.0
    %943 = vmatprep.subr.mxu0 0.0
    %944 = vmatpush1.msra.mxu0 0.0
    %945 = vmatprep.subr.mxu0 0.0
    %946 = vmatpush1.msra.mxu0 0.0
    %947 = vmatprep.subr.mxu0 0.0
    %948 = vmatpush1.msra.mxu0 0.0
    %949 = vmatprep.subr.mxu0 0.0
    %950 = vmatpush1.msra.mxu0 0.0
    %951 = vmatprep.subr.mxu0 0.0
    %952 = vmatpush1.msra.mxu0 0.0
    %953 = vmatprep.subr.mxu0 0.0
    %954 = vmatpush1.msra.mxu0 0.0
    %955 = vmatprep.subr.mxu0 0.0
    %956 = vmatpush1.msra.mxu0 0.0
    %957 = vmatprep.subr.mxu0 0.0
    %958 = vmatpush1.msra.mxu0 0.0
    %959 = vmatprep.subr.mxu0 0.0
    %960 = vmatpush1.msra.mxu0 0.0
    %961 = vmatprep.subr.mxu0 0.0
    %962 = vmatpush1.msra.mxu0 0.0
    %963 = vmatprep.subr.mxu0 0.0
    %964 = vmatpush1.msra.mxu0 0.0
    %965 = vmatprep.subr.mxu0 0.0
    %966 = vmatpush1.msra.mxu0 0.0
    %967 = vmatprep.subr.mxu0 0.0
    %968 = vmatpush1.msra.mxu0 0.0
    %969 = vmatprep.subr.mxu0 0.0
    %970 = vmatpush1.msra.mxu0 0.0
    %971 = vmatprep.mubr.f32.mxu0 0.0
    %972 = vmatmul.mubr.f32.gmra.mrb[0].mxu0 %v789
    %v973 = vpop.f32.mrb[0].mxu0
    %v974 = vadd.f32 0.0, %v973
    %v975 = vpop.f32.mrb[0].mxu0
    %976 = vmatprep.mubr.f32.mxu0 0.0
    %977 = vmatmul.mubr.f32.gmra.mrb[0].mxu0 %v792
    %v978 = vpop.f32.mrb[0].mxu0
    %v979 = vadd.f32 0.0, %v978
    %v980 = vpop.f32.mrb[0].mxu0
    %981 = vdwg.mxu0
    %v982 = vmul.f32 %v974, 0.00048828125
    %v983 = vmul.f32 %v979, 0.00048828125
    %v984 = vadd.f32 %v982, 1e-05
    %v985 = vadd.f32 %v983, 1e-05
    %v986 = vrsqrt.pop %v984
    %v987 = vrsqrt.pop %v985
    %989 = vset.pattern.permute.xlu0 0
    %990 = vperm.xlu0 %989, %v986
    %v991 = vpop.permute.xlu0 %990
    %994 = vset.pattern.permute.xlu0 0
    %995 = vperm.xlu0 %994, %v987
    %v996 = vpop.permute.xlu0 %995
    %v998 = vmul.f32 %v881, %v991
    %v999 = vmul.f32 %v882, %v991
    %v1000 = vmul.f32 %v883, %v991
    %v1001 = vmul.f32 %v884, %v991
    %v1002 = vmul.f32 %v885, %v996
    %v1003 = vmul.f32 %v886, %v996
    %v1004 = vmul.f32 %v887, %v996
    %v1005 = vmul.f32 %v888, %v996
    %v1006 = vld [vmem:[#allocation10] sm:$0xff]
    %v1007 = vld [vmem:[#allocation10 + $0x8] sm:$0xff]
    %v1008 = vld [vmem:[#allocation10 + $0x10] sm:$0xff]
    %v1009 = vld [vmem:[#allocation10 + $0x18] sm:$0xff]
    %v1010 = vld [vmem:[#allocation10 + $0x20] sm:$0xff]
    %v1011 = vld [vmem:[#allocation10 + $0x28] sm:$0xff]
    %v1012 = vld [vmem:[#allocation10 + $0x30] sm:$0xff]
    %v1013 = vld [vmem:[#allocation10 + $0x38] sm:$0xff]
    %v1014 = vld [vmem:[#allocation10 + $0x40] sm:$0xff]
    %v1015 = vld [vmem:[#allocation10 + $0x48] sm:$0xff]
    %v1016 = vld [vmem:[#allocation10 + $0x50] sm:$0xff]
    %v1017 = vld [vmem:[#allocation10 + $0x58] sm:$0xff]
    %v1018 = vld [vmem:[#allocation10 + $0x60] sm:$0xff]
    %v1019 = vld [vmem:[#allocation10 + $0x68] sm:$0xff]
    %v1020 = vld [vmem:[#allocation10 + $0x70] sm:$0xff]
    %v1021 = vld [vmem:[#allocation10 + $0x78] sm:$0xff]
    %v1022 = vld [vmem:[#allocation10 + $0x80] sm:$0xff]
    %v1023 = vld [vmem:[#allocation10 + $0x88] sm:$0xff]
    %v1024 = vld [vmem:[#allocation10 + $0x90] sm:$0xff]
    %v1025 = vld [vmem:[#allocation10 + $0x98] sm:$0xff]
    %v1026 = vld [vmem:[#allocation10 + $0xa0] sm:$0xff]
    %v1027 = vld [vmem:[#allocation10 + $0xa8] sm:$0xff]
    %v1028 = vld [vmem:[#allocation10 + $0xb0] sm:$0xff]
    %v1029 = vld [vmem:[#allocation10 + $0xb8] sm:$0xff]
    %v1030 = vld [vmem:[#allocation10 + $0xc0] sm:$0xff]
    %v1031 = vld [vmem:[#allocation10 + $0xc8] sm:$0xff]
    %v1032 = vld [vmem:[#allocation10 + $0xd0] sm:$0xff]
    %v1033 = vld [vmem:[#allocation10 + $0xd8] sm:$0xff]
    %v1034 = vld [vmem:[#allocation10 + $0xe0] sm:$0xff]
    %v1035 = vld [vmem:[#allocation10 + $0xe8] sm:$0xff]
    %v1036 = vld [vmem:[#allocation10 + $0xf0] sm:$0xff]
    %v1037 = vld [vmem:[#allocation10 + $0xf8] sm:$0xff]
    %v1038 = vld [vmem:[#allocation10 + $0x100] sm:$0xff]
    %v1039 = vld [vmem:[#allocation10 + $0x108] sm:$0xff]
    %v1040 = vld [vmem:[#allocation10 + $0x110] sm:$0xff]
    %v1041 = vld [vmem:[#allocation10 + $0x118] sm:$0xff]
    %v1042 = vld [vmem:[#allocation10 + $0x120] sm:$0xff]
    %v1043 = vld [vmem:[#allocation10 + $0x128] sm:$0xff]
    %v1044 = vld [vmem:[#allocation10 + $0x130] sm:$0xff]
    %v1045 = vld [vmem:[#allocation10 + $0x138] sm:$0xff]
    %v1046 = vld [vmem:[#allocation10 + $0x140] sm:$0xff]
    %v1047 = vld [vmem:[#allocation10 + $0x148] sm:$0xff]
    %v1048 = vld [vmem:[#allocation10 + $0x150] sm:$0xff]
    %v1049 = vld [vmem:[#allocation10 + $0x158] sm:$0xff]
    %v1050 = vld [vmem:[#allocation10 + $0x160] sm:$0xff]
    %v1051 = vld [vmem:[#allocation10 + $0x168] sm:$0xff]
    %v1052 = vld [vmem:[#allocation10 + $0x170] sm:$0xff]
    %v1053 = vld [vmem:[#allocation10 + $0x178] sm:$0xff]
    %v1054 = vld [vmem:[#allocation10 + $0x180] sm:$0xff]
    %v1055 = vld [vmem:[#allocation10 + $0x188] sm:$0xff]
    %v1056 = vld [vmem:[#allocation10 + $0x190] sm:$0xff]
    %v1057 = vld [vmem:[#allocation10 + $0x198] sm:$0xff]
    %v1058 = vld [vmem:[#allocation10 + $0x1a0] sm:$0xff]
    %v1059 = vld [vmem:[#allocation10 + $0x1a8] sm:$0xff]
    %v1060 = vld [vmem:[#allocation10 + $0x1b0] sm:$0xff]
    %v1061 = vld [vmem:[#allocation10 + $0x1b8] sm:$0xff]
    %v1062 = vld [vmem:[#allocation10 + $0x1c0] sm:$0xff]
    %v1063 = vld [vmem:[#allocation10 + $0x1c8] sm:$0xff]
    %v1064 = vld [vmem:[#allocation10 + $0x1d0] sm:$0xff]
    %v1065 = vld [vmem:[#allocation10 + $0x1d8] sm:$0xff]
    %v1066 = vld [vmem:[#allocation10 + $0x1e0] sm:$0xff]
    %v1067 = vld [vmem:[#allocation10 + $0x1e8] sm:$0xff]
    %v1068 = vld [vmem:[#allocation10 + $0x1f0] sm:$0xff]
    %v1069 = vld [vmem:[#allocation10 + $0x1f8] sm:$0xff]
    %v1070 = vld [vmem:[#allocation10 + $0x200] sm:$0xff]
    %v1071 = vld [vmem:[#allocation10 + $0x208] sm:$0xff]
    %v1072 = vld [vmem:[#allocation10 + $0x210] sm:$0xff]
    %v1073 = vld [vmem:[#allocation10 + $0x218] sm:$0xff]
    %v1074 = vld [vmem:[#allocation10 + $0x220] sm:$0xff]
    %v1075 = vld [vmem:[#allocation10 + $0x228] sm:$0xff]
    %v1076 = vld [vmem:[#allocation10 + $0x230] sm:$0xff]
    %v1077 = vld [vmem:[#allocation10 + $0x238] sm:$0xff]
    %v1078 = vld [vmem:[#allocation10 + $0x240] sm:$0xff]
    %v1079 = vld [vmem:[#allocation10 + $0x248] sm:$0xff]
    %v1080 = vld [vmem:[#allocation10 + $0x250] sm:$0xff]
    %v1081 = vld [vmem:[#allocation10 + $0x258] sm:$0xff]
    %v1082 = vld [vmem:[#allocation10 + $0x260] sm:$0xff]
    %v1083 = vld [vmem:[#allocation10 + $0x268] sm:$0xff]
    %v1084 = vld [vmem:[#allocation10 + $0x270] sm:$0xff]
    %v1085 = vld [vmem:[#allocation10 + $0x278] sm:$0xff]
    %v1086 = vld [vmem:[#allocation10 + $0x280] sm:$0xff]
    %v1087 = vld [vmem:[#allocation10 + $0x288] sm:$0xff]
    %v1088 = vld [vmem:[#allocation10 + $0x290] sm:$0xff]
    %v1089 = vld [vmem:[#allocation10 + $0x298] sm:$0xff]
    %v1090 = vld [vmem:[#allocation10 + $0x2a0] sm:$0xff]
    %v1091 = vld [vmem:[#allocation10 + $0x2a8] sm:$0xff]
    %v1092 = vld [vmem:[#allocation10 + $0x2b0] sm:$0xff]
    %v1093 = vld [vmem:[#allocation10 + $0x2b8] sm:$0xff]
    %v1094 = vld [vmem:[#allocation10 + $0x2c0] sm:$0xff]
    %v1095 = vld [vmem:[#allocation10 + $0x2c8] sm:$0xff]
    %v1096 = vld [vmem:[#allocation10 + $0x2d0] sm:$0xff]
    %v1097 = vld [vmem:[#allocation10 + $0x2d8] sm:$0xff]
    %v1098 = vld [vmem:[#allocation10 + $0x2e0] sm:$0xff]
    %v1099 = vld [vmem:[#allocation10 + $0x2e8] sm:$0xff]
    %v1100 = vld [vmem:[#allocation10 + $0x2f0] sm:$0xff]
    %v1101 = vld [vmem:[#allocation10 + $0x2f8] sm:$0xff]
    %v1102 = vld [vmem:[#allocation10 + $0x300] sm:$0xff]
    %v1103 = vld [vmem:[#allocation10 + $0x308] sm:$0xff]
    %v1104 = vld [vmem:[#allocation10 + $0x310] sm:$0xff]
    %v1105 = vld [vmem:[#allocation10 + $0x318] sm:$0xff]
    %v1106 = vld [vmem:[#allocation10 + $0x320] sm:$0xff]
    %v1107 = vld [vmem:[#allocation10 + $0x328] sm:$0xff]
    %v1108 = vld [vmem:[#allocation10 + $0x330] sm:$0xff]
    %v1109 = vld [vmem:[#allocation10 + $0x338] sm:$0xff]
    %v1110 = vld [vmem:[#allocation10 + $0x340] sm:$0xff]
    %v1111 = vld [vmem:[#allocation10 + $0x348] sm:$0xff]
    %v1112 = vld [vmem:[#allocation10 + $0x350] sm:$0xff]
    %v1113 = vld [vmem:[#allocation10 + $0x358] sm:$0xff]
    %v1114 = vld [vmem:[#allocation10 + $0x360] sm:$0xff]
    %v1115 = vld [vmem:[#allocation10 + $0x368] sm:$0xff]
    %v1116 = vld [vmem:[#allocation10 + $0x370] sm:$0xff]
    %v1117 = vld [vmem:[#allocation10 + $0x378] sm:$0xff]
    %v1118 = vld [vmem:[#allocation10 + $0x380] sm:$0xff]
    %v1119 = vld [vmem:[#allocation10 + $0x388] sm:$0xff]
    %v1120 = vld [vmem:[#allocation10 + $0x390] sm:$0xff]
    %v1121 = vld [vmem:[#allocation10 + $0x398] sm:$0xff]
    %v1122 = vld [vmem:[#allocation10 + $0x3a0] sm:$0xff]
    %v1123 = vld [vmem:[#allocation10 + $0x3a8] sm:$0xff]
    %v1124 = vld [vmem:[#allocation10 + $0x3b0] sm:$0xff]
    %v1125 = vld [vmem:[#allocation10 + $0x3b8] sm:$0xff]
    %v1126 = vld [vmem:[#allocation10 + $0x3c0] sm:$0xff]
    %v1127 = vld [vmem:[#allocation10 + $0x3c8] sm:$0xff]
    %v1128 = vld [vmem:[#allocation10 + $0x3d0] sm:$0xff]
    %v1129 = vld [vmem:[#allocation10 + $0x3d8] sm:$0xff]
    %v1130 = vld [vmem:[#allocation10 + $0x3e0] sm:$0xff]
    %v1131 = vld [vmem:[#allocation10 + $0x3e8] sm:$0xff]
    %v1132 = vld [vmem:[#allocation10 + $0x3f0] sm:$0xff]
    %v1133 = vld [vmem:[#allocation10 + $0x3f8] sm:$0xff]
    %v1134 = vld [vmem:[#allocation10 + $0x400] sm:$0xff]
    %v1135 = vld [vmem:[#allocation10 + $0x408] sm:$0xff]
    %v1136 = vld [vmem:[#allocation10 + $0x410] sm:$0xff]
    %v1137 = vld [vmem:[#allocation10 + $0x418] sm:$0xff]
    %v1138 = vld [vmem:[#allocation10 + $0x420] sm:$0xff]
    %v1139 = vld [vmem:[#allocation10 + $0x428] sm:$0xff]
    %v1140 = vld [vmem:[#allocation10 + $0x430] sm:$0xff]
    %v1141 = vld [vmem:[#allocation10 + $0x438] sm:$0xff]
    %v1142 = vld [vmem:[#allocation10 + $0x440] sm:$0xff]
    %v1143 = vld [vmem:[#allocation10 + $0x448] sm:$0xff]
    %v1144 = vld [vmem:[#allocation10 + $0x450] sm:$0xff]
    %v1145 = vld [vmem:[#allocation10 + $0x458] sm:$0xff]
    %v1146 = vld [vmem:[#allocation10 + $0x460] sm:$0xff]
    %v1147 = vld [vmem:[#allocation10 + $0x468] sm:$0xff]
    %v1148 = vld [vmem:[#allocation10 + $0x470] sm:$0xff]
    %v1149 = vld [vmem:[#allocation10 + $0x478] sm:$0xff]
    %v1150 = vld [vmem:[#allocation10 + $0x480] sm:$0xff]
    %v1151 = vld [vmem:[#allocation10 + $0x488] sm:$0xff]
    %v1152 = vld [vmem:[#allocation10 + $0x490] sm:$0xff]
    %v1153 = vld [vmem:[#allocation10 + $0x498] sm:$0xff]
    %v1154 = vld [vmem:[#allocation10 + $0x4a0] sm:$0xff]
    %v1155 = vld [vmem:[#allocation10 + $0x4a8] sm:$0xff]
    %v1156 = vld [vmem:[#allocation10 + $0x4b0] sm:$0xff]
    %v1157 = vld [vmem:[#allocation10 + $0x4b8] sm:$0xff]
    %v1158 = vld [vmem:[#allocation10 + $0x4c0] sm:$0xff]
    %v1159 = vld [vmem:[#allocation10 + $0x4c8] sm:$0xff]
    %v1160 = vld [vmem:[#allocation10 + $0x4d0] sm:$0xff]
    %v1161 = vld [vmem:[#allocation10 + $0x4d8] sm:$0xff]
    %v1162 = vld [vmem:[#allocation10 + $0x4e0] sm:$0xff]
    %v1163 = vld [vmem:[#allocation10 + $0x4e8] sm:$0xff]
    %v1164 = vld [vmem:[#allocation10 + $0x4f0] sm:$0xff]
    %v1165 = vld [vmem:[#allocation10 + $0x4f8] sm:$0xff]
    %v1166 = vld [vmem:[#allocation10 + $0x500] sm:$0xff]
    %v1167 = vld [vmem:[#allocation10 + $0x508] sm:$0xff]
    %v1168 = vld [vmem:[#allocation10 + $0x510] sm:$0xff]
    %v1169 = vld [vmem:[#allocation10 + $0x518] sm:$0xff]
    %v1170 = vld [vmem:[#allocation10 + $0x520] sm:$0xff]
    %v1171 = vld [vmem:[#allocation10 + $0x528] sm:$0xff]
    %v1172 = vld [vmem:[#allocation10 + $0x530] sm:$0xff]
    %v1173 = vld [vmem:[#allocation10 + $0x538] sm:$0xff]
    %v1174 = vld [vmem:[#allocation10 + $0x540] sm:$0xff]
    %v1175 = vld [vmem:[#allocation10 + $0x548] sm:$0xff]
    %v1176 = vld [vmem:[#allocation10 + $0x550] sm:$0xff]
    %v1177 = vld [vmem:[#allocation10 + $0x558] sm:$0xff]
    %v1178 = vld [vmem:[#allocation10 + $0x560] sm:$0xff]
    %v1179 = vld [vmem:[#allocation10 + $0x568] sm:$0xff]
    %v1180 = vld [vmem:[#allocation10 + $0x570] sm:$0xff]
    %v1181 = vld [vmem:[#allocation10 + $0x578] sm:$0xff]
    %v1182 = vld [vmem:[#allocation10 + $0x580] sm:$0xff]
    %v1183 = vld [vmem:[#allocation10 + $0x588] sm:$0xff]
    %v1184 = vld [vmem:[#allocation10 + $0x590] sm:$0xff]
    %v1185 = vld [vmem:[#allocation10 + $0x598] sm:$0xff]
    %v1186 = vld [vmem:[#allocation10 + $0x5a0] sm:$0xff]
    %v1187 = vld [vmem:[#allocation10 + $0x5a8] sm:$0xff]
    %v1188 = vld [vmem:[#allocation10 + $0x5b0] sm:$0xff]
    %v1189 = vld [vmem:[#allocation10 + $0x5b8] sm:$0xff]
    %v1190 = vld [vmem:[#allocation10 + $0x5c0] sm:$0xff]
    %v1191 = vld [vmem:[#allocation10 + $0x5c8] sm:$0xff]
    %v1192 = vld [vmem:[#allocation10 + $0x5d0] sm:$0xff]
    %v1193 = vld [vmem:[#allocation10 + $0x5d8] sm:$0xff]
    %v1194 = vld [vmem:[#allocation10 + $0x5e0] sm:$0xff]
    %v1195 = vld [vmem:[#allocation10 + $0x5e8] sm:$0xff]
    %v1196 = vld [vmem:[#allocation10 + $0x5f0] sm:$0xff]
    %v1197 = vld [vmem:[#allocation10 + $0x5f8] sm:$0xff]
    %v1198 = vld [vmem:[#allocation10 + $0x600] sm:$0xff]
    %v1199 = vld [vmem:[#allocation10 + $0x608] sm:$0xff]
    %v1200 = vld [vmem:[#allocation10 + $0x610] sm:$0xff]
    %v1201 = vld [vmem:[#allocation10 + $0x618] sm:$0xff]
    %v1202 = vld [vmem:[#allocation10 + $0x620] sm:$0xff]
    %v1203 = vld [vmem:[#allocation10 + $0x628] sm:$0xff]
    %v1204 = vld [vmem:[#allocation10 + $0x630] sm:$0xff]
    %v1205 = vld [vmem:[#allocation10 + $0x638] sm:$0xff]
    %v1206 = vld [vmem:[#allocation10 + $0x640] sm:$0xff]
    %v1207 = vld [vmem:[#allocation10 + $0x648] sm:$0xff]
    %v1208 = vld [vmem:[#allocation10 + $0x650] sm:$0xff]
    %v1209 = vld [vmem:[#allocation10 + $0x658] sm:$0xff]
    %v1210 = vld [vmem:[#allocation10 + $0x660] sm:$0xff]
    %v1211 = vld [vmem:[#allocation10 + $0x668] sm:$0xff]
    %v1212 = vld [vmem:[#allocation10 + $0x670] sm:$0xff]
    %v1213 = vld [vmem:[#allocation10 + $0x678] sm:$0xff]
    %v1214 = vld [vmem:[#allocation10 + $0x680] sm:$0xff]
    %v1215 = vld [vmem:[#allocation10 + $0x688] sm:$0xff]
    %v1216 = vld [vmem:[#allocation10 + $0x690] sm:$0xff]
    %v1217 = vld [vmem:[#allocation10 + $0x698] sm:$0xff]
    %v1218 = vld [vmem:[#allocation10 + $0x6a0] sm:$0xff]
    %v1219 = vld [vmem:[#allocation10 + $0x6a8] sm:$0xff]
    %v1220 = vld [vmem:[#allocation10 + $0x6b0] sm:$0xff]
    %v1221 = vld [vmem:[#allocation10 + $0x6b8] sm:$0xff]
    %v1222 = vld [vmem:[#allocation10 + $0x6c0] sm:$0xff]
    %v1223 = vld [vmem:[#allocation10 + $0x6c8] sm:$0xff]
    %v1224 = vld [vmem:[#allocation10 + $0x6d0] sm:$0xff]
    %v1225 = vld [vmem:[#allocation10 + $0x6d8] sm:$0xff]
    %v1226 = vld [vmem:[#allocation10 + $0x6e0] sm:$0xff]
    %v1227 = vld [vmem:[#allocation10 + $0x6e8] sm:$0xff]
    %v1228 = vld [vmem:[#allocation10 + $0x6f0] sm:$0xff]
    %v1229 = vld [vmem:[#allocation10 + $0x6f8] sm:$0xff]
    %v1230 = vld [vmem:[#allocation10 + $0x700] sm:$0xff]
    %v1231 = vld [vmem:[#allocation10 + $0x708] sm:$0xff]
    %v1232 = vld [vmem:[#allocation10 + $0x710] sm:$0xff]
    %v1233 = vld [vmem:[#allocation10 + $0x718] sm:$0xff]
    %v1234 = vld [vmem:[#allocation10 + $0x720] sm:$0xff]
    %v1235 = vld [vmem:[#allocation10 + $0x728] sm:$0xff]
    %v1236 = vld [vmem:[#allocation10 + $0x730] sm:$0xff]
    %v1237 = vld [vmem:[#allocation10 + $0x738] sm:$0xff]
    %v1238 = vld [vmem:[#allocation10 + $0x740] sm:$0xff]
    %v1239 = vld [vmem:[#allocation10 + $0x748] sm:$0xff]
    %v1240 = vld [vmem:[#allocation10 + $0x750] sm:$0xff]
    %v1241 = vld [vmem:[#allocation10 + $0x758] sm:$0xff]
    %v1242 = vld [vmem:[#allocation10 + $0x760] sm:$0xff]
    %v1243 = vld [vmem:[#allocation10 + $0x768] sm:$0xff]
    %v1244 = vld [vmem:[#allocation10 + $0x770] sm:$0xff]
    %v1245 = vld [vmem:[#allocation10 + $0x778] sm:$0xff]
    %v1246 = vld [vmem:[#allocation10 + $0x780] sm:$0xff]
    %v1247 = vld [vmem:[#allocation10 + $0x788] sm:$0xff]
    %v1248 = vld [vmem:[#allocation10 + $0x790] sm:$0xff]
    %v1249 = vld [vmem:[#allocation10 + $0x798] sm:$0xff]
    %v1250 = vld [vmem:[#allocation10 + $0x7a0] sm:$0xff]
    %v1251 = vld [vmem:[#allocation10 + $0x7a8] sm:$0xff]
    %v1252 = vld [vmem:[#allocation10 + $0x7b0] sm:$0xff]
    %v1253 = vld [vmem:[#allocation10 + $0x7b8] sm:$0xff]
    %v1254 = vld [vmem:[#allocation10 + $0x7c0] sm:$0xff]
    %v1255 = vld [vmem:[#allocation10 + $0x7c8] sm:$0xff]
    %v1256 = vld [vmem:[#allocation10 + $0x7d0] sm:$0xff]
    %v1257 = vld [vmem:[#allocation10 + $0x7d8] sm:$0xff]
    %v1258 = vld [vmem:[#allocation10 + $0x7e0] sm:$0xff]
    %v1259 = vld [vmem:[#allocation10 + $0x7e8] sm:$0xff]
    %v1260 = vld [vmem:[#allocation10 + $0x7f0] sm:$0xff]
    %v1261 = vld [vmem:[#allocation10 + $0x7f8] sm:$0xff]
    %v1262 = vld [vmem:[#allocation10 + $0x800] sm:$0xff]
    %v1263 = vld [vmem:[#allocation10 + $0x808] sm:$0xff]
    %v1264 = vld [vmem:[#allocation10 + $0x810] sm:$0xff]
    %v1265 = vld [vmem:[#allocation10 + $0x818] sm:$0xff]
    %v1266 = vld [vmem:[#allocation10 + $0x820] sm:$0xff]
    %v1267 = vld [vmem:[#allocation10 + $0x828] sm:$0xff]
    %v1268 = vld [vmem:[#allocation10 + $0x830] sm:$0xff]
    %v1269 = vld [vmem:[#allocation10 + $0x838] sm:$0xff]
    %v1270 = vld [vmem:[#allocation10 + $0x840] sm:$0xff]
    %v1271 = vld [vmem:[#allocation10 + $0x848] sm:$0xff]
    %v1272 = vld [vmem:[#allocation10 + $0x850] sm:$0xff]
    %v1273 = vld [vmem:[#allocation10 + $0x858] sm:$0xff]
    %v1274 = vld [vmem:[#allocation10 + $0x860] sm:$0xff]
    %v1275 = vld [vmem:[#allocation10 + $0x868] sm:$0xff]
    %v1276 = vld [vmem:[#allocation10 + $0x870] sm:$0xff]
    %v1277 = vld [vmem:[#allocation10 + $0x878] sm:$0xff]
    %v1278 = vld [vmem:[#allocation10 + $0x880] sm:$0xff]
    %v1279 = vld [vmem:[#allocation10 + $0x888] sm:$0xff]
    %v1280 = vld [vmem:[#allocation10 + $0x890] sm:$0xff]
    %v1281 = vld [vmem:[#allocation10 + $0x898] sm:$0xff]
    %v1282 = vld [vmem:[#allocation10 + $0x8a0] sm:$0xff]
    %v1283 = vld [vmem:[#allocation10 + $0x8a8] sm:$0xff]
    %v1284 = vld [vmem:[#allocation10 + $0x8b0] sm:$0xff]
    %v1285 = vld [vmem:[#allocation10 + $0x8b8] sm:$0xff]
    %v1286 = vld [vmem:[#allocation10 + $0x8c0] sm:$0xff]
    %v1287 = vld [vmem:[#allocation10 + $0x8c8] sm:$0xff]
    %v1288 = vld [vmem:[#allocation10 + $0x8d0] sm:$0xff]
    %v1289 = vld [vmem:[#allocation10 + $0x8d8] sm:$0xff]
    %v1290 = vld [vmem:[#allocation10 + $0x8e0] sm:$0xff]
    %v1291 = vld [vmem:[#allocation10 + $0x8e8] sm:$0xff]
    %v1292 = vld [vmem:[#allocation10 + $0x8f0] sm:$0xff]
    %v1293 = vld [vmem:[#allocation10 + $0x8f8] sm:$0xff]
    %v1294 = vld [vmem:[#allocation10 + $0x900] sm:$0xff]
    %v1295 = vld [vmem:[#allocation10 + $0x908] sm:$0xff]
    %v1296 = vld [vmem:[#allocation10 + $0x910] sm:$0xff]
    %v1297 = vld [vmem:[#allocation10 + $0x918] sm:$0xff]
    %v1298 = vld [vmem:[#allocation10 + $0x920] sm:$0xff]
    %v1299 = vld [vmem:[#allocation10 + $0x928] sm:$0xff]
    %v1300 = vld [vmem:[#allocation10 + $0x930] sm:$0xff]
    %v1301 = vld [vmem:[#allocation10 + $0x938] sm:$0xff]
    %v1302 = vld [vmem:[#allocation10 + $0x940] sm:$0xff]
    %v1303 = vld [vmem:[#allocation10 + $0x948] sm:$0xff]
    %v1304 = vld [vmem:[#allocation10 + $0x950] sm:$0xff]
    %v1305 = vld [vmem:[#allocation10 + $0x958] sm:$0xff]
    %v1306 = vld [vmem:[#allocation10 + $0x960] sm:$0xff]
    %v1307 = vld [vmem:[#allocation10 + $0x968] sm:$0xff]
    %v1308 = vld [vmem:[#allocation10 + $0x970] sm:$0xff]
    %v1309 = vld [vmem:[#allocation10 + $0x978] sm:$0xff]
    %v1310 = vld [vmem:[#allocation10 + $0x980] sm:$0xff]
    %v1311 = vld [vmem:[#allocation10 + $0x988] sm:$0xff]
    %v1312 = vld [vmem:[#allocation10 + $0x990] sm:$0xff]
    %v1313 = vld [vmem:[#allocation10 + $0x998] sm:$0xff]
    %v1314 = vld [vmem:[#allocation10 + $0x9a0] sm:$0xff]
    %v1315 = vld [vmem:[#allocation10 + $0x9a8] sm:$0xff]
    %v1316 = vld [vmem:[#allocation10 + $0x9b0] sm:$0xff]
    %v1317 = vld [vmem:[#allocation10 + $0x9b8] sm:$0xff]
    %v1318 = vld [vmem:[#allocation10 + $0x9c0] sm:$0xff]
    %v1319 = vld [vmem:[#allocation10 + $0x9c8] sm:$0xff]
    %v1320 = vld [vmem:[#allocation10 + $0x9d0] sm:$0xff]
    %v1321 = vld [vmem:[#allocation10 + $0x9d8] sm:$0xff]
    %v1322 = vld [vmem:[#allocation10 + $0x9e0] sm:$0xff]
    %v1323 = vld [vmem:[#allocation10 + $0x9e8] sm:$0xff]
    %v1324 = vld [vmem:[#allocation10 + $0x9f0] sm:$0xff]
    %v1325 = vld [vmem:[#allocation10 + $0x9f8] sm:$0xff]
    %v1326 = vld [vmem:[#allocation10 + $0xa00] sm:$0xff]
    %v1327 = vld [vmem:[#allocation10 + $0xa08] sm:$0xff]
    %v1328 = vld [vmem:[#allocation10 + $0xa10] sm:$0xff]
    %v1329 = vld [vmem:[#allocation10 + $0xa18] sm:$0xff]
    %v1330 = vld [vmem:[#allocation10 + $0xa20] sm:$0xff]
    %v1331 = vld [vmem:[#allocation10 + $0xa28] sm:$0xff]
    %v1332 = vld [vmem:[#allocation10 + $0xa30] sm:$0xff]
    %v1333 = vld [vmem:[#allocation10 + $0xa38] sm:$0xff]
    %v1334 = vld [vmem:[#allocation10 + $0xa40] sm:$0xff]
    %v1335 = vld [vmem:[#allocation10 + $0xa48] sm:$0xff]
    %v1336 = vld [vmem:[#allocation10 + $0xa50] sm:$0xff]
    %v1337 = vld [vmem:[#allocation10 + $0xa58] sm:$0xff]
    %v1338 = vld [vmem:[#allocation10 + $0xa60] sm:$0xff]
    %v1339 = vld [vmem:[#allocation10 + $0xa68] sm:$0xff]
    %v1340 = vld [vmem:[#allocation10 + $0xa70] sm:$0xff]
    %v1341 = vld [vmem:[#allocation10 + $0xa78] sm:$0xff]
    %v1342 = vld [vmem:[#allocation10 + $0xa80] sm:$0xff]
    %v1343 = vld [vmem:[#allocation10 + $0xa88] sm:$0xff]
    %v1344 = vld [vmem:[#allocation10 + $0xa90] sm:$0xff]
    %v1345 = vld [vmem:[#allocation10 + $0xa98] sm:$0xff]
    %v1346 = vld [vmem:[#allocation10 + $0xaa0] sm:$0xff]
    %v1347 = vld [vmem:[#allocation10 + $0xaa8] sm:$0xff]
    %v1348 = vld [vmem:[#allocation10 + $0xab0] sm:$0xff]
    %v1349 = vld [vmem:[#allocation10 + $0xab8] sm:$0xff]
    %v1350 = vld [vmem:[#allocation10 + $0xac0] sm:$0xff]
    %v1351 = vld [vmem:[#allocation10 + $0xac8] sm:$0xff]
    %v1352 = vld [vmem:[#allocation10 + $0xad0] sm:$0xff]
    %v1353 = vld [vmem:[#allocation10 + $0xad8] sm:$0xff]
    %v1354 = vld [vmem:[#allocation10 + $0xae0] sm:$0xff]
    %v1355 = vld [vmem:[#allocation10 + $0xae8] sm:$0xff]
    %v1356 = vld [vmem:[#allocation10 + $0xaf0] sm:$0xff]
    %v1357 = vld [vmem:[#allocation10 + $0xaf8] sm:$0xff]
    %v1358 = vld [vmem:[#allocation10 + $0xb00] sm:$0xff]
    %v1359 = vld [vmem:[#allocation10 + $0xb08] sm:$0xff]
    %v1360 = vld [vmem:[#allocation10 + $0xb10] sm:$0xff]
    %v1361 = vld [vmem:[#allocation10 + $0xb18] sm:$0xff]
    %v1362 = vld [vmem:[#allocation10 + $0xb20] sm:$0xff]
    %v1363 = vld [vmem:[#allocation10 + $0xb28] sm:$0xff]
    %v1364 = vld [vmem:[#allocation10 + $0xb30] sm:$0xff]
    %v1365 = vld [vmem:[#allocation10 + $0xb38] sm:$0xff]
    %v1366 = vld [vmem:[#allocation10 + $0xb40] sm:$0xff]
    %v1367 = vld [vmem:[#allocation10 + $0xb48] sm:$0xff]
    %v1368 = vld [vmem:[#allocation10 + $0xb50] sm:$0xff]
    %v1369 = vld [vmem:[#allocation10 + $0xb58] sm:$0xff]
    %v1370 = vld [vmem:[#allocation10 + $0xb60] sm:$0xff]
    %v1371 = vld [vmem:[#allocation10 + $0xb68] sm:$0xff]
    %v1372 = vld [vmem:[#allocation10 + $0xb70] sm:$0xff]
    %v1373 = vld [vmem:[#allocation10 + $0xb78] sm:$0xff]
    %v1374 = vld [vmem:[#allocation10 + $0xb80] sm:$0xff]
    %v1375 = vld [vmem:[#allocation10 + $0xb88] sm:$0xff]
    %v1376 = vld [vmem:[#allocation10 + $0xb90] sm:$0xff]
    %v1377 = vld [vmem:[#allocation10 + $0xb98] sm:$0xff]
    %v1378 = vld [vmem:[#allocation10 + $0xba0] sm:$0xff]
    %v1379 = vld [vmem:[#allocation10 + $0xba8] sm:$0xff]
    %v1380 = vld [vmem:[#allocation10 + $0xbb0] sm:$0xff]
    %v1381 = vld [vmem:[#allocation10 + $0xbb8] sm:$0xff]
    %v1382 = vld [vmem:[#allocation10 + $0xbc0] sm:$0xff]
    %v1383 = vld [vmem:[#allocation10 + $0xbc8] sm:$0xff]
    %v1384 = vld [vmem:[#allocation10 + $0xbd0] sm:$0xff]
    %v1385 = vld [vmem:[#allocation10 + $0xbd8] sm:$0xff]
    %v1386 = vld [vmem:[#allocation10 + $0xbe0] sm:$0xff]
    %v1387 = vld [vmem:[#allocation10 + $0xbe8] sm:$0xff]
    %v1388 = vld [vmem:[#allocation10 + $0xbf0] sm:$0xff]
    %v1389 = vld [vmem:[#allocation10 + $0xbf8] sm:$0xff]
    %v1390 = vld [vmem:[#allocation10 + $0xc00] sm:$0xff]
    %v1391 = vld [vmem:[#allocation10 + $0xc08] sm:$0xff]
    %v1392 = vld [vmem:[#allocation10 + $0xc10] sm:$0xff]
    %v1393 = vld [vmem:[#allocation10 + $0xc18] sm:$0xff]
    %v1394 = vld [vmem:[#allocation10 + $0xc20] sm:$0xff]
    %v1395 = vld [vmem:[#allocation10 + $0xc28] sm:$0xff]
    %v1396 = vld [vmem:[#allocation10 + $0xc30] sm:$0xff]
    %v1397 = vld [vmem:[#allocation10 + $0xc38] sm:$0xff]
    %v1398 = vld [vmem:[#allocation10 + $0xc40] sm:$0xff]
    %v1399 = vld [vmem:[#allocation10 + $0xc48] sm:$0xff]
    %v1400 = vld [vmem:[#allocation10 + $0xc50] sm:$0xff]
    %v1401 = vld [vmem:[#allocation10 + $0xc58] sm:$0xff]
    %v1402 = vld [vmem:[#allocation10 + $0xc60] sm:$0xff]
    %v1403 = vld [vmem:[#allocation10 + $0xc68] sm:$0xff]
    %v1404 = vld [vmem:[#allocation10 + $0xc70] sm:$0xff]
    %v1405 = vld [vmem:[#allocation10 + $0xc78] sm:$0xff]
    %v1406 = vld [vmem:[#allocation10 + $0xc80] sm:$0xff]
    %v1407 = vld [vmem:[#allocation10 + $0xc88] sm:$0xff]
    %v1408 = vld [vmem:[#allocation10 + $0xc90] sm:$0xff]
    %v1409 = vld [vmem:[#allocation10 + $0xc98] sm:$0xff]
    %v1410 = vld [vmem:[#allocation10 + $0xca0] sm:$0xff]
    %v1411 = vld [vmem:[#allocation10 + $0xca8] sm:$0xff]
    %v1412 = vld [vmem:[#allocation10 + $0xcb0] sm:$0xff]
    %v1413 = vld [vmem:[#allocation10 + $0xcb8] sm:$0xff]
    %v1414 = vld [vmem:[#allocation10 + $0xcc0] sm:$0xff]
    %v1415 = vld [vmem:[#allocation10 + $0xcc8] sm:$0xff]
    %v1416 = vld [vmem:[#allocation10 + $0xcd0] sm:$0xff]
    %v1417 = vld [vmem:[#allocation10 + $0xcd8] sm:$0xff]
    %v1418 = vld [vmem:[#allocation10 + $0xce0] sm:$0xff]
    %v1419 = vld [vmem:[#allocation10 + $0xce8] sm:$0xff]
    %v1420 = vld [vmem:[#allocation10 + $0xcf0] sm:$0xff]
    %v1421 = vld [vmem:[#allocation10 + $0xcf8] sm:$0xff]
    %v1422 = vld [vmem:[#allocation10 + $0xd00] sm:$0xff]
    %v1423 = vld [vmem:[#allocation10 + $0xd08] sm:$0xff]
    %v1424 = vld [vmem:[#allocation10 + $0xd10] sm:$0xff]
    %v1425 = vld [vmem:[#allocation10 + $0xd18] sm:$0xff]
    %v1426 = vld [vmem:[#allocation10 + $0xd20] sm:$0xff]
    %v1427 = vld [vmem:[#allocation10 + $0xd28] sm:$0xff]
    %v1428 = vld [vmem:[#allocation10 + $0xd30] sm:$0xff]
    %v1429 = vld [vmem:[#allocation10 + $0xd38] sm:$0xff]
    %v1430 = vld [vmem:[#allocation10 + $0xd40] sm:$0xff]
    %v1431 = vld [vmem:[#allocation10 + $0xd48] sm:$0xff]
    %v1432 = vld [vmem:[#allocation10 + $0xd50] sm:$0xff]
    %v1433 = vld [vmem:[#allocation10 + $0xd58] sm:$0xff]
    %v1434 = vld [vmem:[#allocation10 + $0xd60] sm:$0xff]
    %v1435 = vld [vmem:[#allocation10 + $0xd68] sm:$0xff]
    %v1436 = vld [vmem:[#allocation10 + $0xd70] sm:$0xff]
    %v1437 = vld [vmem:[#allocation10 + $0xd78] sm:$0xff]
    %v1438 = vld [vmem:[#allocation10 + $0xd80] sm:$0xff]
    %v1439 = vld [vmem:[#allocation10 + $0xd88] sm:$0xff]
    %v1440 = vld [vmem:[#allocation10 + $0xd90] sm:$0xff]
    %v1441 = vld [vmem:[#allocation10 + $0xd98] sm:$0xff]
    %v1442 = vld [vmem:[#allocation10 + $0xda0] sm:$0xff]
    %v1443 = vld [vmem:[#allocation10 + $0xda8] sm:$0xff]
    %v1444 = vld [vmem:[#allocation10 + $0xdb0] sm:$0xff]
    %v1445 = vld [vmem:[#allocation10 + $0xdb8] sm:$0xff]
    %v1446 = vld [vmem:[#allocation10 + $0xdc0] sm:$0xff]
    %v1447 = vld [vmem:[#allocation10 + $0xdc8] sm:$0xff]
    %v1448 = vld [vmem:[#allocation10 + $0xdd0] sm:$0xff]
    %v1449 = vld [vmem:[#allocation10 + $0xdd8] sm:$0xff]
    %v1450 = vld [vmem:[#allocation10 + $0xde0] sm:$0xff]
    %v1451 = vld [vmem:[#allocation10 + $0xde8] sm:$0xff]
    %v1452 = vld [vmem:[#allocation10 + $0xdf0] sm:$0xff]
    %v1453 = vld [vmem:[#allocation10 + $0xdf8] sm:$0xff]
    %v1454 = vld [vmem:[#allocation10 + $0xe00] sm:$0xff]
    %v1455 = vld [vmem:[#allocation10 + $0xe08] sm:$0xff]
    %v1456 = vld [vmem:[#allocation10 + $0xe10] sm:$0xff]
    %v1457 = vld [vmem:[#allocation10 + $0xe18] sm:$0xff]
    %v1458 = vld [vmem:[#allocation10 + $0xe20] sm:$0xff]
    %v1459 = vld [vmem:[#allocation10 + $0xe28] sm:$0xff]
    %v1460 = vld [vmem:[#allocation10 + $0xe30] sm:$0xff]
    %v1461 = vld [vmem:[#allocation10 + $0xe38] sm:$0xff]
    %v1462 = vld [vmem:[#allocation10 + $0xe40] sm:$0xff]
    %v1463 = vld [vmem:[#allocation10 + $0xe48] sm:$0xff]
    %v1464 = vld [vmem:[#allocation10 + $0xe50] sm:$0xff]
    %v1465 = vld [vmem:[#allocation10 + $0xe58] sm:$0xff]
    %v1466 = vld [vmem:[#allocation10 + $0xe60] sm:$0xff]
    %v1467 = vld [vmem:[#allocation10 + $0xe68] sm:$0xff]
    %v1468 = vld [vmem:[#allocation10 + $0xe70] sm:$0xff]
    %v1469 = vld [vmem:[#allocation10 + $0xe78] sm:$0xff]
    %v1470 = vld [vmem:[#allocation10 + $0xe80] sm:$0xff]
    %v1471 = vld [vmem:[#allocation10 + $0xe88] sm:$0xff]
    %v1472 = vld [vmem:[#allocation10 + $0xe90] sm:$0xff]
    %v1473 = vld [vmem:[#allocation10 + $0xe98] sm:$0xff]
    %v1474 = vld [vmem:[#allocation10 + $0xea0] sm:$0xff]
    %v1475 = vld [vmem:[#allocation10 + $0xea8] sm:$0xff]
    %v1476 = vld [vmem:[#allocation10 + $0xeb0] sm:$0xff]
    %v1477 = vld [vmem:[#allocation10 + $0xeb8] sm:$0xff]
    %v1478 = vld [vmem:[#allocation10 + $0xec0] sm:$0xff]
    %v1479 = vld [vmem:[#allocation10 + $0xec8] sm:$0xff]
    %v1480 = vld [vmem:[#allocation10 + $0xed0] sm:$0xff]
    %v1481 = vld [vmem:[#allocation10 + $0xed8] sm:$0xff]
    %v1482 = vld [vmem:[#allocation10 + $0xee0] sm:$0xff]
    %v1483 = vld [vmem:[#allocation10 + $0xee8] sm:$0xff]
    %v1484 = vld [vmem:[#allocation10 + $0xef0] sm:$0xff]
    %v1485 = vld [vmem:[#allocation10 + $0xef8] sm:$0xff]
    %v1486 = vld [vmem:[#allocation10 + $0xf00] sm:$0xff]
    %v1487 = vld [vmem:[#allocation10 + $0xf08] sm:$0xff]
    %v1488 = vld [vmem:[#allocation10 + $0xf10] sm:$0xff]
    %v1489 = vld [vmem:[#allocation10 + $0xf18] sm:$0xff]
    %v1490 = vld [vmem:[#allocation10 + $0xf20] sm:$0xff]
    %v1491 = vld [vmem:[#allocation10 + $0xf28] sm:$0xff]
    %v1492 = vld [vmem:[#allocation10 + $0xf30] sm:$0xff]
    %v1493 = vld [vmem:[#allocation10 + $0xf38] sm:$0xff]
    %v1494 = vld [vmem:[#allocation10 + $0xf40] sm:$0xff]
    %v1495 = vld [vmem:[#allocation10 + $0xf48] sm:$0xff]
    %v1496 = vld [vmem:[#allocation10 + $0xf50] sm:$0xff]
    %v1497 = vld [vmem:[#allocation10 + $0xf58] sm:$0xff]
    %v1498 = vld [vmem:[#allocation10 + $0xf60] sm:$0xff]
    %v1499 = vld [vmem:[#allocation10 + $0xf68] sm:$0xff]
    %v1500 = vld [vmem:[#allocation10 + $0xf70] sm:$0xff]
    %v1501 = vld [vmem:[#allocation10 + $0xf78] sm:$0xff]
    %v1502 = vld [vmem:[#allocation10 + $0xf80] sm:$0xff]
    %v1503 = vld [vmem:[#allocation10 + $0xf88] sm:$0xff]
    %v1504 = vld [vmem:[#allocation10 + $0xf90] sm:$0xff]
    %v1505 = vld [vmem:[#allocation10 + $0xf98] sm:$0xff]
    %v1506 = vld [vmem:[#allocation10 + $0xfa0] sm:$0xff]
    %v1507 = vld [vmem:[#allocation10 + $0xfa8] sm:$0xff]
    %v1508 = vld [vmem:[#allocation10 + $0xfb0] sm:$0xff]
    %v1509 = vld [vmem:[#allocation10 + $0xfb8] sm:$0xff]
    %v1510 = vld [vmem:[#allocation10 + $0xfc0] sm:$0xff]
    %v1511 = vld [vmem:[#allocation10 + $0xfc8] sm:$0xff]
    %v1512 = vld [vmem:[#allocation10 + $0xfd0] sm:$0xff]
    %v1513 = vld [vmem:[#allocation10 + $0xfd8] sm:$0xff]
    %v1514 = vld [vmem:[#allocation10 + $0xfe0] sm:$0xff]
    %v1515 = vld [vmem:[#allocation10 + $0xfe8] sm:$0xff]
    %v1516 = vld [vmem:[#allocation10 + $0xff0] sm:$0xff]
    %v1517 = vld [vmem:[#allocation10 + $0xff8] sm:$0xff]
    %v1522 = vlaneseq
    %v1523 = vshrl.u32 %v1522, 7
    %v1524 = vsub.s32 0, %v1523
    %v1525 = vrot.slane %v171, %v1524
    %v1526 = vlaneseq
    %v1527 = vshrl.u32 %v1526, 7
    %v1528 = vsub.s32 4, %v1527
    %v1529 = vrot.slane %v171, %v1528
    %v1530 = vlaneseq
    %v1531 = vshrl.u32 %v1530, 7
    %v1532 = vsub.s32 0, %v1531
    %v1533 = vrot.slane %v172, %v1532
    %v1534 = vlaneseq
    %v1535 = vshrl.u32 %v1534, 7
    %v1536 = vsub.s32 4, %v1535
    %v1537 = vrot.slane %v172, %v1536
    %v1538 = vlaneseq
    %v1539 = vshrl.u32 %v1538, 7
    %v1540 = vsub.s32 0, %v1539
    %v1541 = vrot.slane %v173, %v1540
    %v1542 = vlaneseq
    %v1543 = vshrl.u32 %v1542, 7
    %v1544 = vsub.s32 4, %v1543
    %v1545 = vrot.slane %v173, %v1544
    %v1546 = vlaneseq
    %v1547 = vshrl.u32 %v1546, 7
    %v1548 = vsub.s32 0, %v1547
    %v1549 = vrot.slane %v174, %v1548
    %v1550 = vlaneseq
    %v1551 = vshrl.u32 %v1550, 7
    %v1552 = vsub.s32 4, %v1551
    %v1553 = vrot.slane %v174, %v1552
    %v1562 = vlaneseq
    %v1563 = vshrl.u32 %v1562, 7
    %v1564 = vsub.s32 0, %v1563
    %v1565 = vrot.slane %v1525, %v1564
    %v1566 = vlaneseq
    %v1567 = vshrl.u32 %v1566, 7
    %v1568 = vsub.s32 0, %v1567
    %v1569 = vrot.slane %v1529, %v1568
    %v1570 = vlaneseq
    %v1571 = vshrl.u32 %v1570, 7
    %v1572 = vsub.s32 0, %v1571
    %v1573 = vrot.slane %v1533, %v1572
    %v1574 = vlaneseq
    %v1575 = vshrl.u32 %v1574, 7
    %v1576 = vsub.s32 0, %v1575
    %v1577 = vrot.slane %v1537, %v1576
    %v1578 = vlaneseq
    %v1579 = vshrl.u32 %v1578, 7
    %v1580 = vsub.s32 0, %v1579
    %v1581 = vrot.slane %v1541, %v1580
    %v1582 = vlaneseq
    %v1583 = vshrl.u32 %v1582, 7
    %v1584 = vsub.s32 0, %v1583
    %v1585 = vrot.slane %v1545, %v1584
    %v1586 = vlaneseq
    %v1587 = vshrl.u32 %v1586, 7
    %v1588 = vsub.s32 0, %v1587
    %v1589 = vrot.slane %v1549, %v1588
    %v1590 = vlaneseq
    %v1591 = vshrl.u32 %v1590, 7
    %v1592 = vsub.s32 0, %v1591
    %v1593 = vrot.slane %v1553, %v1592
    %1594 = vmatprep.subr.mxu0 %v1007
    %1595 = vmatpush1.msra.mxu0 %v1006
    %1596 = vmatprep.subr.mxu0 %v1015
    %1597 = vmatpush1.msra.mxu0 %v1014
    %1598 = vmatprep.subr.mxu0 %v1023
    %1599 = vmatpush1.msra.mxu0 %v1022
    %1600 = vmatprep.subr.mxu0 %v1031
    %1601 = vmatpush1.msra.mxu0 %v1030
    %1602 = vmatprep.subr.mxu0 %v1039
    %1603 = vmatpush1.msra.mxu0 %v1038
    %1604 = vmatprep.subr.mxu0 %v1047
    %1605 = vmatpush1.msra.mxu0 %v1046
    %1606 = vmatprep.subr.mxu0 %v1055
    %1607 = vmatpush1.msra.mxu0 %v1054
    %1608 = vmatprep.subr.mxu0 %v1063
    %1609 = vmatpush1.msra.mxu0 %v1062
    %1610 = vmatprep.subr.mxu0 %v1071
    %1611 = vmatpush1.msra.mxu0 %v1070
    %1612 = vmatprep.subr.mxu0 %v1079
    %1613 = vmatpush1.msra.mxu0 %v1078
    %1614 = vmatprep.subr.mxu0 %v1087
    %1615 = vmatpush1.msra.mxu0 %v1086
    %1616 = vmatprep.subr.mxu0 %v1095
    %1617 = vmatpush1.msra.mxu0 %v1094
    %1618 = vmatprep.subr.mxu0 %v1103
    %1619 = vmatpush1.msra.mxu0 %v1102
    %1620 = vmatprep.subr.mxu0 %v1111
    %1621 = vmatpush1.msra.mxu0 %v1110
    %1622 = vmatprep.subr.mxu0 %v1119
    %1623 = vmatpush1.msra.mxu0 %v1118
    %1624 = vmatprep.subr.mxu0 %v1127
    %1625 = vmatpush1.msra.mxu0 %v1126
    %1626 = vmatprep.subr.mxu0 %v1135
    %1627 = vmatpush1.msra.mxu0 %v1134
    %1628 = vmatprep.subr.mxu0 %v1143
    %1629 = vmatpush1.msra.mxu0 %v1142
    %1630 = vmatprep.subr.mxu0 %v1151
    %1631 = vmatpush1.msra.mxu0 %v1150
    %1632 = vmatprep.subr.mxu0 %v1159
    %1633 = vmatpush1.msra.mxu0 %v1158
    %1634 = vmatprep.subr.mxu0 %v1167
    %1635 = vmatpush1.msra.mxu0 %v1166
    %1636 = vmatprep.subr.mxu0 %v1175
    %1637 = vmatpush1.msra.mxu0 %v1174
    %1638 = vmatprep.subr.mxu0 %v1183
    %1639 = vmatpush1.msra.mxu0 %v1182
    %1640 = vmatprep.subr.mxu0 %v1191
    %1641 = vmatpush1.msra.mxu0 %v1190
    %1642 = vmatprep.subr.mxu0 %v1199
    %1643 = vmatpush1.msra.mxu0 %v1198
    %1644 = vmatprep.subr.mxu0 %v1207
    %1645 = vmatpush1.msra.mxu0 %v1206
    %1646 = vmatprep.subr.mxu0 %v1215
    %1647 = vmatpush1.msra.mxu0 %v1214
    %1648 = vmatprep.subr.mxu0 %v1223
    %1649 = vmatpush1.msra.mxu0 %v1222
    %1650 = vmatprep.subr.mxu0 %v1231
    %1651 = vmatpush1.msra.mxu0 %v1230
    %1652 = vmatprep.subr.mxu0 %v1239
    %1653 = vmatpush1.msra.mxu0 %v1238
    %1654 = vmatprep.subr.mxu0 %v1247
    %1655 = vmatpush1.msra.mxu0 %v1246
    %1656 = vmatprep.subr.mxu0 %v1255
    %1657 = vmatpush1.msra.mxu0 %v1254
    %1658 = vmatprep.mubr.f32.mxu0 %v160
    %1659 = vmatmul.mubr.f32.gmra.mrb[0].mxu0 %v159
    %v1660 = vpop.f32.mrb[0].mxu0
    %v1661 = vadd.f32 %v1565, %v1660
    %v1662 = vpop.f32.mrb[0].mxu0
    %v1663 = vadd.f32 %v1569, %v1662
    %1664 = vmatprep.mubr.f32.mxu0 %v164
    %1665 = vmatmul.mubr.f32.gmra.mrb[0].mxu0 %v163
    %v1666 = vpop.f32.mrb[0].mxu0
    %v1667 = vadd.f32 %v1565, %v1666
    %v1668 = vpop.f32.mrb[0].mxu0
    %v1669 = vadd.f32 %v1569, %v1668
    %1670 = vdwg.mxu0
    %1671 = vmatprep.subr.mxu0 %v1263
    %1672 = vmatpush1.msra.mxu0 %v1262
    %1673 = vmatprep.subr.mxu0 %v1271
    %1674 = vmatpush1.msra.mxu0 %v1270
    %1675 = vmatprep.subr.mxu0 %v1279
    %1676 = vmatpush1.msra.mxu0 %v1278
    %1677 = vmatprep.subr.mxu0 %v1287
    %1678 = vmatpush1.msra.mxu0 %v1286
    %1679 = vmatprep.subr.mxu0 %v1295
    %1680 = vmatpush1.msra.mxu0 %v1294
    %1681 = vmatprep.subr.mxu0 %v1303
    %1682 = vmatpush1.msra.mxu0 %v1302
    %1683 = vmatprep.subr.mxu0 %v1311
    %1684 = vmatpush1.msra.mxu0 %v1310
    %1685 = vmatprep.subr.mxu0 %v1319
    %1686 = vmatpush1.msra.mxu0 %v1318
    %1687 = vmatprep.subr.mxu0 %v1327
    %1688 = vmatpush1.msra.mxu0 %v1326
    %1689 = vmatprep.subr.mxu0 %v1335
    %1690 = vmatpush1.msra.mxu0 %v1334
    %1691 = vmatprep.subr.mxu0 %v1343
    %1692 = vmatpush1.msra.mxu0 %v1342
    %1693 = vmatprep.subr.mxu0 %v1351
    %1694 = vmatpush1.msra.mxu0 %v1350
    %1695 = vmatprep.subr.mxu0 %v1359
    %1696 = vmatpush1.msra.mxu0 %v1358
    %1697 = vmatprep.subr.mxu0 %v1367
    %1698 = vmatpush1.msra.mxu0 %v1366
    %1699 = vmatprep.subr.mxu0 %v1375
    %1700 = vmatpush1.msra.mxu0 %v1374
    %1701 = vmatprep.subr.mxu0 %v1383
    %1702 = vmatpush1.msra.mxu0 %v1382
    %1703 = vmatprep.subr.mxu0 %v1391
    %1704 = vmatpush1.msra.mxu0 %v1390
    %1705 = vmatprep.subr.mxu0 %v1399
    %1706 = vmatpush1.msra.mxu0 %v1398
    %1707 = vmatprep.subr.mxu0 %v1407
    %1708 = vmatpush1.msra.mxu0 %v1406
    %1709 = vmatprep.subr.mxu0 %v1415
    %1710 = vmatpush1.msra.mxu0 %v1414
    %1711 = vmatprep.subr.mxu0 %v1423
    %1712 = vmatpush1.msra.mxu0 %v1422
    %1713 = vmatprep.subr.mxu0 %v1431
    %1714 = vmatpush1.msra.mxu0 %v1430
    %1715 = vmatprep.subr.mxu0 %v1439
    %1716 = vmatpush1.msra.mxu0 %v1438
    %1717 = vmatprep.subr.mxu0 %v1447
    %1718 = vmatpush1.msra.mxu0 %v1446
    %1719 = vmatprep.subr.mxu0 %v1455
    %1720 = vmatpush1.msra.mxu0 %v1454
    %1721 = vmatprep.subr.mxu0 %v1463
    %1722 = vmatpush1.msra.mxu0 %v1462
    %1723 = vmatprep.subr.mxu0 %v1471
    %1724 = vmatpush1.msra.mxu0 %v1470
    %1725 = vmatprep.subr.mxu0 %v1479
    %1726 = vmatpush1.msra.mxu0 %v1478
    %1727 = vmatprep.subr.mxu0 %v1487
    %1728 = vmatpush1.msra.mxu0 %v1486
    %1729 = vmatprep.subr.mxu0 %v1495
    %1730 = vmatpush1.msra.mxu0 %v1494
    %1731 = vmatprep.subr.mxu0 %v1503
    %1732 = vmatpush1.msra.mxu0 %v1502
    %1733 = vmatprep.subr.mxu0 %v1511
    %1734 = vmatpush1.msra.mxu0 %v1510
    %1735 = vmatprep.mubr.f32.mxu0 %v162
    %1736 = vmatmul.mubr.f32.gmra.mrb[0].mxu0 %v161
    %v1737 = vpop.f32.mrb[0].mxu0
    %v1738 = vadd.f32 %v1661, %v1737
    %v1739 = vpop.f32.mrb[0].mxu0
    %v1740 = vadd.f32 %v1663, %v1739
    %1741 = vmatprep.mubr.f32.mxu0 %v166
    %1742 = vmatmul.mubr.f32.gmra.mrb[0].mxu0 %v165
    %v1743 = vpop.f32.mrb[0].mxu0
    %v1744 = vadd.f32 %v1667, %v1743
    %v1745 = vpop.f32.mrb[0].mxu0
    %v1746 = vadd.f32 %v1669, %v1745
    %1747 = vdwg.mxu0
    %1748 = vmatprep.subr.mxu0 %v1009
    %1749 = vmatpush1.msra.mxu0 %v1008
    %1750 = vmatprep.subr.mxu0 %v1017
    %1751 = vmatpush1.msra.mxu0 %v1016
    %1752 = vmatprep.subr.mxu0 %v1025
    %1753 = vmatpush1.msra.mxu0 %v1024
    %1754 = vmatprep.subr.mxu0 %v1033
    %1755 = vmatpush1.msra.mxu0 %v1032
    %1756 = vmatprep.subr.mxu0 %v1041
    %1757 = vmatpush1.msra.mxu0 %v1040
    %1758 = vmatprep.subr.mxu0 %v1049
    %1759 = vmatpush1.msra.mxu0 %v1048
    %1760 = vmatprep.subr.mxu0 %v1057
    %1761 = vmatpush1.msra.mxu0 %v1056
    %1762 = vmatprep.subr.mxu0 %v1065
    %1763 = vmatpush1.msra.mxu0 %v1064
    %1764 = vmatprep.subr.mxu0 %v1073
    %1765 = vmatpush1.msra.mxu0 %v1072
    %1766 = vmatprep.subr.mxu0 %v1081
    %1767 = vmatpush1.msra.mxu0 %v1080
    %1768 = vmatprep.subr.mxu0 %v1089
    %1769 = vmatpush1.msra.mxu0 %v1088
    %1770 = vmatprep.subr.mxu0 %v1097
    %1771 = vmatpush1.msra.mxu0 %v1096
    %1772 = vmatprep.subr.mxu0 %v1105
    %1773 = vmatpush1.msra.mxu0 %v1104
    %1774 = vmatprep.subr.mxu0 %v1113
    %1775 = vmatpush1.msra.mxu0 %v1112
    %1776 = vmatprep.subr.mxu0 %v1121
    %1777 = vmatpush1.msra.mxu0 %v1120
    %1778 = vmatprep.subr.mxu0 %v1129
    %1779 = vmatpush1.msra.mxu0 %v1128
    %1780 = vmatprep.subr.mxu0 %v1137
    %1781 = vmatpush1.msra.mxu0 %v1136
    %1782 = vmatprep.subr.mxu0 %v1145
    %1783 = vmatpush1.msra.mxu0 %v1144
    %1784 = vmatprep.subr.mxu0 %v1153
    %1785 = vmatpush1.msra.mxu0 %v1152
    %1786 = vmatprep.subr.mxu0 %v1161
    %1787 = vmatpush1.msra.mxu0 %v1160
    %1788 = vmatprep.subr.mxu0 %v1169
    %1789 = vmatpush1.msra.mxu0 %v1168
    %1790 = vmatprep.subr.mxu0 %v1177
    %1791 = vmatpush1.msra.mxu0 %v1176
    %1792 = vmatprep.subr.mxu0 %v1185
    %1793 = vmatpush1.msra.mxu0 %v1184
    %1794 = vmatprep.subr.mxu0 %v1193
    %1795 = vmatpush1.msra.mxu0 %v1192
    %1796 = vmatprep.subr.mxu0 %v1201
    %1797 = vmatpush1.msra.mxu0 %v1200
    %1798 = vmatprep.subr.mxu0 %v1209
    %1799 = vmatpush1.msra.mxu0 %v1208
    %1800 = vmatprep.subr.mxu0 %v1217
    %1801 = vmatpush1.msra.mxu0 %v1216
    %1802 = vmatprep.subr.mxu0 %v1225
    %1803 = vmatpush1.msra.mxu0 %v1224
    %1804 = vmatprep.subr.mxu0 %v1233
    %1805 = vmatpush1.msra.mxu0 %v1232
    %1806 = vmatprep.subr.mxu0 %v1241
    %1807 = vmatpush1.msra.mxu0 %v1240
    %1808 = vmatprep.subr.mxu0 %v1249
    %1809 = vmatpush1.msra.mxu0 %v1248
    %1810 = vmatprep.subr.mxu0 %v1257
    %1811 = vmatpush1.msra.mxu0 %v1256
    %1812 = vmatprep.mubr.f32.mxu0 %v160
    %1813 = vmatmul.mubr.f32.gmra.mrb[0].mxu0 %v159
    %v1814 = vpop.f32.mrb[0].mxu0
    %v1815 = vadd.f32 %v1573, %v1814
    %v1816 = vpop.f32.mrb[0].mxu0
    %v1817 = vadd.f32 %v1577, %v1816
    %1818 = vmatprep.mubr.f32.mxu0 %v164
    %1819 = vmatmul.mubr.f32.gmra.mrb[0].mxu0 %v163
    %v1820 = vpop.f32.mrb[0].mxu0
    %v1821 = vadd.f32 %v1573, %v1820
    %v1822 = vpop.f32.mrb[0].mxu0
    %v1823 = vadd.f32 %v1577, %v1822
    %1824 = vdwg.mxu0
    %1825 = vmatprep.subr.mxu0 %v1265
    %1826 = vmatpush1.msra.mxu0 %v1264
    %1827 = vmatprep.subr.mxu0 %v1273
    %1828 = vmatpush1.msra.mxu0 %v1272
    %1829 = vmatprep.subr.mxu0 %v1281
    %1830 = vmatpush1.msra.mxu0 %v1280
    %1831 = vmatprep.subr.mxu0 %v1289
    %1832 = vmatpush1.msra.mxu0 %v1288
    %1833 = vmatprep.subr.mxu0 %v1297
    %1834 = vmatpush1.msra.mxu0 %v1296
    %1835 = vmatprep.subr.mxu0 %v1305
    %1836 = vmatpush1.msra.mxu0 %v1304
    %1837 = vmatprep.subr.mxu0 %v1313
    %1838 = vmatpush1.msra.mxu0 %v1312
    %1839 = vmatprep.subr.mxu0 %v1321
    %1840 = vmatpush1.msra.mxu0 %v1320
    %1841 = vmatprep.subr.mxu0 %v1329
    %1842 = vmatpush1.msra.mxu0 %v1328
    %1843 = vmatprep.subr.mxu0 %v1337
    %1844 = vmatpush1.msra.mxu0 %v1336
    %1845 = vmatprep.subr.mxu0 %v1345
    %1846 = vmatpush1.msra.mxu0 %v1344
    %1847 = vmatprep.subr.mxu0 %v1353
    %1848 = vmatpush1.msra.mxu0 %v1352
    %1849 = vmatprep.subr.mxu0 %v1361
    %1850 = vmatpush1.msra.mxu0 %v1360
    %1851 = vmatprep.subr.mxu0 %v1369
    %1852 = vmatpush1.msra.mxu0 %v1368
    %1853 = vmatprep.subr.mxu0 %v1377
    %1854 = vmatpush1.msra.mxu0 %v1376
    %1855 = vmatprep.subr.mxu0 %v1385
    %1856 = vmatpush1.msra.mxu0 %v1384
    %1857 = vmatprep.subr.mxu0 %v1393
    %1858 = vmatpush1.msra.mxu0 %v1392
    %1859 = vmatprep.subr.mxu0 %v1401
    %1860 = vmatpush1.msra.mxu0 %v1400
    %1861 = vmatprep.subr.mxu0 %v1409
    %1862 = vmatpush1.msra.mxu0 %v1408
    %1863 = vmatprep.subr.mxu0 %v1417
    %1864 = vmatpush1.msra.mxu0 %v1416
    %1865 = vmatprep.subr.mxu0 %v1425
    %1866 = vmatpush1.msra.mxu0 %v1424
    %1867 = vmatprep.subr.mxu0 %v1433
    %1868 = vmatpush1.msra.mxu0 %v1432
    %1869 = vmatprep.subr.mxu0 %v1441
    %1870 = vmatpush1.msra.mxu0 %v1440
    %1871 = vmatprep.subr.mxu0 %v1449
    %1872 = vmatpush1.msra.mxu0 %v1448
    %1873 = vmatprep.subr.mxu0 %v1457
    %1874 = vmatpush1.msra.mxu0 %v1456
    %1875 = vmatprep.subr.mxu0 %v1465
    %1876 = vmatpush1.msra.mxu0 %v1464
    %1877 = vmatprep.subr.mxu0 %v1473
    %1878 = vmatpush1.msra.mxu0 %v1472
    %1879 = vmatprep.subr.mxu0 %v1481
    %1880 = vmatpush1.msra.mxu0 %v1480
    %1881 = vmatprep.subr.mxu0 %v1489
    %1882 = vmatpush1.msra.mxu0 %v1488
    %1883 = vmatprep.subr.mxu0 %v1497
    %1884 = vmatpush1.msra.mxu0 %v1496
    %1885 = vmatprep.subr.mxu0 %v1505
    %1886 = vmatpush1.msra.mxu0 %v1504
    %1887 = vmatprep.subr.mxu0 %v1513
    %1888 = vmatpush1.msra.mxu0 %v1512
    %1889 = vmatprep.mubr.f32.mxu0 %v162
    %1890 = vmatmul.mubr.f32.gmra.mrb[0].mxu0 %v161
    %v1891 = vpop.f32.mrb[0].mxu0
    %v1892 = vadd.f32 %v1815, %v1891
    %v1893 = vpop.f32.mrb[0].mxu0
    %v1894 = vadd.f32 %v1817, %v1893
    %1895 = vmatprep.mubr.f32.mxu0 %v166
    %1896 = vmatmul.mubr.f32.gmra.mrb[0].mxu0 %v165
    %v1897 = vpop.f32.mrb[0].mxu0
    %v1898 = vadd.f32 %v1821, %v1897
    %v1899 = vpop.f32.mrb[0].mxu0
    %v1900 = vadd.f32 %v1823, %v1899
    %1901 = vdwg.mxu0
    %1902 = vmatprep.subr.mxu0 %v1011
    %1903 = vmatpush1.msra.mxu0 %v1010
    %1904 = vmatprep.subr.mxu0 %v1019
    %1905 = vmatpush1.msra.mxu0 %v1018
    %1906 = vmatprep.subr.mxu0 %v1027
    %1907 = vmatpush1.msra.mxu0 %v1026
    %1908 = vmatprep.subr.mxu0 %v1035
    %1909 = vmatpush1.msra.mxu0 %v1034
    %1910 = vmatprep.subr.mxu0 %v1043
    %1911 = vmatpush1.msra.mxu0 %v1042
    %1912 = vmatprep.subr.mxu0 %v1051
    %1913 = vmatpush1.msra.mxu0 %v1050
    %1914 = vmatprep.subr.mxu0 %v1059
    %1915 = vmatpush1.msra.mxu0 %v1058
    %1916 = vmatprep.subr.mxu0 %v1067
    %1917 = vmatpush1.msra.mxu0 %v1066
    %1918 = vmatprep.subr.mxu0 %v1075
    %1919 = vmatpush1.msra.mxu0 %v1074
    %1920 = vmatprep.subr.mxu0 %v1083
    %1921 = vmatpush1.msra.mxu0 %v1082
    %1922 = vmatprep.subr.mxu0 %v1091
    %1923 = vmatpush1.msra.mxu0 %v1090
    %1924 = vmatprep.subr.mxu0 %v1099
    %1925 = vmatpush1.msra.mxu0 %v1098
    %1926 = vmatprep.subr.mxu0 %v1107
    %1927 = vmatpush1.msra.mxu0 %v1106
    %1928 = vmatprep.subr.mxu0 %v1115
    %1929 = vmatpush1.msra.mxu0 %v1114
    %1930 = vmatprep.subr.mxu0 %v1123
    %1931 = vmatpush1.msra.mxu0 %v1122
    %1932 = vmatprep.subr.mxu0 %v1131
    %1933 = vmatpush1.msra.mxu0 %v1130
    %1934 = vmatprep.subr.mxu0 %v1139
    %1935 = vmatpush1.msra.mxu0 %v1138
    %1936 = vmatprep.subr.mxu0 %v1147
    %1937 = vmatpush1.msra.mxu0 %v1146
    %1938 = vmatprep.subr.mxu0 %v1155
    %1939 = vmatpush1.msra.mxu0 %v1154
    %1940 = vmatprep.subr.mxu0 %v1163
    %1941 = vmatpush1.msra.mxu0 %v1162
    %1942 = vmatprep.subr.mxu0 %v1171
    %1943 = vmatpush1.msra.mxu0 %v1170
    %1944 = vmatprep.subr.mxu0 %v1179
    %1945 = vmatpush1.msra.mxu0 %v1178
    %1946 = vmatprep.subr.mxu0 %v1187
    %1947 = vmatpush1.msra.mxu0 %v1186
    %1948 = vmatprep.subr.mxu0 %v1195
    %1949 = vmatpush1.msra.mxu0 %v1194
    %1950 = vmatprep.subr.mxu0 %v1203
    %1951 = vmatpush1.msra.mxu0 %v1202
    %1952 = vmatprep.subr.mxu0 %v1211
    %1953 = vmatpush1.msra.mxu0 %v1210
    %1954 = vmatprep.subr.mxu0 %v1219
    %1955 = vmatpush1.msra.mxu0 %v1218
    %1956 = vmatprep.subr.mxu0 %v1227
    %1957 = vmatpush1.msra.mxu0 %v1226
    %1958 = vmatprep.subr.mxu0 %v1235
    %1959 = vmatpush1.msra.mxu0 %v1234
    %1960 = vmatprep.subr.mxu0 %v1243
    %1961 = vmatpush1.msra.mxu0 %v1242
    %1962 = vmatprep.subr.mxu0 %v1251
    %1963 = vmatpush1.msra.mxu0 %v1250
    %1964 = vmatprep.subr.mxu0 %v1259
    %1965 = vmatpush1.msra.mxu0 %v1258
    %1966 = vmatprep.mubr.f32.mxu0 %v160
    %1967 = vmatmul.mubr.f32.gmra.mrb[0].mxu0 %v159
    %v1968 = vpop.f32.mrb[0].mxu0
    %v1969 = vadd.f32 %v1581, %v1968
    %v1970 = vpop.f32.mrb[0].mxu0
    %v1971 = vadd.f32 %v1585, %v1970
    %1972 = vmatprep.mubr.f32.mxu0 %v164
    %1973 = vmatmul.mubr.f32.gmra.mrb[0].mxu0 %v163
    %v1974 = vpop.f32.mrb[0].mxu0
    %v1975 = vadd.f32 %v1581, %v1974
    %v1976 = vpop.f32.mrb[0].mxu0
    %v1977 = vadd.f32 %v1585, %v1976
    %1978 = vdwg.mxu0
    %1979 = vmatprep.subr.mxu0 %v1267
    %1980 = vmatpush1.msra.mxu0 %v1266
    %1981 = vmatprep.subr.mxu0 %v1275
    %1982 = vmatpush1.msra.mxu0 %v1274
    %1983 = vmatprep.subr.mxu0 %v1283
    %1984 = vmatpush1.msra.mxu0 %v1282
    %1985 = vmatprep.subr.mxu0 %v1291
    %1986 = vmatpush1.msra.mxu0 %v1290
    %1987 = vmatprep.subr.mxu0 %v1299
    %1988 = vmatpush1.msra.mxu0 %v1298
    %1989 = vmatprep.subr.mxu0 %v1307
    %1990 = vmatpush1.msra.mxu0 %v1306
    %1991 = vmatprep.subr.mxu0 %v1315
    %1992 = vmatpush1.msra.mxu0 %v1314
    %1993 = vmatprep.subr.mxu0 %v1323
    %1994 = vmatpush1.msra.mxu0 %v1322
    %1995 = vmatprep.subr.mxu0 %v1331
    %1996 = vmatpush1.msra.mxu0 %v1330
    %1997 = vmatprep.subr.mxu0 %v1339
    %1998 = vmatpush1.msra.mxu0 %v1338
    %1999 = vmatprep.subr.mxu0 %v1347
    %2000 = vmatpush1.msra.mxu0 %v1346
    %2001 = vmatprep.subr.mxu0 %v1355
    %2002 = vmatpush1.msra.mxu0 %v1354
    %2003 = vmatprep.subr.mxu0 %v1363
    %2004 = vmatpush1.msra.mxu0 %v1362
    %2005 = vmatprep.subr.mxu0 %v1371
    %2006 = vmatpush1.msra.mxu0 %v1370
    %2007 = vmatprep.subr.mxu0 %v1379
    %2008 = vmatpush1.msra.mxu0 %v1378
    %2009 = vmatprep.subr.mxu0 %v1387
    %2010 = vmatpush1.msra.mxu0 %v1386
    %2011 = vmatprep.subr.mxu0 %v1395
    %2012 = vmatpush1.msra.mxu0 %v1394
    %2013 = vmatprep.subr.mxu0 %v1403
    %2014 = vmatpush1.msra.mxu0 %v1402
    %2015 = vmatprep.subr.mxu0 %v1411
    %2016 = vmatpush1.msra.mxu0 %v1410
    %2017 = vmatprep.subr.mxu0 %v1419
    %2018 = vmatpush1.msra.mxu0 %v1418
    %2019 = vmatprep.subr.mxu0 %v1427
    %2020 = vmatpush1.msra.mxu0 %v1426
    %2021 = vmatprep.subr.mxu0 %v1435
    %2022 = vmatpush1.msra.mxu0 %v1434
    %2023 = vmatprep.subr.mxu0 %v1443
    %2024 = vmatpush1.msra.mxu0 %v1442
    %2025 = vmatprep.subr.mxu0 %v1451
    %2026 = vmatpush1.msra.mxu0 %v1450
    %2027 = vmatprep.subr.mxu0 %v1459
    %2028 = vmatpush1.msra.mxu0 %v1458
    %2029 = vmatprep.subr.mxu0 %v1467
    %2030 = vmatpush1.msra.mxu0 %v1466
    %2031 = vmatprep.subr.mxu0 %v1475
    %2032 = vmatpush1.msra.mxu0 %v1474
    %2033 = vmatprep.subr.mxu0 %v1483
    %2034 = vmatpush1.msra.mxu0 %v1482
    %2035 = vmatprep.subr.mxu0 %v1491
    %2036 = vmatpush1.msra.mxu0 %v1490
    %2037 = vmatprep.subr.mxu0 %v1499
    %2038 = vmatpush1.msra.mxu0 %v1498
    %2039 = vmatprep.subr.mxu0 %v1507
    %2040 = vmatpush1.msra.mxu0 %v1506
    %2041 = vmatprep.subr.mxu0 %v1515
    %2042 = vmatpush1.msra.mxu0 %v1514
    %2043 = vmatprep.mubr.f32.mxu0 %v162
    %2044 = vmatmul.mubr.f32.gmra.mrb[0].mxu0 %v161
    %v2045 = vpop.f32.mrb[0].mxu0
    %v2046 = vadd.f32 %v1969, %v2045
    %v2047 = vpop.f32.mrb[0].mxu0
    %v2048 = vadd.f32 %v1971, %v2047
    %2049 = vmatprep.mubr.f32.mxu0 %v166
    %2050 = vmatmul.mubr.f32.gmra.mrb[0].mxu0 %v165
    %v2051 = vpop.f32.mrb[0].mxu0
    %v2052 = vadd.f32 %v1975, %v2051
    %v2053 = vpop.f32.mrb[0].mxu0
    %v2054 = vadd.f32 %v1977, %v2053
    %2055 = vdwg.mxu0
    %2056 = vmatprep.subr.mxu0 %v1013
    %2057 = vmatpush1.msra.mxu0 %v1012
    %2058 = vmatprep.subr.mxu0 %v1021
    %2059 = vmatpush1.msra.mxu0 %v1020
    %2060 = vmatprep.subr.mxu0 %v1029
    %2061 = vmatpush1.msra.mxu0 %v1028
    %2062 = vmatprep.subr.mxu0 %v1037
    %2063 = vmatpush1.msra.mxu0 %v1036
    %2064 = vmatprep.subr.mxu0 %v1045
    %2065 = vmatpush1.msra.mxu0 %v1044
    %2066 = vmatprep.subr.mxu0 %v1053
    %2067 = vmatpush1.msra.mxu0 %v1052
    %2068 = vmatprep.subr.mxu0 %v1061
    %2069 = vmatpush1.msra.mxu0 %v1060
    %2070 = vmatprep.subr.mxu0 %v1069
    %2071 = vmatpush1.msra.mxu0 %v1068
    %2072 = vmatprep.subr.mxu0 %v1077
    %2073 = vmatpush1.msra.mxu0 %v1076
    %2074 = vmatprep.subr.mxu0 %v1085
    %2075 = vmatpush1.msra.mxu0 %v1084
    %2076 = vmatprep.subr.mxu0 %v1093
    %2077 = vmatpush1.msra.mxu0 %v1092
    %2078 = vmatprep.subr.mxu0 %v1101
    %2079 = vmatpush1.msra.mxu0 %v1100
    %2080 = vmatprep.subr.mxu0 %v1109
    %2081 = vmatpush1.msra.mxu0 %v1108
    %2082 = vmatprep.subr.mxu0 %v1117
    %2083 = vmatpush1.msra.mxu0 %v1116
    %2084 = vmatprep.subr.mxu0 %v1125
    %2085 = vmatpush1.msra.mxu0 %v1124
    %2086 = vmatprep.subr.mxu0 %v1133
    %2087 = vmatpush1.msra.mxu0 %v1132
    %2088 = vmatprep.subr.mxu0 %v1141
    %2089 = vmatpush1.msra.mxu0 %v1140
    %2090 = vmatprep.subr.mxu0 %v1149
    %2091 = vmatpush1.msra.mxu0 %v1148
    %2092 = vmatprep.subr.mxu0 %v1157
    %2093 = vmatpush1.msra.mxu0 %v1156
    %2094 = vmatprep.subr.mxu0 %v1165
    %2095 = vmatpush1.msra.mxu0 %v1164
    %2096 = vmatprep.subr.mxu0 %v1173
    %2097 = vmatpush1.msra.mxu0 %v1172
    %2098 = vmatprep.subr.mxu0 %v1181
    %2099 = vmatpush1.msra.mxu0 %v1180
    %2100 = vmatprep.subr.mxu0 %v1189
    %2101 = vmatpush1.msra.mxu0 %v1188
    %2102 = vmatprep.subr.mxu0 %v1197
    %2103 = vmatpush1.msra.mxu0 %v1196
    %2104 = vmatprep.subr.mxu0 %v1205
    %2105 = vmatpush1.msra.mxu0 %v1204
    %2106 = vmatprep.subr.mxu0 %v1213
    %2107 = vmatpush1.msra.mxu0 %v1212
    %2108 = vmatprep.subr.mxu0 %v1221
    %2109 = vmatpush1.msra.mxu0 %v1220
    %2110 = vmatprep.subr.mxu0 %v1229
    %2111 = vmatpush1.msra.mxu0 %v1228
    %2112 = vmatprep.subr.mxu0 %v1237
    %2113 = vmatpush1.msra.mxu0 %v1236
    %2114 = vmatprep.subr.mxu0 %v1245
    %2115 = vmatpush1.msra.mxu0 %v1244
    %2116 = vmatprep.subr.mxu0 %v1253
    %2117 = vmatpush1.msra.mxu0 %v1252
    %2118 = vmatprep.subr.mxu0 %v1261
    %2119 = vmatpush1.msra.mxu0 %v1260
    %2120 = vmatprep.mubr.f32.mxu0 %v160
    %2121 = vmatmul.mubr.f32.gmra.mrb[0].mxu0 %v159
    %v2122 = vpop.f32.mrb[0].mxu0
    %v2123 = vadd.f32 %v1589, %v2122
    %v2124 = vpop.f32.mrb[0].mxu0
    %v2125 = vadd.f32 %v1593, %v2124
    %2126 = vmatprep.mubr.f32.mxu0 %v164
    %2127 = vmatmul.mubr.f32.gmra.mrb[0].mxu0 %v163
    %v2128 = vpop.f32.mrb[0].mxu0
    %v2129 = vadd.f32 %v1589, %v2128
    %v2130 = vpop.f32.mrb[0].mxu0
    %v2131 = vadd.f32 %v1593, %v2130
    %2132 = vdwg.mxu0
    %2133 = vmatprep.subr.mxu0 %v1269
    %2134 = vmatpush1.msra.mxu0 %v1268
    %2135 = vmatprep.subr.mxu0 %v1277
    %2136 = vmatpush1.msra.mxu0 %v1276
    %2137 = vmatprep.subr.mxu0 %v1285
    %2138 = vmatpush1.msra.mxu0 %v1284
    %2139 = vmatprep.subr.mxu0 %v1293
    %2140 = vmatpush1.msra.mxu0 %v1292
    %2141 = vmatprep.subr.mxu0 %v1301
    %2142 = vmatpush1.msra.mxu0 %v1300
    %2143 = vmatprep.subr.mxu0 %v1309
    %2144 = vmatpush1.msra.mxu0 %v1308
    %2145 = vmatprep.subr.mxu0 %v1317
    %2146 = vmatpush1.msra.mxu0 %v1316
    %2147 = vmatprep.subr.mxu0 %v1325
    %2148 = vmatpush1.msra.mxu0 %v1324
    %2149 = vmatprep.subr.mxu0 %v1333
    %2150 = vmatpush1.msra.mxu0 %v1332
    %2151 = vmatprep.subr.mxu0 %v1341
    %2152 = vmatpush1.msra.mxu0 %v1340
    %2153 = vmatprep.subr.mxu0 %v1349
    %2154 = vmatpush1.msra.mxu0 %v1348
    %2155 = vmatprep.subr.mxu0 %v1357
    %2156 = vmatpush1.msra.mxu0 %v1356
    %2157 = vmatprep.subr.mxu0 %v1365
    %2158 = vmatpush1.msra.mxu0 %v1364
    %2159 = vmatprep.subr.mxu0 %v1373
    %2160 = vmatpush1.msra.mxu0 %v1372
    %2161 = vmatprep.subr.mxu0 %v1381
    %2162 = vmatpush1.msra.mxu0 %v1380
    %2163 = vmatprep.subr.mxu0 %v1389
    %2164 = vmatpush1.msra.mxu0 %v1388
    %2165 = vmatprep.subr.mxu0 %v1397
    %2166 = vmatpush1.msra.mxu0 %v1396
    %2167 = vmatprep.subr.mxu0 %v1405
    %2168 = vmatpush1.msra.mxu0 %v1404
    %2169 = vmatprep.subr.mxu0 %v1413
    %2170 = vmatpush1.msra.mxu0 %v1412
    %2171 = vmatprep.subr.mxu0 %v1421
    %2172 = vmatpush1.msra.mxu0 %v1420
    %2173 = vmatprep.subr.mxu0 %v1429
    %2174 = vmatpush1.msra.mxu0 %v1428
    %2175 = vmatprep.subr.mxu0 %v1437
    %2176 = vmatpush1.msra.mxu0 %v1436
    %2177 = vmatprep.subr.mxu0 %v1445
    %2178 = vmatpush1.msra.mxu0 %v1444
    %2179 = vmatprep.subr.mxu0 %v1453
    %2180 = vmatpush1.msra.mxu0 %v1452
    %2181 = vmatprep.subr.mxu0 %v1461
    %2182 = vmatpush1.msra.mxu0 %v1460
    %2183 = vmatprep.subr.mxu0 %v1469
    %2184 = vmatpush1.msra.mxu0 %v1468
    %2185 = vmatprep.subr.mxu0 %v1477
    %2186 = vmatpush1.msra.mxu0 %v1476
    %2187 = vmatprep.subr.mxu0 %v1485
    %2188 = vmatpush1.msra.mxu0 %v1484
    %2189 = vmatprep.subr.mxu0 %v1493
    %2190 = vmatpush1.msra.mxu0 %v1492
    %2191 = vmatprep.subr.mxu0 %v1501
    %2192 = vmatpush1.msra.mxu0 %v1500
    %2193 = vmatprep.subr.mxu0 %v1509
    %2194 = vmatpush1.msra.mxu0 %v1508
    %2195 = vmatprep.subr.mxu0 %v1517
    %2196 = vmatpush1.msra.mxu0 %v1516
    %2197 = vmatprep.mubr.f32.mxu0 %v162
    %2198 = vmatmul.mubr.f32.gmra.mrb[0].mxu0 %v161
    %v2199 = vpop.f32.mrb[0].mxu0
    %v2200 = vadd.f32 %v2123, %v2199
    %v2201 = vpop.f32.mrb[0].mxu0
    %v2202 = vadd.f32 %v2125, %v2201
    %2203 = vmatprep.mubr.f32.mxu0 %v166
    %2204 = vmatmul.mubr.f32.gmra.mrb[0].mxu0 %v165
    %v2205 = vpop.f32.mrb[0].mxu0
    %v2206 = vadd.f32 %v2129, %v2205
    %v2207 = vpop.f32.mrb[0].mxu0
    %v2208 = vadd.f32 %v2131, %v2207
    %2209 = vdwg.mxu0
    %v2210 = vld [vmem:[#allocation11] sm:$0xff]
    %v2211 = vld [vmem:[#allocation11 + $0x8] sm:$0xff]
    %v2212 = vld [vmem:[#allocation11 + $0x10] sm:$0xff]
    %v2213 = vld [vmem:[#allocation11 + $0x18] sm:$0xff]
    %v2214 = vld [vmem:[#allocation11 + $0x20] sm:$0xff]
    %v2215 = vld [vmem:[#allocation11 + $0x28] sm:$0xff]
    %v2216 = vld [vmem:[#allocation11 + $0x30] sm:$0xff]
    %v2217 = vld [vmem:[#allocation11 + $0x38] sm:$0xff]
    %v2218 = vld [vmem:[#allocation11 + $0x40] sm:$0xff]
    %v2219 = vld [vmem:[#allocation11 + $0x48] sm:$0xff]
    %v2220 = vld [vmem:[#allocation11 + $0x50] sm:$0xff]
    %v2221 = vld [vmem:[#allocation11 + $0x58] sm:$0xff]
    %v2222 = vld [vmem:[#allocation11 + $0x60] sm:$0xff]
    %v2223 = vld [vmem:[#allocation11 + $0x68] sm:$0xff]
    %v2224 = vld [vmem:[#allocation11 + $0x70] sm:$0xff]
    %v2225 = vld [vmem:[#allocation11 + $0x78] sm:$0xff]
    %v2226 = vld [vmem:[#allocation11 + $0x80] sm:$0xff]
    %v2227 = vld [vmem:[#allocation11 + $0x88] sm:$0xff]
    %v2228 = vld [vmem:[#allocation11 + $0x90] sm:$0xff]
    %v2229 = vld [vmem:[#allocation11 + $0x98] sm:$0xff]
    %v2230 = vld [vmem:[#allocation11 + $0xa0] sm:$0xff]
    %v2231 = vld [vmem:[#allocation11 + $0xa8] sm:$0xff]
    %v2232 = vld [vmem:[#allocation11 + $0xb0] sm:$0xff]
    %v2233 = vld [vmem:[#allocation11 + $0xb8] sm:$0xff]
    %v2234 = vld [vmem:[#allocation11 + $0xc0] sm:$0xff]
    %v2235 = vld [vmem:[#allocation11 + $0xc8] sm:$0xff]
    %v2236 = vld [vmem:[#allocation11 + $0xd0] sm:$0xff]
    %v2237 = vld [vmem:[#allocation11 + $0xd8] sm:$0xff]
    %v2238 = vld [vmem:[#allocation11 + $0xe0] sm:$0xff]
    %v2239 = vld [vmem:[#allocation11 + $0xe8] sm:$0xff]
    %v2240 = vld [vmem:[#allocation11 + $0xf0] sm:$0xff]
    %v2241 = vld [vmem:[#allocation11 + $0xf8] sm:$0xff]
    %v2242 = vld [vmem:[#allocation11 + $0x100] sm:$0xff]
    %v2243 = vld [vmem:[#allocation11 + $0x108] sm:$0xff]
    %v2244 = vld [vmem:[#allocation11 + $0x110] sm:$0xff]
    %v2245 = vld [vmem:[#allocation11 + $0x118] sm:$0xff]
    %v2246 = vld [vmem:[#allocation11 + $0x120] sm:$0xff]
    %v2247 = vld [vmem:[#allocation11 + $0x128] sm:$0xff]
    %v2248 = vld [vmem:[#allocation11 + $0x130] sm:$0xff]
    %v2249 = vld [vmem:[#allocation11 + $0x138] sm:$0xff]
    %v2250 = vld [vmem:[#allocation11 + $0x140] sm:$0xff]
    %v2251 = vld [vmem:[#allocation11 + $0x148] sm:$0xff]
    %v2252 = vld [vmem:[#allocation11 + $0x150] sm:$0xff]
    %v2253 = vld [vmem:[#allocation11 + $0x158] sm:$0xff]
    %v2254 = vld [vmem:[#allocation11 + $0x160] sm:$0xff]
    %v2255 = vld [vmem:[#allocation11 + $0x168] sm:$0xff]
    %v2256 = vld [vmem:[#allocation11 + $0x170] sm:$0xff]
    %v2257 = vld [vmem:[#allocation11 + $0x178] sm:$0xff]
    %v2258 = vld [vmem:[#allocation11 + $0x180] sm:$0xff]
    %v2259 = vld [vmem:[#allocation11 + $0x188] sm:$0xff]
    %v2260 = vld [vmem:[#allocation11 + $0x190] sm:$0xff]
    %v2261 = vld [vmem:[#allocation11 + $0x198] sm:$0xff]
    %v2262 = vld [vmem:[#allocation11 + $0x1a0] sm:$0xff]
    %v2263 = vld [vmem:[#allocation11 + $0x1a8] sm:$0xff]
    %v2264 = vld [vmem:[#allocation11 + $0x1b0] sm:$0xff]
    %v2265 = vld [vmem:[#allocation11 + $0x1b8] sm:$0xff]
    %v2266 = vld [vmem:[#allocation11 + $0x1c0] sm:$0xff]
    %v2267 = vld [vmem:[#allocation11 + $0x1c8] sm:$0xff]
    %v2268 = vld [vmem:[#allocation11 + $0x1d0] sm:$0xff]
    %v2269 = vld [vmem:[#allocation11 + $0x1d8] sm:$0xff]
    %v2270 = vld [vmem:[#allocation11 + $0x1e0] sm:$0xff]
    %v2271 = vld [vmem:[#allocation11 + $0x1e8] sm:$0xff]
    %v2272 = vld [vmem:[#allocation11 + $0x1f0] sm:$0xff]
    %v2273 = vld [vmem:[#allocation11 + $0x1f8] sm:$0xff]
    %v2274 = vld [vmem:[#allocation11 + $0x200] sm:$0xff]
    %v2275 = vld [vmem:[#allocation11 + $0x208] sm:$0xff]
    %v2276 = vld [vmem:[#allocation11 + $0x210] sm:$0xff]
    %v2277 = vld [vmem:[#allocation11 + $0x218] sm:$0xff]
    %v2278 = vld [vmem:[#allocation11 + $0x220] sm:$0xff]
    %v2279 = vld [vmem:[#allocation11 + $0x228] sm:$0xff]
    %v2280 = vld [vmem:[#allocation11 + $0x230] sm:$0xff]
    %v2281 = vld [vmem:[#allocation11 + $0x238] sm:$0xff]
    %v2282 = vld [vmem:[#allocation11 + $0x240] sm:$0xff]
    %v2283 = vld [vmem:[#allocation11 + $0x248] sm:$0xff]
    %v2284 = vld [vmem:[#allocation11 + $0x250] sm:$0xff]
    %v2285 = vld [vmem:[#allocation11 + $0x258] sm:$0xff]
    %v2286 = vld [vmem:[#allocation11 + $0x260] sm:$0xff]
    %v2287 = vld [vmem:[#allocation11 + $0x268] sm:$0xff]
    %v2288 = vld [vmem:[#allocation11 + $0x270] sm:$0xff]
    %v2289 = vld [vmem:[#allocation11 + $0x278] sm:$0xff]
    %v2290 = vld [vmem:[#allocation11 + $0x280] sm:$0xff]
    %v2291 = vld [vmem:[#allocation11 + $0x288] sm:$0xff]
    %v2292 = vld [vmem:[#allocation11 + $0x290] sm:$0xff]
    %v2293 = vld [vmem:[#allocation11 + $0x298] sm:$0xff]
    %v2294 = vld [vmem:[#allocation11 + $0x2a0] sm:$0xff]
    %v2295 = vld [vmem:[#allocation11 + $0x2a8] sm:$0xff]
    %v2296 = vld [vmem:[#allocation11 + $0x2b0] sm:$0xff]
    %v2297 = vld [vmem:[#allocation11 + $0x2b8] sm:$0xff]
    %v2298 = vld [vmem:[#allocation11 + $0x2c0] sm:$0xff]
    %v2299 = vld [vmem:[#allocation11 + $0x2c8] sm:$0xff]
    %v2300 = vld [vmem:[#allocation11 + $0x2d0] sm:$0xff]
    %v2301 = vld [vmem:[#allocation11 + $0x2d8] sm:$0xff]
    %v2302 = vld [vmem:[#allocation11 + $0x2e0] sm:$0xff]
    %v2303 = vld [vmem:[#allocation11 + $0x2e8] sm:$0xff]
    %v2304 = vld [vmem:[#allocation11 + $0x2f0] sm:$0xff]
    %v2305 = vld [vmem:[#allocation11 + $0x2f8] sm:$0xff]
    %v2306 = vld [vmem:[#allocation11 + $0x300] sm:$0xff]
    %v2307 = vld [vmem:[#allocation11 + $0x308] sm:$0xff]
    %v2308 = vld [vmem:[#allocation11 + $0x310] sm:$0xff]
    %v2309 = vld [vmem:[#allocation11 + $0x318] sm:$0xff]
    %v2310 = vld [vmem:[#allocation11 + $0x320] sm:$0xff]
    %v2311 = vld [vmem:[#allocation11 + $0x328] sm:$0xff]
    %v2312 = vld [vmem:[#allocation11 + $0x330] sm:$0xff]
    %v2313 = vld [vmem:[#allocation11 + $0x338] sm:$0xff]
    %v2314 = vld [vmem:[#allocation11 + $0x340] sm:$0xff]
    %v2315 = vld [vmem:[#allocation11 + $0x348] sm:$0xff]
    %v2316 = vld [vmem:[#allocation11 + $0x350] sm:$0xff]
    %v2317 = vld [vmem:[#allocation11 + $0x358] sm:$0xff]
    %v2318 = vld [vmem:[#allocation11 + $0x360] sm:$0xff]
    %v2319 = vld [vmem:[#allocation11 + $0x368] sm:$0xff]
    %v2320 = vld [vmem:[#allocation11 + $0x370] sm:$0xff]
    %v2321 = vld [vmem:[#allocation11 + $0x378] sm:$0xff]
    %v2322 = vld [vmem:[#allocation11 + $0x380] sm:$0xff]
    %v2323 = vld [vmem:[#allocation11 + $0x388] sm:$0xff]
    %v2324 = vld [vmem:[#allocation11 + $0x390] sm:$0xff]
    %v2325 = vld [vmem:[#allocation11 + $0x398] sm:$0xff]
    %v2326 = vld [vmem:[#allocation11 + $0x3a0] sm:$0xff]
    %v2327 = vld [vmem:[#allocation11 + $0x3a8] sm:$0xff]
    %v2328 = vld [vmem:[#allocation11 + $0x3b0] sm:$0xff]
    %v2329 = vld [vmem:[#allocation11 + $0x3b8] sm:$0xff]
    %v2330 = vld [vmem:[#allocation11 + $0x3c0] sm:$0xff]
    %v2331 = vld [vmem:[#allocation11 + $0x3c8] sm:$0xff]
    %v2332 = vld [vmem:[#allocation11 + $0x3d0] sm:$0xff]
    %v2333 = vld [vmem:[#allocation11 + $0x3d8] sm:$0xff]
    %v2334 = vld [vmem:[#allocation11 + $0x3e0] sm:$0xff]
    %v2335 = vld [vmem:[#allocation11 + $0x3e8] sm:$0xff]
    %v2336 = vld [vmem:[#allocation11 + $0x3f0] sm:$0xff]
    %v2337 = vld [vmem:[#allocation11 + $0x3f8] sm:$0xff]
    %v2338 = vld [vmem:[#allocation11 + $0x400] sm:$0xff]
    %v2339 = vld [vmem:[#allocation11 + $0x408] sm:$0xff]
    %v2340 = vld [vmem:[#allocation11 + $0x410] sm:$0xff]
    %v2341 = vld [vmem:[#allocation11 + $0x418] sm:$0xff]
    %v2342 = vld [vmem:[#allocation11 + $0x420] sm:$0xff]
    %v2343 = vld [vmem:[#allocation11 + $0x428] sm:$0xff]
    %v2344 = vld [vmem:[#allocation11 + $0x430] sm:$0xff]
    %v2345 = vld [vmem:[#allocation11 + $0x438] sm:$0xff]
    %v2346 = vld [vmem:[#allocation11 + $0x440] sm:$0xff]
    %v2347 = vld [vmem:[#allocation11 + $0x448] sm:$0xff]
    %v2348 = vld [vmem:[#allocation11 + $0x450] sm:$0xff]
    %v2349 = vld [vmem:[#allocation11 + $0x458] sm:$0xff]
    %v2350 = vld [vmem:[#allocation11 + $0x460] sm:$0xff]
    %v2351 = vld [vmem:[#allocation11 + $0x468] sm:$0xff]
    %v2352 = vld [vmem:[#allocation11 + $0x470] sm:$0xff]
    %v2353 = vld [vmem:[#allocation11 + $0x478] sm:$0xff]
    %v2354 = vld [vmem:[#allocation11 + $0x480] sm:$0xff]
    %v2355 = vld [vmem:[#allocation11 + $0x488] sm:$0xff]
    %v2356 = vld [vmem:[#allocation11 + $0x490] sm:$0xff]
    %v2357 = vld [vmem:[#allocation11 + $0x498] sm:$0xff]
    %v2358 = vld [vmem:[#allocation11 + $0x4a0] sm:$0xff]
    %v2359 = vld [vmem:[#allocation11 + $0x4a8] sm:$0xff]
    %v2360 = vld [vmem:[#allocation11 + $0x4b0] sm:$0xff]
    %v2361 = vld [vmem:[#allocation11 + $0x4b8] sm:$0xff]
    %v2362 = vld [vmem:[#allocation11 + $0x4c0] sm:$0xff]
    %v2363 = vld [vmem:[#allocation11 + $0x4c8] sm:$0xff]
    %v2364 = vld [vmem:[#allocation11 + $0x4d0] sm:$0xff]
    %v2365 = vld [vmem:[#allocation11 + $0x4d8] sm:$0xff]
    %v2366 = vld [vmem:[#allocation11 + $0x4e0] sm:$0xff]
    %v2367 = vld [vmem:[#allocation11 + $0x4e8] sm:$0xff]
    %v2368 = vld [vmem:[#allocation11 + $0x4f0] sm:$0xff]
    %v2369 = vld [vmem:[#allocation11 + $0x4f8] sm:$0xff]
    %v2370 = vld [vmem:[#allocation11 + $0x500] sm:$0xff]
    %v2371 = vld [vmem:[#allocation11 + $0x508] sm:$0xff]
    %v2372 = vld [vmem:[#allocation11 + $0x510] sm:$0xff]
    %v2373 = vld [vmem:[#allocation11 + $0x518] sm:$0xff]
    %v2374 = vld [vmem:[#allocation11 + $0x520] sm:$0xff]
    %v2375 = vld [vmem:[#allocation11 + $0x528] sm:$0xff]
    %v2376 = vld [vmem:[#allocation11 + $0x530] sm:$0xff]
    %v2377 = vld [vmem:[#allocation11 + $0x538] sm:$0xff]
    %v2378 = vld [vmem:[#allocation11 + $0x540] sm:$0xff]
    %v2379 = vld [vmem:[#allocation11 + $0x548] sm:$0xff]
    %v2380 = vld [vmem:[#allocation11 + $0x550] sm:$0xff]
    %v2381 = vld [vmem:[#allocation11 + $0x558] sm:$0xff]
    %v2382 = vld [vmem:[#allocation11 + $0x560] sm:$0xff]
    %v2383 = vld [vmem:[#allocation11 + $0x568] sm:$0xff]
    %v2384 = vld [vmem:[#allocation11 + $0x570] sm:$0xff]
    %v2385 = vld [vmem:[#allocation11 + $0x578] sm:$0xff]
    %v2386 = vld [vmem:[#allocation11 + $0x580] sm:$0xff]
    %v2387 = vld [vmem:[#allocation11 + $0x588] sm:$0xff]
    %v2388 = vld [vmem:[#allocation11 + $0x590] sm:$0xff]
    %v2389 = vld [vmem:[#allocation11 + $0x598] sm:$0xff]
    %v2390 = vld [vmem:[#allocation11 + $0x5a0] sm:$0xff]
    %v2391 = vld [vmem:[#allocation11 + $0x5a8] sm:$0xff]
    %v2392 = vld [vmem:[#allocation11 + $0x5b0] sm:$0xff]
    %v2393 = vld [vmem:[#allocation11 + $0x5b8] sm:$0xff]
    %v2394 = vld [vmem:[#allocation11 + $0x5c0] sm:$0xff]
    %v2395 = vld [vmem:[#allocation11 + $0x5c8] sm:$0xff]
    %v2396 = vld [vmem:[#allocation11 + $0x5d0] sm:$0xff]
    %v2397 = vld [vmem:[#allocation11 + $0x5d8] sm:$0xff]
    %v2398 = vld [vmem:[#allocation11 + $0x5e0] sm:$0xff]
    %v2399 = vld [vmem:[#allocation11 + $0x5e8] sm:$0xff]
    %v2400 = vld [vmem:[#allocation11 + $0x5f0] sm:$0xff]
    %v2401 = vld [vmem:[#allocation11 + $0x5f8] sm:$0xff]
    %v2402 = vld [vmem:[#allocation11 + $0x600] sm:$0xff]
    %v2403 = vld [vmem:[#allocation11 + $0x608] sm:$0xff]
    %v2404 = vld [vmem:[#allocation11 + $0x610] sm:$0xff]
    %v2405 = vld [vmem:[#allocation11 + $0x618] sm:$0xff]
    %v2406 = vld [vmem:[#allocation11 + $0x620] sm:$0xff]
    %v2407 = vld [vmem:[#allocation11 + $0x628] sm:$0xff]
    %v2408 = vld [vmem:[#allocation11 + $0x630] sm:$0xff]
    %v2409 = vld [vmem:[#allocation11 + $0x638] sm:$0xff]
    %v2410 = vld [vmem:[#allocation11 + $0x640] sm:$0xff]
    %v2411 = vld [vmem:[#allocation11 + $0x648] sm:$0xff]
    %v2412 = vld [vmem:[#allocation11 + $0x650] sm:$0xff]
    %v2413 = vld [vmem:[#allocation11 + $0x658] sm:$0xff]
    %v2414 = vld [vmem:[#allocation11 + $0x660] sm:$0xff]
    %v2415 = vld [vmem:[#allocation11 + $0x668] sm:$0xff]
    %v2416 = vld [vmem:[#allocation11 + $0x670] sm:$0xff]
    %v2417 = vld [vmem:[#allocation11 + $0x678] sm:$0xff]
    %v2418 = vld [vmem:[#allocation11 + $0x680] sm:$0xff]
    %v2419 = vld [vmem:[#allocation11 + $0x688] sm:$0xff]
    %v2420 = vld [vmem:[#allocation11 + $0x690] sm:$0xff]
    %v2421 = vld [vmem:[#allocation11 + $0x698] sm:$0xff]
    %v2422 = vld [vmem:[#allocation11 + $0x6a0] sm:$0xff]
    %v2423 = vld [vmem:[#allocation11 + $0x6a8] sm:$0xff]
    %v2424 = vld [vmem:[#allocation11 + $0x6b0] sm:$0xff]
    %v2425 = vld [vmem:[#allocation11 + $0x6b8] sm:$0xff]
    %v2426 = vld [vmem:[#allocation11 + $0x6c0] sm:$0xff]
    %v2427 = vld [vmem:[#allocation11 + $0x6c8] sm:$0xff]
    %v2428 = vld [vmem:[#allocation11 + $0x6d0] sm:$0xff]
    %v2429 = vld [vmem:[#allocation11 + $0x6d8] sm:$0xff]
    %v2430 = vld [vmem:[#allocation11 + $0x6e0] sm:$0xff]
    %v2431 = vld [vmem:[#allocation11 + $0x6e8] sm:$0xff]
    %v2432 = vld [vmem:[#allocation11 + $0x6f0] sm:$0xff]
    %v2433 = vld [vmem:[#allocation11 + $0x6f8] sm:$0xff]
    %v2434 = vld [vmem:[#allocation11 + $0x700] sm:$0xff]
    %v2435 = vld [vmem:[#allocation11 + $0x708] sm:$0xff]
    %v2436 = vld [vmem:[#allocation11 + $0x710] sm:$0xff]
    %v2437 = vld [vmem:[#allocation11 + $0x718] sm:$0xff]
    %v2438 = vld [vmem:[#allocation11 + $0x720] sm:$0xff]
    %v2439 = vld [vmem:[#allocation11 + $0x728] sm:$0xff]
    %v2440 = vld [vmem:[#allocation11 + $0x730] sm:$0xff]
    %v2441 = vld [vmem:[#allocation11 + $0x738] sm:$0xff]
    %v2442 = vld [vmem:[#allocation11 + $0x740] sm:$0xff]
    %v2443 = vld [vmem:[#allocation11 + $0x748] sm:$0xff]
    %v2444 = vld [vmem:[#allocation11 + $0x750] sm:$0xff]
    %v2445 = vld [vmem:[#allocation11 + $0x758] sm:$0xff]
    %v2446 = vld [vmem:[#allocation11 + $0x760] sm:$0xff]
    %v2447 = vld [vmem:[#allocation11 + $0x768] sm:$0xff]
    %v2448 = vld [vmem:[#allocation11 + $0x770] sm:$0xff]
    %v2449 = vld [vmem:[#allocation11 + $0x778] sm:$0xff]
    %v2450 = vld [vmem:[#allocation11 + $0x780] sm:$0xff]
    %v2451 = vld [vmem:[#allocation11 + $0x788] sm:$0xff]
    %v2452 = vld [vmem:[#allocation11 + $0x790] sm:$0xff]
    %v2453 = vld [vmem:[#allocation11 + $0x798] sm:$0xff]
    %v2454 = vld [vmem:[#allocation11 + $0x7a0] sm:$0xff]
    %v2455 = vld [vmem:[#allocation11 + $0x7a8] sm:$0xff]
    %v2456 = vld [vmem:[#allocation11 + $0x7b0] sm:$0xff]
    %v2457 = vld [vmem:[#allocation11 + $0x7b8] sm:$0xff]
    %v2458 = vld [vmem:[#allocation11 + $0x7c0] sm:$0xff]
    %v2459 = vld [vmem:[#allocation11 + $0x7c8] sm:$0xff]
    %v2460 = vld [vmem:[#allocation11 + $0x7d0] sm:$0xff]
    %v2461 = vld [vmem:[#allocation11 + $0x7d8] sm:$0xff]
    %v2462 = vld [vmem:[#allocation11 + $0x7e0] sm:$0xff]
    %v2463 = vld [vmem:[#allocation11 + $0x7e8] sm:$0xff]
    %v2464 = vld [vmem:[#allocation11 + $0x7f0] sm:$0xff]
    %v2465 = vld [vmem:[#allocation11 + $0x7f8] sm:$0xff]
    %v2466 = vadd.f32 %v1738, %v1740
    %v2467 = vadd.f32 %v2466, %v1892
    %v2468 = vadd.f32 %v2467, %v1894
    %2469 = vadd.xlane.f32.xlu0 %v2468
    %v2470 = vpop.xlane.xlu0 %2469
    %v2471 = vadd.f32 %v1744, %v1746
    %v2472 = vadd.f32 %v2471, %v1898
    %v2473 = vadd.f32 %v2472, %v1900
    %2474 = vadd.xlane.f32.xlu0 %v2473
    %v2475 = vpop.xlane.xlu0 %2474
    %v2476 = vrcp.pop 512.0
    %v2477 = vmul.f32 %v2470, %v2476
    %v2478 = vmul.f32 %v2475, %v2476
    %v2479 = vsub.f32 %v1738, %v2477
    %v2480 = vsub.f32 %v1740, %v2477
    %v2481 = vsub.f32 %v1892, %v2477
    %v2482 = vsub.f32 %v1894, %v2477
    %v2483 = vsub.f32 %v1744, %v2478
    %v2484 = vsub.f32 %v1746, %v2478
    %v2485 = vsub.f32 %v1898, %v2478
    %v2486 = vsub.f32 %v1900, %v2478
    %v2487 = vmul.f32 %v2479, %v2479
    %v2488 = vmul.f32 %v2480, %v2480
    %v2489 = vmul.f32 %v2481, %v2481
    %v2490 = vmul.f32 %v2482, %v2482
    %v2491 = vmul.f32 %v2483, %v2483
    %v2492 = vmul.f32 %v2484, %v2484
    %v2493 = vmul.f32 %v2485, %v2485
    %v2494 = vmul.f32 %v2486, %v2486
    %v2495 = vadd.f32 %v2487, %v2488
    %v2496 = vadd.f32 %v2495, %v2489
    %v2497 = vadd.f32 %v2496, %v2490
    %2498 = vadd.xlane.f32.xlu0 %v2497
    %v2499 = vpop.xlane.xlu0 %2498
    %v2500 = vadd.f32 %v2491, %v2492
    %v2501 = vadd.f32 %v2500, %v2493
    %v2502 = vadd.f32 %v2501, %v2494
    %2503 = vadd.xlane.f32.xlu0 %v2502
    %v2504 = vpop.xlane.xlu0 %2503
    %v2505 = vmul.f32 %v2499, %v2476
    %v2506 = vmul.f32 %v2504, %v2476
    %v2507 = vadd.f32 %v2505, 1e-05
    %v2508 = vadd.f32 %v2506, 1e-05
    %v2509 = vrsqrt.pop %v2507
    %v2510 = vrsqrt.pop %v2508
    %v2511 = vmul.f32 %v2479, %v2509
    %v2512 = vmul.f32 %v2480, %v2509
    %v2513 = vmul.f32 %v2481, %v2509
    %v2514 = vmul.f32 %v2482, %v2509
    %v2515 = vmul.f32 %v2483, %v2510
    %v2516 = vmul.f32 %v2484, %v2510
    %v2517 = vmul.f32 %v2485, %v2510
    %v2518 = vmul.f32 %v2486, %v2510
    %v2519 = vlaneseq
    %v2520 = vshrl.u32 %v2519, 7
    %v2521 = vsub.s32 1, %v2520
    %v2522 = vrot.slane %v171, %v2521
    %v2523 = vlaneseq
    %v2524 = vshrl.u32 %v2523, 7
    %v2525 = vsub.s32 5, %v2524
    %v2526 = vrot.slane %v171, %v2525
    %v2527 = vlaneseq
    %v2528 = vshrl.u32 %v2527, 7
    %v2529 = vsub.s32 1, %v2528
    %v2530 = vrot.slane %v172, %v2529
    %v2531 = vlaneseq
    %v2532 = vshrl.u32 %v2531, 7
    %v2533 = vsub.s32 5, %v2532
    %v2534 = vrot.slane %v172, %v2533
    %v2539 = vlaneseq
    %v2540 = vshrl.u32 %v2539, 7
    %v2541 = vsub.s32 1, %v2540
    %v2542 = vrot.slane %v2522, %v2541
    %v2543 = vlaneseq
    %v2544 = vshrl.u32 %v2543, 7
    %v2545 = vsub.s32 1, %v2544
    %v2546 = vrot.slane %v2526, %v2545
    %v2547 = vlaneseq
    %v2548 = vshrl.u32 %v2547, 7
    %v2549 = vsub.s32 1, %v2548
    %v2550 = vrot.slane %v2530, %v2549
    %v2551 = vlaneseq
    %v2552 = vshrl.u32 %v2551, 7
    %v2553 = vsub.s32 1, %v2552
    %v2554 = vrot.slane %v2534, %v2553
    %v2555 = vmul.f32 %v2511, %v2542
    %v2556 = vmul.f32 %v2512, %v2546
    %v2557 = vmul.f32 %v2513, %v2550
    %v2558 = vmul.f32 %v2514, %v2554
    %v2559 = vmul.f32 %v2515, %v2542
    %v2560 = vmul.f32 %v2516, %v2546
    %v2561 = vmul.f32 %v2517, %v2550
    %v2562 = vmul.f32 %v2518, %v2554
    %v2563 = vlaneseq
    %v2564 = vshrl.u32 %v2563, 7
    %v2565 = vsub.s32 2, %v2564
    %v2566 = vrot.slane %v171, %v2565
    %v2567 = vlaneseq
    %v2568 = vshrl.u32 %v2567, 7
    %v2569 = vsub.s32 6, %v2568
    %v2570 = vrot.slane %v171, %v2569
    %v2571 = vlaneseq
    %v2572 = vshrl.u32 %v2571, 7
    %v2573 = vsub.s32 2, %v2572
    %v2574 = vrot.slane %v172, %v2573
    %v2575 = vlaneseq
    %v2576 = vshrl.u32 %v2575, 7
    %v2577 = vsub.s32 6, %v2576
    %v2578 = vrot.slane %v172, %v2577
    %v2583 = vlaneseq
    %v2584 = vshrl.u32 %v2583, 7
    %v2585 = vsub.s32 2, %v2584
    %v2586 = vrot.slane %v2566, %v2585
    %v2587 = vlaneseq
    %v2588 = vshrl.u32 %v2587, 7
    %v2589 = vsub.s32 2, %v2588
    %v2590 = vrot.slane %v2570, %v2589
    %v2591 = vlaneseq
    %v2592 = vshrl.u32 %v2591, 7
    %v2593 = vsub.s32 2, %v2592
    %v2594 = vrot.slane %v2574, %v2593
    %v2595 = vlaneseq
    %v2596 = vshrl.u32 %v2595, 7
    %v2597 = vsub.s32 2, %v2596
    %v2598 = vrot.slane %v2578, %v2597
    %v2599 = vadd.f32 %v2555, %v2586
    %v2600 = vadd.f32 %v2556, %v2590
    %v2601 = vadd.f32 %v2557, %v2594
    %v2602 = vadd.f32 %v2558, %v2598
    %v2603 = vadd.f32 %v2559, %v2586
    %v2604 = vadd.f32 %v2560, %v2590
    %v2605 = vadd.f32 %v2561, %v2594
    %v2606 = vadd.f32 %v2562, %v2598
    %vm2607 = vcmp.ge.f32.partialorder %v2599, 0.0
    %vm2608 = vcmp.ge.f32.partialorder %v2600, 0.0
    %vm2609 = vcmp.ge.f32.partialorder %v2601, 0.0
    %vm2610 = vcmp.ge.f32.partialorder %v2602, 0.0
    %vm2611 = vcmp.ge.f32.partialorder %v2603, 0.0
    %vm2612 = vcmp.ge.f32.partialorder %v2604, 0.0
    %vm2613 = vcmp.ge.f32.partialorder %v2605, 0.0
    %vm2614 = vcmp.ge.f32.partialorder %v2606, 0.0
    %v2615 = vmul.f32 %v2599, 0.01
    %v2616 = vmul.f32 %v2600, 0.01
    %v2617 = vmul.f32 %v2601, 0.01
    %v2618 = vmul.f32 %v2602, 0.01
    %v2619 = vmul.f32 %v2603, 0.01
    %v2620 = vmul.f32 %v2604, 0.01
    %v2621 = vmul.f32 %v2605, 0.01
    %v2622 = vmul.f32 %v2606, 0.01
    %v2623 = vsel %vm2607, %v2599, %v2615
    %v2624 = vsel %vm2608, %v2600, %v2616
    %v2625 = vsel %vm2609, %v2601, %v2617
    %v2626 = vsel %vm2610, %v2602, %v2618
    %v2627 = vsel %vm2611, %v2603, %v2619
    %v2628 = vsel %vm2612, %v2604, %v2620
    %v2629 = vsel %vm2613, %v2605, %v2621
    %v2630 = vsel %vm2614, %v2606, %v2622
    %v2631 = vlaneseq
    %v2632 = vshrl.u32 %v2631, 7
    %v2633 = vsub.s32 1, %v2632
    %v2634 = vrot.slane %v169, %v2633
    %v2635 = vlaneseq
    %v2636 = vshrl.u32 %v2635, 7
    %v2637 = vsub.s32 5, %v2636
    %v2638 = vrot.slane %v169, %v2637
    %v2639 = vlaneseq
    %v2640 = vshrl.u32 %v2639, 7
    %v2641 = vsub.s32 1, %v2640
    %v2642 = vrot.slane %v170, %v2641
    %v2643 = vlaneseq
    %v2644 = vshrl.u32 %v2643, 7
    %v2645 = vsub.s32 5, %v2644
    %v2646 = vrot.slane %v170, %v2645
    %v2651 = vlaneseq
    %v2652 = vshrl.u32 %v2651, 7
    %v2653 = vsub.s32 1, %v2652
    %v2654 = vrot.slane %v2634, %v2653
    %v2655 = vlaneseq
    %v2656 = vshrl.u32 %v2655, 7
    %v2657 = vsub.s32 1, %v2656
    %v2658 = vrot.slane %v2638, %v2657
    %v2659 = vlaneseq
    %v2660 = vshrl.u32 %v2659, 7
    %v2661 = vsub.s32 1, %v2660
    %v2662 = vrot.slane %v2642, %v2661
    %v2663 = vlaneseq
    %v2664 = vshrl.u32 %v2663, 7
    %v2665 = vsub.s32 1, %v2664
    %v2666 = vrot.slane %v2646, %v2665
    %2667 = vmatprep.subr.mxu0 %v2211
    %2668 = vmatpush1.msra.mxu0 %v2210
    %2669 = vmatprep.subr.mxu0 %v2215
    %2670 = vmatpush1.msra.mxu0 %v2214
    %2671 = vmatprep.subr.mxu0 %v2219
    %2672 = vmatpush1.msra.mxu0 %v2218
    %2673 = vmatprep.subr.mxu0 %v2223
    %2674 = vmatpush1.msra.mxu0 %v2222
    %2675 = vmatprep.subr.mxu0 %v2227
    %2676 = vmatpush1.msra.mxu0 %v2226
    %2677 = vmatprep.subr.mxu0 %v2231
    %2678 = vmatpush1.msra.mxu0 %v2230
    %2679 = vmatprep.subr.mxu0 %v2235
    %2680 = vmatpush1.msra.mxu0 %v2234
    %2681 = vmatprep.subr.mxu0 %v2239
    %2682 = vmatpush1.msra.mxu0 %v2238
    %2683 = vmatprep.subr.mxu0 %v2243
    %2684 = vmatpush1.msra.mxu0 %v2242
    %2685 = vmatprep.subr.mxu0 %v2247
    %2686 = vmatpush1.msra.mxu0 %v2246
    %2687 = vmatprep.subr.mxu0 %v2251
    %2688 = vmatpush1.msra.mxu0 %v2250
    %2689 = vmatprep.subr.mxu0 %v2255
    %2690 = vmatpush1.msra.mxu0 %v2254
    %2691 = vmatprep.subr.mxu0 %v2259
    %2692 = vmatpush1.msra.mxu0 %v2258
    %2693 = vmatprep.subr.mxu0 %v2263
    %2694 = vmatpush1.msra.mxu0 %v2262
    %2695 = vmatprep.subr.mxu0 %v2267
    %2696 = vmatpush1.msra.mxu0 %v2266
    %2697 = vmatprep.subr.mxu0 %v2271
    %2698 = vmatpush1.msra.mxu0 %v2270
    %2699 = vmatprep.subr.mxu0 %v2275
    %2700 = vmatpush1.msra.mxu0 %v2274
    %2701 = vmatprep.subr.mxu0 %v2279
    %2702 = vmatpush1.msra.mxu0 %v2278
    %2703 = vmatprep.subr.mxu0 %v2283
    %2704 = vmatpush1.msra.mxu0 %v2282
    %2705 = vmatprep.subr.mxu0 %v2287
    %2706 = vmatpush1.msra.mxu0 %v2286
    %2707 = vmatprep.subr.mxu0 %v2291
    %2708 = vmatpush1.msra.mxu0 %v2290
    %2709 = vmatprep.subr.mxu0 %v2295
    %2710 = vmatpush1.msra.mxu0 %v2294
    %2711 = vmatprep.subr.mxu0 %v2299
    %2712 = vmatpush1.msra.mxu0 %v2298
    %2713 = vmatprep.subr.mxu0 %v2303
    %2714 = vmatpush1.msra.mxu0 %v2302
    %2715 = vmatprep.subr.mxu0 %v2307
    %2716 = vmatpush1.msra.mxu0 %v2306
    %2717 = vmatprep.subr.mxu0 %v2311
    %2718 = vmatpush1.msra.mxu0 %v2310
    %2719 = vmatprep.subr.mxu0 %v2315
    %2720 = vmatpush1.msra.mxu0 %v2314
    %2721 = vmatprep.subr.mxu0 %v2319
    %2722 = vmatpush1.msra.mxu0 %v2318
    %2723 = vmatprep.subr.mxu0 %v2323
    %2724 = vmatpush1.msra.mxu0 %v2322
    %2725 = vmatprep.subr.mxu0 %v2327
    %2726 = vmatpush1.msra.mxu0 %v2326
    %2727 = vmatprep.subr.mxu0 %v2331
    %2728 = vmatpush1.msra.mxu0 %v2330
    %2729 = vmatprep.subr.mxu0 %v2335
    %2730 = vmatpush1.msra.mxu0 %v2334
    %2731 = vmatprep.mubr.f32.mxu0 %v2624
    %2732 = vmatmul.mubr.f32.gmra.mrb[0].mxu0 %v2623
    %v2733 = vpop.f32.mrb[0].mxu0
    %v2734 = vadd.f32 %v2654, %v2733
    %v2735 = vpop.f32.mrb[0].mxu0
    %v2736 = vadd.f32 %v2658, %v2735
    %2737 = vmatprep.mubr.f32.mxu0 %v2628
    %2738 = vmatmul.mubr.f32.gmra.mrb[0].mxu0 %v2627
    %v2739 = vpop.f32.mrb[0].mxu0
    %v2740 = vadd.f32 %v2654, %v2739
    %v2741 = vpop.f32.mrb[0].mxu0
    %v2742 = vadd.f32 %v2658, %v2741
    %2743 = vdwg.mxu0
    %2744 = vmatprep.subr.mxu0 %v2339
    %2745 = vmatpush1.msra.mxu0 %v2338
    %2746 = vmatprep.subr.mxu0 %v2343
    %2747 = vmatpush1.msra.mxu0 %v2342
    %2748 = vmatprep.subr.mxu0 %v2347
    %2749 = vmatpush1.msra.mxu0 %v2346
    %2750 = vmatprep.subr.mxu0 %v2351
    %2751 = vmatpush1.msra.mxu0 %v2350
    %2752 = vmatprep.subr.mxu0 %v2355
    %2753 = vmatpush1.msra.mxu0 %v2354
    %2754 = vmatprep.subr.mxu0 %v2359
    %2755 = vmatpush1.msra.mxu0 %v2358
    %2756 = vmatprep.subr.mxu0 %v2363
    %2757 = vmatpush1.msra.mxu0 %v2362
    %2758 = vmatprep.subr.mxu0 %v2367
    %2759 = vmatpush1.msra.mxu0 %v2366
    %2760 = vmatprep.subr.mxu0 %v2371
    %2761 = vmatpush1.msra.mxu0 %v2370
    %2762 = vmatprep.subr.mxu0 %v2375
    %2763 = vmatpush1.msra.mxu0 %v2374
    %2764 = vmatprep.subr.mxu0 %v2379
    %2765 = vmatpush1.msra.mxu0 %v2378
    %2766 = vmatprep.subr.mxu0 %v2383
    %2767 = vmatpush1.msra.mxu0 %v2382
    %2768 = vmatprep.subr.mxu0 %v2387
    %2769 = vmatpush1.msra.mxu0 %v2386
    %2770 = vmatprep.subr.mxu0 %v2391
    %2771 = vmatpush1.msra.mxu0 %v2390
    %2772 = vmatprep.subr.mxu0 %v2395
    %2773 = vmatpush1.msra.mxu0 %v2394
    %2774 = vmatprep.subr.mxu0 %v2399
    %2775 = vmatpush1.msra.mxu0 %v2398
    %2776 = vmatprep.subr.mxu0 %v2403
    %2777 = vmatpush1.msra.mxu0 %v2402
    %2778 = vmatprep.subr.mxu0 %v2407
    %2779 = vmatpush1.msra.mxu0 %v2406
    %2780 = vmatprep.subr.mxu0 %v2411
    %2781 = vmatpush1.msra.mxu0 %v2410
    %2782 = vmatprep.subr.mxu0 %v2415
    %2783 = vmatpush1.msra.mxu0 %v2414
    %2784 = vmatprep.subr.mxu0 %v2419
    %2785 = vmatpush1.msra.mxu0 %v2418
    %2786 = vmatprep.subr.mxu0 %v2423
    %2787 = vmatpush1.msra.mxu0 %v2422
    %2788 = vmatprep.subr.mxu0 %v2427
    %2789 = vmatpush1.msra.mxu0 %v2426
    %2790 = vmatprep.subr.mxu0 %v2431
    %2791 = vmatpush1.msra.mxu0 %v2430
    %2792 = vmatprep.subr.mxu0 %v2435
    %2793 = vmatpush1.msra.mxu0 %v2434
    %2794 = vmatprep.subr.mxu0 %v2439
    %2795 = vmatpush1.msra.mxu0 %v2438
    %2796 = vmatprep.subr.mxu0 %v2443
    %2797 = vmatpush1.msra.mxu0 %v2442
    %2798 = vmatprep.subr.mxu0 %v2447
    %2799 = vmatpush1.msra.mxu0 %v2446
    %2800 = vmatprep.subr.mxu0 %v2451
    %2801 = vmatpush1.msra.mxu0 %v2450
    %2802 = vmatprep.subr.mxu0 %v2455
    %2803 = vmatpush1.msra.mxu0 %v2454
    %2804 = vmatprep.subr.mxu0 %v2459
    %2805 = vmatpush1.msra.mxu0 %v2458
    %2806 = vmatprep.subr.mxu0 %v2463
    %2807 = vmatpush1.msra.mxu0 %v2462
    %2808 = vmatprep.mubr.f32.mxu0 %v2626
    %2809 = vmatmul.mubr.f32.gmra.mrb[0].mxu0 %v2625
    %v2810 = vpop.f32.mrb[0].mxu0
    %v2811 = vadd.f32 %v2734, %v2810
    %v2812 = vpop.f32.mrb[0].mxu0
    %v2813 = vadd.f32 %v2736, %v2812
    %2814 = vmatprep.mubr.f32.mxu0 %v2630
    %2815 = vmatmul.mubr.f32.gmra.mrb[0].mxu0 %v2629
    %v2816 = vpop.f32.mrb[0].mxu0
    %v2817 = vadd.f32 %v2740, %v2816
    %v2818 = vpop.f32.mrb[0].mxu0
    %v2819 = vadd.f32 %v2742, %v2818
    %2820 = vdwg.mxu0
    %2821 = vmatprep.subr.mxu0 %v2213
    %2822 = vmatpush1.msra.mxu0 %v2212
    %2823 = vmatprep.subr.mxu0 %v2217
    %2824 = vmatpush1.msra.mxu0 %v2216
    %2825 = vmatprep.subr.mxu0 %v2221
    %2826 = vmatpush1.msra.mxu0 %v2220
    %2827 = vmatprep.subr.mxu0 %v2225
    %2828 = vmatpush1.msra.mxu0 %v2224
    %2829 = vmatprep.subr.mxu0 %v2229
    %2830 = vmatpush1.msra.mxu0 %v2228
    %2831 = vmatprep.subr.mxu0 %v2233
    %2832 = vmatpush1.msra.mxu0 %v2232
    %2833 = vmatprep.subr.mxu0 %v2237
    %2834 = vmatpush1.msra.mxu0 %v2236
    %2835 = vmatprep.subr.mxu0 %v2241
    %2836 = vmatpush1.msra.mxu0 %v2240
    %2837 = vmatprep.subr.mxu0 %v2245
    %2838 = vmatpush1.msra.mxu0 %v2244
    %2839 = vmatprep.subr.mxu0 %v2249
    %2840 = vmatpush1.msra.mxu0 %v2248
    %2841 = vmatprep.subr.mxu0 %v2253
    %2842 = vmatpush1.msra.mxu0 %v2252
    %2843 = vmatprep.subr.mxu0 %v2257
    %2844 = vmatpush1.msra.mxu0 %v2256
    %2845 = vmatprep.subr.mxu0 %v2261
    %2846 = vmatpush1.msra.mxu0 %v2260
    %2847 = vmatprep.subr.mxu0 %v2265
    %2848 = vmatpush1.msra.mxu0 %v2264
    %2849 = vmatprep.subr.mxu0 %v2269
    %2850 = vmatpush1.msra.mxu0 %v2268
    %2851 = vmatprep.subr.mxu0 %v2273
    %2852 = vmatpush1.msra.mxu0 %v2272
    %2853 = vmatprep.subr.mxu0 %v2277
    %2854 = vmatpush1.msra.mxu0 %v2276
    %2855 = vmatprep.subr.mxu0 %v2281
    %2856 = vmatpush1.msra.mxu0 %v2280
    %2857 = vmatprep.subr.mxu0 %v2285
    %2858 = vmatpush1.msra.mxu0 %v2284
    %2859 = vmatprep.subr.mxu0 %v2289
    %2860 = vmatpush1.msra.mxu0 %v2288
    %2861 = vmatprep.subr.mxu0 %v2293
    %2862 = vmatpush1.msra.mxu0 %v2292
    %2863 = vmatprep.subr.mxu0 %v2297
    %2864 = vmatpush1.msra.mxu0 %v2296
    %2865 = vmatprep.subr.mxu0 %v2301
    %2866 = vmatpush1.msra.mxu0 %v2300
    %2867 = vmatprep.subr.mxu0 %v2305
    %2868 = vmatpush1.msra.mxu0 %v2304
    %2869 = vmatprep.subr.mxu0 %v2309
    %2870 = vmatpush1.msra.mxu0 %v2308
    %2871 = vmatprep.subr.mxu0 %v2313
    %2872 = vmatpush1.msra.mxu0 %v2312
    %2873 = vmatprep.subr.mxu0 %v2317
    %2874 = vmatpush1.msra.mxu0 %v2316
    %2875 = vmatprep.subr.mxu0 %v2321
    %2876 = vmatpush1.msra.mxu0 %v2320
    %2877 = vmatprep.subr.mxu0 %v2325
    %2878 = vmatpush1.msra.mxu0 %v2324
    %2879 = vmatprep.subr.mxu0 %v2329
    %2880 = vmatpush1.msra.mxu0 %v2328
    %2881 = vmatprep.subr.mxu0 %v2333
    %2882 = vmatpush1.msra.mxu0 %v2332
    %2883 = vmatprep.subr.mxu0 %v2337
    %2884 = vmatpush1.msra.mxu0 %v2336
    %2885 = vmatprep.mubr.f32.mxu0 %v2624
    %2886 = vmatmul.mubr.f32.gmra.mrb[0].mxu0 %v2623
    %v2887 = vpop.f32.mrb[0].mxu0
    %v2888 = vadd.f32 %v2662, %v2887
    %v2889 = vpop.f32.mrb[0].mxu0
    %v2890 = vadd.f32 %v2666, %v2889
    %2891 = vmatprep.mubr.f32.mxu0 %v2628
    %2892 = vmatmul.mubr.f32.gmra.mrb[0].mxu0 %v2627
    %v2893 = vpop.f32.mrb[0].mxu0
    %v2894 = vadd.f32 %v2662, %v2893
    %v2895 = vpop.f32.mrb[0].mxu0
    %v2896 = vadd.f32 %v2666, %v2895
    %2897 = vdwg.mxu0
    %2898 = vmatprep.subr.mxu0 %v2341
    %2899 = vmatpush1.msra.mxu0 %v2340
    %2900 = vmatprep.subr.mxu0 %v2345
    %2901 = vmatpush1.msra.mxu0 %v2344
    %2902 = vmatprep.subr.mxu0 %v2349
    %2903 = vmatpush1.msra.mxu0 %v2348
    %2904 = vmatprep.subr.mxu0 %v2353
    %2905 = vmatpush1.msra.mxu0 %v2352
    %2906 = vmatprep.subr.mxu0 %v2357
    %2907 = vmatpush1.msra.mxu0 %v2356
    %2908 = vmatprep.subr.mxu0 %v2361
    %2909 = vmatpush1.msra.mxu0 %v2360
    %2910 = vmatprep.subr.mxu0 %v2365
    %2911 = vmatpush1.msra.mxu0 %v2364
    %2912 = vmatprep.subr.mxu0 %v2369
    %2913 = vmatpush1.msra.mxu0 %v2368
    %2914 = vmatprep.subr.mxu0 %v2373
    %2915 = vmatpush1.msra.mxu0 %v2372
    %2916 = vmatprep.subr.mxu0 %v2377
    %2917 = vmatpush1.msra.mxu0 %v2376
    %2918 = vmatprep.subr.mxu0 %v2381
    %2919 = vmatpush1.msra.mxu0 %v2380
    %2920 = vmatprep.subr.mxu0 %v2385
    %2921 = vmatpush1.msra.mxu0 %v2384
    %2922 = vmatprep.subr.mxu0 %v2389
    %2923 = vmatpush1.msra.mxu0 %v2388
    %2924 = vmatprep.subr.mxu0 %v2393
    %2925 = vmatpush1.msra.mxu0 %v2392
    %2926 = vmatprep.subr.mxu0 %v2397
    %2927 = vmatpush1.msra.mxu0 %v2396
    %2928 = vmatprep.subr.mxu0 %v2401
    %2929 = vmatpush1.msra.mxu0 %v2400
    %2930 = vmatprep.subr.mxu0 %v2405
    %2931 = vmatpush1.msra.mxu0 %v2404
    %2932 = vmatprep.subr.mxu0 %v2409
    %2933 = vmatpush1.msra.mxu0 %v2408
    %2934 = vmatprep.subr.mxu0 %v2413
    %2935 = vmatpush1.msra.mxu0 %v2412
    %2936 = vmatprep.subr.mxu0 %v2417
    %2937 = vmatpush1.msra.mxu0 %v2416
    %2938 = vmatprep.subr.mxu0 %v2421
    %2939 = vmatpush1.msra.mxu0 %v2420
    %2940 = vmatprep.subr.mxu0 %v2425
    %2941 = vmatpush1.msra.mxu0 %v2424
    %2942 = vmatprep.subr.mxu0 %v2429
    %2943 = vmatpush1.msra.mxu0 %v2428
    %2944 = vmatprep.subr.mxu0 %v2433
    %2945 = vmatpush1.msra.mxu0 %v2432
    %2946 = vmatprep.subr.mxu0 %v2437
    %2947 = vmatpush1.msra.mxu0 %v2436
    %2948 = vmatprep.subr.mxu0 %v2441
    %2949 = vmatpush1.msra.mxu0 %v2440
    %2950 = vmatprep.subr.mxu0 %v2445
    %2951 = vmatpush1.msra.mxu0 %v2444
    %2952 = vmatprep.subr.mxu0 %v2449
    %2953 = vmatpush1.msra.mxu0 %v2448
    %2954 = vmatprep.subr.mxu0 %v2453
    %2955 = vmatpush1.msra.mxu0 %v2452
    %2956 = vmatprep.subr.mxu0 %v2457
    %2957 = vmatpush1.msra.mxu0 %v2456
    %2958 = vmatprep.subr.mxu0 %v2461
    %2959 = vmatpush1.msra.mxu0 %v2460
    %2960 = vmatprep.subr.mxu0 %v2465
    %2961 = vmatpush1.msra.mxu0 %v2464
    %2962 = vmatprep.mubr.f32.mxu0 %v2626
    %2963 = vmatmul.mubr.f32.gmra.mrb[0].mxu0 %v2625
    %v2964 = vpop.f32.mrb[0].mxu0
    %v2965 = vadd.f32 %v2888, %v2964
    %v2966 = vpop.f32.mrb[0].mxu0
    %v2967 = vadd.f32 %v2890, %v2966
    %2968 = vmatprep.mubr.f32.mxu0 %v2630
    %2969 = vmatmul.mubr.f32.gmra.mrb[0].mxu0 %v2629
    %v2970 = vpop.f32.mrb[0].mxu0
    %v2971 = vadd.f32 %v2894, %v2970
    %v2972 = vpop.f32.mrb[0].mxu0
    %v2973 = vadd.f32 %v2896, %v2972
    %2974 = vdwg.mxu0
    %v2975 = vld [vmem:[#allocation13] sm:$0xff]
    %v2976 = vld [vmem:[#allocation13 + $0x8] sm:$0xff]
    %v2977 = vld [vmem:[#allocation13 + $0x10] sm:$0xff]
    %v2978 = vld [vmem:[#allocation13 + $0x18] sm:$0xff]
    %v2979 = vld [vmem:[#allocation13 + $0x20] sm:$0xff]
    %v2980 = vld [vmem:[#allocation13 + $0x28] sm:$0xff]
    %v2981 = vld [vmem:[#allocation13 + $0x30] sm:$0xff]
    %v2982 = vld [vmem:[#allocation13 + $0x38] sm:$0xff]
    %v2983 = vld [vmem:[#allocation13 + $0x40] sm:$0xff]
    %v2984 = vld [vmem:[#allocation13 + $0x48] sm:$0xff]
    %v2985 = vld [vmem:[#allocation13 + $0x50] sm:$0xff]
    %v2986 = vld [vmem:[#allocation13 + $0x58] sm:$0xff]
    %v2987 = vld [vmem:[#allocation13 + $0x60] sm:$0xff]
    %v2988 = vld [vmem:[#allocation13 + $0x68] sm:$0xff]
    %v2989 = vld [vmem:[#allocation13 + $0x70] sm:$0xff]
    %v2990 = vld [vmem:[#allocation13 + $0x78] sm:$0xff]
    %v2991 = vld [vmem:[#allocation13 + $0x80] sm:$0xff]
    %v2992 = vld [vmem:[#allocation13 + $0x88] sm:$0xff]
    %v2993 = vld [vmem:[#allocation13 + $0x90] sm:$0xff]
    %v2994 = vld [vmem:[#allocation13 + $0x98] sm:$0xff]
    %v2995 = vld [vmem:[#allocation13 + $0xa0] sm:$0xff]
    %v2996 = vld [vmem:[#allocation13 + $0xa8] sm:$0xff]
    %v2997 = vld [vmem:[#allocation13 + $0xb0] sm:$0xff]
    %v2998 = vld [vmem:[#allocation13 + $0xb8] sm:$0xff]
    %v2999 = vld [vmem:[#allocation13 + $0xc0] sm:$0xff]
    %v3000 = vld [vmem:[#allocation13 + $0xc8] sm:$0xff]
    %v3001 = vld [vmem:[#allocation13 + $0xd0] sm:$0xff]
    %v3002 = vld [vmem:[#allocation13 + $0xd8] sm:$0xff]
    %v3003 = vld [vmem:[#allocation13 + $0xe0] sm:$0xff]
    %v3004 = vld [vmem:[#allocation13 + $0xe8] sm:$0xff]
    %v3005 = vld [vmem:[#allocation13 + $0xf0] sm:$0xff]
    %v3006 = vld [vmem:[#allocation13 + $0xf8] sm:$0xff]
    %v3007 = vld [vmem:[#allocation13 + $0x100] sm:$0xff]
    %v3008 = vld [vmem:[#allocation13 + $0x108] sm:$0xff]
    %v3009 = vld [vmem:[#allocation13 + $0x110] sm:$0xff]
    %v3010 = vld [vmem:[#allocation13 + $0x118] sm:$0xff]
    %v3011 = vld [vmem:[#allocation13 + $0x120] sm:$0xff]
    %v3012 = vld [vmem:[#allocation13 + $0x128] sm:$0xff]
    %v3013 = vld [vmem:[#allocation13 + $0x130] sm:$0xff]
    %v3014 = vld [vmem:[#allocation13 + $0x138] sm:$0xff]
    %v3015 = vld [vmem:[#allocation13 + $0x140] sm:$0xff]
    %v3016 = vld [vmem:[#allocation13 + $0x148] sm:$0xff]
    %v3017 = vld [vmem:[#allocation13 + $0x150] sm:$0xff]
    %v3018 = vld [vmem:[#allocation13 + $0x158] sm:$0xff]
    %v3019 = vld [vmem:[#allocation13 + $0x160] sm:$0xff]
    %v3020 = vld [vmem:[#allocation13 + $0x168] sm:$0xff]
    %v3021 = vld [vmem:[#allocation13 + $0x170] sm:$0xff]
    %v3022 = vld [vmem:[#allocation13 + $0x178] sm:$0xff]
    %v3023 = vld [vmem:[#allocation13 + $0x180] sm:$0xff]
    %v3024 = vld [vmem:[#allocation13 + $0x188] sm:$0xff]
    %v3025 = vld [vmem:[#allocation13 + $0x190] sm:$0xff]
    %v3026 = vld [vmem:[#allocation13 + $0x198] sm:$0xff]
    %v3027 = vld [vmem:[#allocation13 + $0x1a0] sm:$0xff]
    %v3028 = vld [vmem:[#allocation13 + $0x1a8] sm:$0xff]
    %v3029 = vld [vmem:[#allocation13 + $0x1b0] sm:$0xff]
    %v3030 = vld [vmem:[#allocation13 + $0x1b8] sm:$0xff]
    %v3031 = vld [vmem:[#allocation13 + $0x1c0] sm:$0xff]
    %v3032 = vld [vmem:[#allocation13 + $0x1c8] sm:$0xff]
    %v3033 = vld [vmem:[#allocation13 + $0x1d0] sm:$0xff]
    %v3034 = vld [vmem:[#allocation13 + $0x1d8] sm:$0xff]
    %v3035 = vld [vmem:[#allocation13 + $0x1e0] sm:$0xff]
    %v3036 = vld [vmem:[#allocation13 + $0x1e8] sm:$0xff]
    %v3037 = vld [vmem:[#allocation13 + $0x1f0] sm:$0xff]
    %v3038 = vld [vmem:[#allocation13 + $0x1f8] sm:$0xff]
    %v3039 = vld [vmem:[#allocation13 + $0x200] sm:$0xff]
    %v3040 = vld [vmem:[#allocation13 + $0x208] sm:$0xff]
    %v3041 = vld [vmem:[#allocation13 + $0x210] sm:$0xff]
    %v3042 = vld [vmem:[#allocation13 + $0x218] sm:$0xff]
    %v3043 = vld [vmem:[#allocation13 + $0x220] sm:$0xff]
    %v3044 = vld [vmem:[#allocation13 + $0x228] sm:$0xff]
    %v3045 = vld [vmem:[#allocation13 + $0x230] sm:$0xff]
    %v3046 = vld [vmem:[#allocation13 + $0x238] sm:$0xff]
    %v3047 = vld [vmem:[#allocation13 + $0x240] sm:$0xff]
    %v3048 = vld [vmem:[#allocation13 + $0x248] sm:$0xff]
    %v3049 = vld [vmem:[#allocation13 + $0x250] sm:$0xff]
    %v3050 = vld [vmem:[#allocation13 + $0x258] sm:$0xff]
    %v3051 = vld [vmem:[#allocation13 + $0x260] sm:$0xff]
    %v3052 = vld [vmem:[#allocation13 + $0x268] sm:$0xff]
    %v3053 = vld [vmem:[#allocation13 + $0x270] sm:$0xff]
    %v3054 = vld [vmem:[#allocation13 + $0x278] sm:$0xff]
    %v3055 = vld [vmem:[#allocation13 + $0x280] sm:$0xff]
    %v3056 = vld [vmem:[#allocation13 + $0x288] sm:$0xff]
    %v3057 = vld [vmem:[#allocation13 + $0x290] sm:$0xff]
    %v3058 = vld [vmem:[#allocation13 + $0x298] sm:$0xff]
    %v3059 = vld [vmem:[#allocation13 + $0x2a0] sm:$0xff]
    %v3060 = vld [vmem:[#allocation13 + $0x2a8] sm:$0xff]
    %v3061 = vld [vmem:[#allocation13 + $0x2b0] sm:$0xff]
    %v3062 = vld [vmem:[#allocation13 + $0x2b8] sm:$0xff]
    %v3063 = vld [vmem:[#allocation13 + $0x2c0] sm:$0xff]
    %v3064 = vld [vmem:[#allocation13 + $0x2c8] sm:$0xff]
    %v3065 = vld [vmem:[#allocation13 + $0x2d0] sm:$0xff]
    %v3066 = vld [vmem:[#allocation13 + $0x2d8] sm:$0xff]
    %v3067 = vld [vmem:[#allocation13 + $0x2e0] sm:$0xff]
    %v3068 = vld [vmem:[#allocation13 + $0x2e8] sm:$0xff]
    %v3069 = vld [vmem:[#allocation13 + $0x2f0] sm:$0xff]
    %v3070 = vld [vmem:[#allocation13 + $0x2f8] sm:$0xff]
    %v3071 = vld [vmem:[#allocation13 + $0x300] sm:$0xff]
    %v3072 = vld [vmem:[#allocation13 + $0x308] sm:$0xff]
    %v3073 = vld [vmem:[#allocation13 + $0x310] sm:$0xff]
    %v3074 = vld [vmem:[#allocation13 + $0x318] sm:$0xff]
    %v3075 = vld [vmem:[#allocation13 + $0x320] sm:$0xff]
    %v3076 = vld [vmem:[#allocation13 + $0x328] sm:$0xff]
    %v3077 = vld [vmem:[#allocation13 + $0x330] sm:$0xff]
    %v3078 = vld [vmem:[#allocation13 + $0x338] sm:$0xff]
    %v3079 = vld [vmem:[#allocation13 + $0x340] sm:$0xff]
    %v3080 = vld [vmem:[#allocation13 + $0x348] sm:$0xff]
    %v3081 = vld [vmem:[#allocation13 + $0x350] sm:$0xff]
    %v3082 = vld [vmem:[#allocation13 + $0x358] sm:$0xff]
    %v3083 = vld [vmem:[#allocation13 + $0x360] sm:$0xff]
    %v3084 = vld [vmem:[#allocation13 + $0x368] sm:$0xff]
    %v3085 = vld [vmem:[#allocation13 + $0x370] sm:$0xff]
    %v3086 = vld [vmem:[#allocation13 + $0x378] sm:$0xff]
    %v3087 = vld [vmem:[#allocation13 + $0x380] sm:$0xff]
    %v3088 = vld [vmem:[#allocation13 + $0x388] sm:$0xff]
    %v3089 = vld [vmem:[#allocation13 + $0x390] sm:$0xff]
    %v3090 = vld [vmem:[#allocation13 + $0x398] sm:$0xff]
    %v3091 = vld [vmem:[#allocation13 + $0x3a0] sm:$0xff]
    %v3092 = vld [vmem:[#allocation13 + $0x3a8] sm:$0xff]
    %v3093 = vld [vmem:[#allocation13 + $0x3b0] sm:$0xff]
    %v3094 = vld [vmem:[#allocation13 + $0x3b8] sm:$0xff]
    %v3095 = vld [vmem:[#allocation13 + $0x3c0] sm:$0xff]
    %v3096 = vld [vmem:[#allocation13 + $0x3c8] sm:$0xff]
    %v3097 = vld [vmem:[#allocation13 + $0x3d0] sm:$0xff]
    %v3098 = vld [vmem:[#allocation13 + $0x3d8] sm:$0xff]
    %v3099 = vld [vmem:[#allocation13 + $0x3e0] sm:$0xff]
    %v3100 = vld [vmem:[#allocation13 + $0x3e8] sm:$0xff]
    %v3101 = vld [vmem:[#allocation13 + $0x3f0] sm:$0xff]
    %v3102 = vld [vmem:[#allocation13 + $0x3f8] sm:$0xff]
    %v3103 = vld [vmem:[#allocation13 + $0x400] sm:$0xff]
    %v3104 = vld [vmem:[#allocation13 + $0x408] sm:$0xff]
    %v3105 = vld [vmem:[#allocation13 + $0x410] sm:$0xff]
    %v3106 = vld [vmem:[#allocation13 + $0x418] sm:$0xff]
    %v3107 = vld [vmem:[#allocation13 + $0x420] sm:$0xff]
    %v3108 = vld [vmem:[#allocation13 + $0x428] sm:$0xff]
    %v3109 = vld [vmem:[#allocation13 + $0x430] sm:$0xff]
    %v3110 = vld [vmem:[#allocation13 + $0x438] sm:$0xff]
    %v3111 = vld [vmem:[#allocation13 + $0x440] sm:$0xff]
    %v3112 = vld [vmem:[#allocation13 + $0x448] sm:$0xff]
    %v3113 = vld [vmem:[#allocation13 + $0x450] sm:$0xff]
    %v3114 = vld [vmem:[#allocation13 + $0x458] sm:$0xff]
    %v3115 = vld [vmem:[#allocation13 + $0x460] sm:$0xff]
    %v3116 = vld [vmem:[#allocation13 + $0x468] sm:$0xff]
    %v3117 = vld [vmem:[#allocation13 + $0x470] sm:$0xff]
    %v3118 = vld [vmem:[#allocation13 + $0x478] sm:$0xff]
    %v3119 = vld [vmem:[#allocation13 + $0x480] sm:$0xff]
    %v3120 = vld [vmem:[#allocation13 + $0x488] sm:$0xff]
    %v3121 = vld [vmem:[#allocation13 + $0x490] sm:$0xff]
    %v3122 = vld [vmem:[#allocation13 + $0x498] sm:$0xff]
    %v3123 = vld [vmem:[#allocation13 + $0x4a0] sm:$0xff]
    %v3124 = vld [vmem:[#allocation13 + $0x4a8] sm:$0xff]
    %v3125 = vld [vmem:[#allocation13 + $0x4b0] sm:$0xff]
    %v3126 = vld [vmem:[#allocation13 + $0x4b8] sm:$0xff]
    %v3127 = vld [vmem:[#allocation13 + $0x4c0] sm:$0xff]
    %v3128 = vld [vmem:[#allocation13 + $0x4c8] sm:$0xff]
    %v3129 = vld [vmem:[#allocation13 + $0x4d0] sm:$0xff]
    %v3130 = vld [vmem:[#allocation13 + $0x4d8] sm:$0xff]
    %v3131 = vld [vmem:[#allocation13 + $0x4e0] sm:$0xff]
    %v3132 = vld [vmem:[#allocation13 + $0x4e8] sm:$0xff]
    %v3133 = vld [vmem:[#allocation13 + $0x4f0] sm:$0xff]
    %v3134 = vld [vmem:[#allocation13 + $0x4f8] sm:$0xff]
    %v3135 = vld [vmem:[#allocation13 + $0x500] sm:$0xff]
    %v3136 = vld [vmem:[#allocation13 + $0x508] sm:$0xff]
    %v3137 = vld [vmem:[#allocation13 + $0x510] sm:$0xff]
    %v3138 = vld [vmem:[#allocation13 + $0x518] sm:$0xff]
    %v3139 = vld [vmem:[#allocation13 + $0x520] sm:$0xff]
    %v3140 = vld [vmem:[#allocation13 + $0x528] sm:$0xff]
    %v3141 = vld [vmem:[#allocation13 + $0x530] sm:$0xff]
    %v3142 = vld [vmem:[#allocation13 + $0x538] sm:$0xff]
    %v3143 = vld [vmem:[#allocation13 + $0x540] sm:$0xff]
    %v3144 = vld [vmem:[#allocation13 + $0x548] sm:$0xff]
    %v3145 = vld [vmem:[#allocation13 + $0x550] sm:$0xff]
    %v3146 = vld [vmem:[#allocation13 + $0x558] sm:$0xff]
    %v3147 = vld [vmem:[#allocation13 + $0x560] sm:$0xff]
    %v3148 = vld [vmem:[#allocation13 + $0x568] sm:$0xff]
    %v3149 = vld [vmem:[#allocation13 + $0x570] sm:$0xff]
    %v3150 = vld [vmem:[#allocation13 + $0x578] sm:$0xff]
    %v3151 = vld [vmem:[#allocation13 + $0x580] sm:$0xff]
    %v3152 = vld [vmem:[#allocation13 + $0x588] sm:$0xff]
    %v3153 = vld [vmem:[#allocation13 + $0x590] sm:$0xff]
    %v3154 = vld [vmem:[#allocation13 + $0x598] sm:$0xff]
    %v3155 = vld [vmem:[#allocation13 + $0x5a0] sm:$0xff]
    %v3156 = vld [vmem:[#allocation13 + $0x5a8] sm:$0xff]
    %v3157 = vld [vmem:[#allocation13 + $0x5b0] sm:$0xff]
    %v3158 = vld [vmem:[#allocation13 + $0x5b8] sm:$0xff]
    %v3159 = vld [vmem:[#allocation13 + $0x5c0] sm:$0xff]
    %v3160 = vld [vmem:[#allocation13 + $0x5c8] sm:$0xff]
    %v3161 = vld [vmem:[#allocation13 + $0x5d0] sm:$0xff]
    %v3162 = vld [vmem:[#allocation13 + $0x5d8] sm:$0xff]
    %v3163 = vld [vmem:[#allocation13 + $0x5e0] sm:$0xff]
    %v3164 = vld [vmem:[#allocation13 + $0x5e8] sm:$0xff]
    %v3165 = vld [vmem:[#allocation13 + $0x5f0] sm:$0xff]
    %v3166 = vld [vmem:[#allocation13 + $0x5f8] sm:$0xff]
    %v3167 = vld [vmem:[#allocation13 + $0x600] sm:$0xff]
    %v3168 = vld [vmem:[#allocation13 + $0x608] sm:$0xff]
    %v3169 = vld [vmem:[#allocation13 + $0x610] sm:$0xff]
    %v3170 = vld [vmem:[#allocation13 + $0x618] sm:$0xff]
    %v3171 = vld [vmem:[#allocation13 + $0x620] sm:$0xff]
    %v3172 = vld [vmem:[#allocation13 + $0x628] sm:$0xff]
    %v3173 = vld [vmem:[#allocation13 + $0x630] sm:$0xff]
    %v3174 = vld [vmem:[#allocation13 + $0x638] sm:$0xff]
    %v3175 = vld [vmem:[#allocation13 + $0x640] sm:$0xff]
    %v3176 = vld [vmem:[#allocation13 + $0x648] sm:$0xff]
    %v3177 = vld [vmem:[#allocation13 + $0x650] sm:$0xff]
    %v3178 = vld [vmem:[#allocation13 + $0x658] sm:$0xff]
    %v3179 = vld [vmem:[#allocation13 + $0x660] sm:$0xff]
    %v3180 = vld [vmem:[#allocation13 + $0x668] sm:$0xff]
    %v3181 = vld [vmem:[#allocation13 + $0x670] sm:$0xff]
    %v3182 = vld [vmem:[#allocation13 + $0x678] sm:$0xff]
    %v3183 = vld [vmem:[#allocation13 + $0x680] sm:$0xff]
    %v3184 = vld [vmem:[#allocation13 + $0x688] sm:$0xff]
    %v3185 = vld [vmem:[#allocation13 + $0x690] sm:$0xff]
    %v3186 = vld [vmem:[#allocation13 + $0x698] sm:$0xff]
    %v3187 = vld [vmem:[#allocation13 + $0x6a0] sm:$0xff]
    %v3188 = vld [vmem:[#allocation13 + $0x6a8] sm:$0xff]
    %v3189 = vld [vmem:[#allocation13 + $0x6b0] sm:$0xff]
    %v3190 = vld [vmem:[#allocation13 + $0x6b8] sm:$0xff]
    %v3191 = vld [vmem:[#allocation13 + $0x6c0] sm:$0xff]
    %v3192 = vld [vmem:[#allocation13 + $0x6c8] sm:$0xff]
    %v3193 = vld [vmem:[#allocation13 + $0x6d0] sm:$0xff]
    %v3194 = vld [vmem:[#allocation13 + $0x6d8] sm:$0xff]
    %v3195 = vld [vmem:[#allocation13 + $0x6e0] sm:$0xff]
    %v3196 = vld [vmem:[#allocation13 + $0x6e8] sm:$0xff]
    %v3197 = vld [vmem:[#allocation13 + $0x6f0] sm:$0xff]
    %v3198 = vld [vmem:[#allocation13 + $0x6f8] sm:$0xff]
    %v3199 = vld [vmem:[#allocation13 + $0x700] sm:$0xff]
    %v3200 = vld [vmem:[#allocation13 + $0x708] sm:$0xff]
    %v3201 = vld [vmem:[#allocation13 + $0x710] sm:$0xff]
    %v3202 = vld [vmem:[#allocation13 + $0x718] sm:$0xff]
    %v3203 = vld [vmem:[#allocation13 + $0x720] sm:$0xff]
    %v3204 = vld [vmem:[#allocation13 + $0x728] sm:$0xff]
    %v3205 = vld [vmem:[#allocation13 + $0x730] sm:$0xff]
    %v3206 = vld [vmem:[#allocation13 + $0x738] sm:$0xff]
    %v3207 = vld [vmem:[#allocation13 + $0x740] sm:$0xff]
    %v3208 = vld [vmem:[#allocation13 + $0x748] sm:$0xff]
    %v3209 = vld [vmem:[#allocation13 + $0x750] sm:$0xff]
    %v3210 = vld [vmem:[#allocation13 + $0x758] sm:$0xff]
    %v3211 = vld [vmem:[#allocation13 + $0x760] sm:$0xff]
    %v3212 = vld [vmem:[#allocation13 + $0x768] sm:$0xff]
    %v3213 = vld [vmem:[#allocation13 + $0x770] sm:$0xff]
    %v3214 = vld [vmem:[#allocation13 + $0x778] sm:$0xff]
    %v3215 = vld [vmem:[#allocation13 + $0x780] sm:$0xff]
    %v3216 = vld [vmem:[#allocation13 + $0x788] sm:$0xff]
    %v3217 = vld [vmem:[#allocation13 + $0x790] sm:$0xff]
    %v3218 = vld [vmem:[#allocation13 + $0x798] sm:$0xff]
    %v3219 = vld [vmem:[#allocation13 + $0x7a0] sm:$0xff]
    %v3220 = vld [vmem:[#allocation13 + $0x7a8] sm:$0xff]
    %v3221 = vld [vmem:[#allocation13 + $0x7b0] sm:$0xff]
    %v3222 = vld [vmem:[#allocation13 + $0x7b8] sm:$0xff]
    %v3223 = vld [vmem:[#allocation13 + $0x7c0] sm:$0xff]
    %v3224 = vld [vmem:[#allocation13 + $0x7c8] sm:$0xff]
    %v3225 = vld [vmem:[#allocation13 + $0x7d0] sm:$0xff]
    %v3226 = vld [vmem:[#allocation13 + $0x7d8] sm:$0xff]
    %v3227 = vld [vmem:[#allocation13 + $0x7e0] sm:$0xff]
    %v3228 = vld [vmem:[#allocation13 + $0x7e8] sm:$0xff]
    %v3229 = vld [vmem:[#allocation13 + $0x7f0] sm:$0xff]
    %v3230 = vld [vmem:[#allocation13 + $0x7f8] sm:$0xff]
    %v3231 = vadd.f32 %v2046, %v2048
    %v3232 = vadd.f32 %v3231, %v2200
    %v3233 = vadd.f32 %v3232, %v2202
    %3234 = vadd.xlane.f32.xlu0 %v3233
    %v3235 = vpop.xlane.xlu0 %3234
    %v3236 = vadd.f32 %v2052, %v2054
    %v3237 = vadd.f32 %v3236, %v2206
    %v3238 = vadd.f32 %v3237, %v2208
    %3239 = vadd.xlane.f32.xlu0 %v3238
    %v3240 = vpop.xlane.xlu0 %3239
    %v3241 = vmul.f32 %v3235, %v2476
    %v3242 = vmul.f32 %v3240, %v2476
    %v3243 = vsub.f32 %v2046, %v3241
    %v3244 = vsub.f32 %v2048, %v3241
    %v3245 = vsub.f32 %v2200, %v3241
    %v3246 = vsub.f32 %v2202, %v3241
    %v3247 = vsub.f32 %v2052, %v3242
    %v3248 = vsub.f32 %v2054, %v3242
    %v3249 = vsub.f32 %v2206, %v3242
    %v3250 = vsub.f32 %v2208, %v3242
    %v3251 = vmul.f32 %v3243, %v3243
    %v3252 = vmul.f32 %v3244, %v3244
    %v3253 = vmul.f32 %v3245, %v3245
    %v3254 = vmul.f32 %v3246, %v3246
    %v3255 = vmul.f32 %v3247, %v3247
    %v3256 = vmul.f32 %v3248, %v3248
    %v3257 = vmul.f32 %v3249, %v3249
    %v3258 = vmul.f32 %v3250, %v3250
    %v3259 = vadd.f32 %v3251, %v3252
    %v3260 = vadd.f32 %v3259, %v3253
    %v3261 = vadd.f32 %v3260, %v3254
    %3262 = vadd.xlane.f32.xlu0 %v3261
    %v3263 = vpop.xlane.xlu0 %3262
    %v3264 = vadd.f32 %v3255, %v3256
    %v3265 = vadd.f32 %v3264, %v3257
    %v3266 = vadd.f32 %v3265, %v3258
    %3267 = vadd.xlane.f32.xlu0 %v3266
    %v3268 = vpop.xlane.xlu0 %3267
    %v3269 = vmul.f32 %v3263, %v2476
    %v3270 = vmul.f32 %v3268, %v2476
    %v3271 = vadd.f32 %v3269, 1e-05
    %v3272 = vadd.f32 %v3270, 1e-05
    %v3273 = vrsqrt.pop %v3271
    %v3274 = vrsqrt.pop %v3272
    %v3275 = vmul.f32 %v3243, %v3273
    %v3276 = vmul.f32 %v3244, %v3273
    %v3277 = vmul.f32 %v3245, %v3273
    %v3278 = vmul.f32 %v3246, %v3273
    %v3279 = vmul.f32 %v3247, %v3274
    %v3280 = vmul.f32 %v3248, %v3274
    %v3281 = vmul.f32 %v3249, %v3274
    %v3282 = vmul.f32 %v3250, %v3274
    %v3283 = vlaneseq
    %v3284 = vshrl.u32 %v3283, 7
    %v3285 = vsub.s32 1, %v3284
    %v3286 = vrot.slane %v173, %v3285
    %v3287 = vlaneseq
    %v3288 = vshrl.u32 %v3287, 7
    %v3289 = vsub.s32 5, %v3288
    %v3290 = vrot.slane %v173, %v3289
    %v3291 = vlaneseq
    %v3292 = vshrl.u32 %v3291, 7
    %v3293 = vsub.s32 1, %v3292
    %v3294 = vrot.slane %v174, %v3293
    %v3295 = vlaneseq
    %v3296 = vshrl.u32 %v3295, 7
    %v3297 = vsub.s32 5, %v3296
    %v3298 = vrot.slane %v174, %v3297
    %v3303 = vlaneseq
    %v3304 = vshrl.u32 %v3303, 7
    %v3305 = vsub.s32 1, %v3304
    %v3306 = vrot.slane %v3286, %v3305
    %v3307 = vlaneseq
    %v3308 = vshrl.u32 %v3307, 7
    %v3309 = vsub.s32 1, %v3308
    %v3310 = vrot.slane %v3290, %v3309
    %v3311 = vlaneseq
    %v3312 = vshrl.u32 %v3311, 7
    %v3313 = vsub.s32 1, %v3312
    %v3314 = vrot.slane %v3294, %v3313
    %v3315 = vlaneseq
    %v3316 = vshrl.u32 %v3315, 7
    %v3317 = vsub.s32 1, %v3316
    %v3318 = vrot.slane %v3298, %v3317
    %v3319 = vmul.f32 %v3275, %v3306
    %v3320 = vmul.f32 %v3276, %v3310
    %v3321 = vmul.f32 %v3277, %v3314
    %v3322 = vmul.f32 %v3278, %v3318
    %v3323 = vmul.f32 %v3279, %v3306
    %v3324 = vmul.f32 %v3280, %v3310
    %v3325 = vmul.f32 %v3281, %v3314
    %v3326 = vmul.f32 %v3282, %v3318
    %v3327 = vlaneseq
    %v3328 = vshrl.u32 %v3327, 7
    %v3329 = vsub.s32 2, %v3328
    %v3330 = vrot.slane %v173, %v3329
    %v3331 = vlaneseq
    %v3332 = vshrl.u32 %v3331, 7
    %v3333 = vsub.s32 6, %v3332
    %v3334 = vrot.slane %v173, %v3333
    %v3335 = vlaneseq
    %v3336 = vshrl.u32 %v3335, 7
    %v3337 = vsub.s32 2, %v3336
    %v3338 = vrot.slane %v174, %v3337
    %v3339 = vlaneseq
    %v3340 = vshrl.u32 %v3339, 7
    %v3341 = vsub.s32 6, %v3340
    %v3342 = vrot.slane %v174, %v3341
    %v3347 = vlaneseq
    %v3348 = vshrl.u32 %v3347, 7
    %v3349 = vsub.s32 2, %v3348
    %v3350 = vrot.slane %v3330, %v3349
    %v3351 = vlaneseq
    %v3352 = vshrl.u32 %v3351, 7
    %v3353 = vsub.s32 2, %v3352
    %v3354 = vrot.slane %v3334, %v3353
    %v3355 = vlaneseq
    %v3356 = vshrl.u32 %v3355, 7
    %v3357 = vsub.s32 2, %v3356
    %v3358 = vrot.slane %v3338, %v3357
    %v3359 = vlaneseq
    %v3360 = vshrl.u32 %v3359, 7
    %v3361 = vsub.s32 2, %v3360
    %v3362 = vrot.slane %v3342, %v3361
    %v3363 = vadd.f32 %v3319, %v3350
    %v3364 = vadd.f32 %v3320, %v3354
    %v3365 = vadd.f32 %v3321, %v3358
    %v3366 = vadd.f32 %v3322, %v3362
    %v3367 = vadd.f32 %v3323, %v3350
    %v3368 = vadd.f32 %v3324, %v3354
    %v3369 = vadd.f32 %v3325, %v3358
    %v3370 = vadd.f32 %v3326, %v3362
    %vm3371 = vcmp.ge.f32.partialorder %v3363, 0.0
    %vm3372 = vcmp.ge.f32.partialorder %v3364, 0.0
    %vm3373 = vcmp.ge.f32.partialorder %v3365, 0.0
    %vm3374 = vcmp.ge.f32.partialorder %v3366, 0.0
    %vm3375 = vcmp.ge.f32.partialorder %v3367, 0.0
    %vm3376 = vcmp.ge.f32.partialorder %v3368, 0.0
    %vm3377 = vcmp.ge.f32.partialorder %v3369, 0.0
    %vm3378 = vcmp.ge.f32.partialorder %v3370, 0.0
    %v3379 = vmul.f32 %v3363, 0.01
    %v3380 = vmul.f32 %v3364, 0.01
    %v3381 = vmul.f32 %v3365, 0.01
    %v3382 = vmul.f32 %v3366, 0.01
    %v3383 = vmul.f32 %v3367, 0.01
    %v3384 = vmul.f32 %v3368, 0.01
    %v3385 = vmul.f32 %v3369, 0.01
    %v3386 = vmul.f32 %v3370, 0.01
    %v3387 = vsel %vm3371, %v3363, %v3379
    %v3388 = vsel %vm3372, %v3364, %v3380
    %v3389 = vsel %vm3373, %v3365, %v3381
    %v3390 = vsel %vm3374, %v3366, %v3382
    %v3391 = vsel %vm3375, %v3367, %v3383
    %v3392 = vsel %vm3376, %v3368, %v3384
    %v3393 = vsel %vm3377, %v3369, %v3385
    %v3394 = vsel %vm3378, %v3370, %v3386
    %v3395 = vlaneseq
    %v3396 = vshrl.u32 %v3395, 7
    %v3397 = vsub.s32 2, %v3396
    %v3398 = vrot.slane %v169, %v3397
    %v3399 = vlaneseq
    %v3400 = vshrl.u32 %v3399, 7
    %v3401 = vsub.s32 6, %v3400
    %v3402 = vrot.slane %v169, %v3401
    %v3403 = vlaneseq
    %v3404 = vshrl.u32 %v3403, 7
    %v3405 = vsub.s32 2, %v3404
    %v3406 = vrot.slane %v170, %v3405
    %v3407 = vlaneseq
    %v3408 = vshrl.u32 %v3407, 7
    %v3409 = vsub.s32 6, %v3408
    %v3410 = vrot.slane %v170, %v3409
    %v3415 = vlaneseq
    %v3416 = vshrl.u32 %v3415, 7
    %v3417 = vsub.s32 2, %v3416
    %v3418 = vrot.slane %v3398, %v3417
    %v3419 = vlaneseq
    %v3420 = vshrl.u32 %v3419, 7
    %v3421 = vsub.s32 2, %v3420
    %v3422 = vrot.slane %v3402, %v3421
    %v3423 = vlaneseq
    %v3424 = vshrl.u32 %v3423, 7
    %v3425 = vsub.s32 2, %v3424
    %v3426 = vrot.slane %v3406, %v3425
    %v3427 = vlaneseq
    %v3428 = vshrl.u32 %v3427, 7
    %v3429 = vsub.s32 2, %v3428
    %v3430 = vrot.slane %v3410, %v3429
    %3431 = vmatprep.subr.mxu0 %v2976
    %3432 = vmatpush1.msra.mxu0 %v2975
    %3433 = vmatprep.subr.mxu0 %v2980
    %3434 = vmatpush1.msra.mxu0 %v2979
    %3435 = vmatprep.subr.mxu0 %v2984
    %3436 = vmatpush1.msra.mxu0 %v2983
    %3437 = vmatprep.subr.mxu0 %v2988
    %3438 = vmatpush1.msra.mxu0 %v2987
    %3439 = vmatprep.subr.mxu0 %v2992
    %3440 = vmatpush1.msra.mxu0 %v2991
    %3441 = vmatprep.subr.mxu0 %v2996
    %3442 = vmatpush1.msra.mxu0 %v2995
    %3443 = vmatprep.subr.mxu0 %v3000
    %3444 = vmatpush1.msra.mxu0 %v2999
    %3445 = vmatprep.subr.mxu0 %v3004
    %3446 = vmatpush1.msra.mxu0 %v3003
    %3447 = vmatprep.subr.mxu0 %v3008
    %3448 = vmatpush1.msra.mxu0 %v3007
    %3449 = vmatprep.subr.mxu0 %v3012
    %3450 = vmatpush1.msra.mxu0 %v3011
    %3451 = vmatprep.subr.mxu0 %v3016
    %3452 = vmatpush1.msra.mxu0 %v3015
    %3453 = vmatprep.subr.mxu0 %v3020
    %3454 = vmatpush1.msra.mxu0 %v3019
    %3455 = vmatprep.subr.mxu0 %v3024
    %3456 = vmatpush1.msra.mxu0 %v3023
    %3457 = vmatprep.subr.mxu0 %v3028
    %3458 = vmatpush1.msra.mxu0 %v3027
    %3459 = vmatprep.subr.mxu0 %v3032
    %3460 = vmatpush1.msra.mxu0 %v3031
    %3461 = vmatprep.subr.mxu0 %v3036
    %3462 = vmatpush1.msra.mxu0 %v3035
    %3463 = vmatprep.subr.mxu0 %v3040
    %3464 = vmatpush1.msra.mxu0 %v3039
    %3465 = vmatprep.subr.mxu0 %v3044
    %3466 = vmatpush1.msra.mxu0 %v3043
    %3467 = vmatprep.subr.mxu0 %v3048
    %3468 = vmatpush1.msra.mxu0 %v3047
    %3469 = vmatprep.subr.mxu0 %v3052
    %3470 = vmatpush1.msra.mxu0 %v3051
    %3471 = vmatprep.subr.mxu0 %v3056
    %3472 = vmatpush1.msra.mxu0 %v3055
    %3473 = vmatprep.subr.mxu0 %v3060
    %3474 = vmatpush1.msra.mxu0 %v3059
    %3475 = vmatprep.subr.mxu0 %v3064
    %3476 = vmatpush1.msra.mxu0 %v3063
    %3477 = vmatprep.subr.mxu0 %v3068
    %3478 = vmatpush1.msra.mxu0 %v3067
    %3479 = vmatprep.subr.mxu0 %v3072
    %3480 = vmatpush1.msra.mxu0 %v3071
    %3481 = vmatprep.subr.mxu0 %v3076
    %3482 = vmatpush1.msra.mxu0 %v3075
    %3483 = vmatprep.subr.mxu0 %v3080
    %3484 = vmatpush1.msra.mxu0 %v3079
    %3485 = vmatprep.subr.mxu0 %v3084
    %3486 = vmatpush1.msra.mxu0 %v3083
    %3487 = vmatprep.subr.mxu0 %v3088
    %3488 = vmatpush1.msra.mxu0 %v3087
    %3489 = vmatprep.subr.mxu0 %v3092
    %3490 = vmatpush1.msra.mxu0 %v3091
    %3491 = vmatprep.subr.mxu0 %v3096
    %3492 = vmatpush1.msra.mxu0 %v3095
    %3493 = vmatprep.subr.mxu0 %v3100
    %3494 = vmatpush1.msra.mxu0 %v3099
    %3495 = vmatprep.mubr.f32.mxu0 %v3388
    %3496 = vmatmul.mubr.f32.gmra.mrb[0].mxu0 %v3387
    %v3497 = vpop.f32.mrb[0].mxu0
    %v3498 = vadd.f32 %v3418, %v3497
    %v3499 = vpop.f32.mrb[0].mxu0
    %v3500 = vadd.f32 %v3422, %v3499
    %3501 = vmatprep.mubr.f32.mxu0 %v3392
    %3502 = vmatmul.mubr.f32.gmra.mrb[0].mxu0 %v3391
    %v3503 = vpop.f32.mrb[0].mxu0
    %v3504 = vadd.f32 %v3418, %v3503
    %v3505 = vpop.f32.mrb[0].mxu0
    %v3506 = vadd.f32 %v3422, %v3505
    %3507 = vdwg.mxu0
    %3508 = vmatprep.subr.mxu0 %v3104
    %3509 = vmatpush1.msra.mxu0 %v3103
    %3510 = vmatprep.subr.mxu0 %v3108
    %3511 = vmatpush1.msra.mxu0 %v3107
    %3512 = vmatprep.subr.mxu0 %v3112
    %3513 = vmatpush1.msra.mxu0 %v3111
    %3514 = vmatprep.subr.mxu0 %v3116
    %3515 = vmatpush1.msra.mxu0 %v3115
    %3516 = vmatprep.subr.mxu0 %v3120
    %3517 = vmatpush1.msra.mxu0 %v3119
    %3518 = vmatprep.subr.mxu0 %v3124
    %3519 = vmatpush1.msra.mxu0 %v3123
    %3520 = vmatprep.subr.mxu0 %v3128
    %3521 = vmatpush1.msra.mxu0 %v3127
    %3522 = vmatprep.subr.mxu0 %v3132
    %3523 = vmatpush1.msra.mxu0 %v3131
    %3524 = vmatprep.subr.mxu0 %v3136
    %3525 = vmatpush1.msra.mxu0 %v3135
    %3526 = vmatprep.subr.mxu0 %v3140
    %3527 = vmatpush1.msra.mxu0 %v3139
    %3528 = vmatprep.subr.mxu0 %v3144
    %3529 = vmatpush1.msra.mxu0 %v3143
    %3530 = vmatprep.subr.mxu0 %v3148
    %3531 = vmatpush1.msra.mxu0 %v3147
    %3532 = vmatprep.subr.mxu0 %v3152
    %3533 = vmatpush1.msra.mxu0 %v3151
    %3534 = vmatprep.subr.mxu0 %v3156
    %3535 = vmatpush1.msra.mxu0 %v3155
    %3536 = vmatprep.subr.mxu0 %v3160
    %3537 = vmatpush1.msra.mxu0 %v3159
    %3538 = vmatprep.subr.mxu0 %v3164
    %3539 = vmatpush1.msra.mxu0 %v3163
    %3540 = vmatprep.subr.mxu0 %v3168
    %3541 = vmatpush1.msra.mxu0 %v3167
    %3542 = vmatprep.subr.mxu0 %v3172
    %3543 = vmatpush1.msra.mxu0 %v3171
    %3544 = vmatprep.subr.mxu0 %v3176
    %3545 = vmatpush1.msra.mxu0 %v3175
    %3546 = vmatprep.subr.mxu0 %v3180
    %3547 = vmatpush1.msra.mxu0 %v3179
    %3548 = vmatprep.subr.mxu0 %v3184
    %3549 = vmatpush1.msra.mxu0 %v3183
    %3550 = vmatprep.subr.mxu0 %v3188
    %3551 = vmatpush1.msra.mxu0 %v3187
    %3552 = vmatprep.subr.mxu0 %v3192
    %3553 = vmatpush1.msra.mxu0 %v3191
    %3554 = vmatprep.subr.mxu0 %v3196
    %3555 = vmatpush1.msra.mxu0 %v3195
    %3556 = vmatprep.subr.mxu0 %v3200
    %3557 = vmatpush1.msra.mxu0 %v3199
    %3558 = vmatprep.subr.mxu0 %v3204
    %3559 = vmatpush1.msra.mxu0 %v3203
    %3560 = vmatprep.subr.mxu0 %v3208
    %3561 = vmatpush1.msra.mxu0 %v3207
    %3562 = vmatprep.subr.mxu0 %v3212
    %3563 = vmatpush1.msra.mxu0 %v3211
    %3564 = vmatprep.subr.mxu0 %v3216
    %3565 = vmatpush1.msra.mxu0 %v3215
    %3566 = vmatprep.subr.mxu0 %v3220
    %3567 = vmatpush1.msra.mxu0 %v3219
    %3568 = vmatprep.subr.mxu0 %v3224
    %3569 = vmatpush1.msra.mxu0 %v3223
    %3570 = vmatprep.subr.mxu0 %v3228
    %3571 = vmatpush1.msra.mxu0 %v3227
    %3572 = vmatprep.mubr.f32.mxu0 %v3390
    %3573 = vmatmul.mubr.f32.gmra.mrb[0].mxu0 %v3389
    %v3574 = vpop.f32.mrb[0].mxu0
    %v3575 = vadd.f32 %v3498, %v3574
    %v3576 = vpop.f32.mrb[0].mxu0
    %v3577 = vadd.f32 %v3500, %v3576
    %3578 = vmatprep.mubr.f32.mxu0 %v3394
    %3579 = vmatmul.mubr.f32.gmra.mrb[0].mxu0 %v3393
    %v3580 = vpop.f32.mrb[0].mxu0
    %v3581 = vadd.f32 %v3504, %v3580
    %v3582 = vpop.f32.mrb[0].mxu0
    %v3583 = vadd.f32 %v3506, %v3582
    %3584 = vdwg.mxu0
    %3585 = vmatprep.subr.mxu0 %v2978
    %3586 = vmatpush1.msra.mxu0 %v2977
    %3587 = vmatprep.subr.mxu0 %v2982
    %3588 = vmatpush1.msra.mxu0 %v2981
    %3589 = vmatprep.subr.mxu0 %v2986
    %3590 = vmatpush1.msra.mxu0 %v2985
    %3591 = vmatprep.subr.mxu0 %v2990
    %3592 = vmatpush1.msra.mxu0 %v2989
    %3593 = vmatprep.subr.mxu0 %v2994
    %3594 = vmatpush1.msra.mxu0 %v2993
    %3595 = vmatprep.subr.mxu0 %v2998
    %3596 = vmatpush1.msra.mxu0 %v2997
    %3597 = vmatprep.subr.mxu0 %v3002
    %3598 = vmatpush1.msra.mxu0 %v3001
    %3599 = vmatprep.subr.mxu0 %v3006
    %3600 = vmatpush1.msra.mxu0 %v3005
    %3601 = vmatprep.subr.mxu0 %v3010
    %3602 = vmatpush1.msra.mxu0 %v3009
    %3603 = vmatprep.subr.mxu0 %v3014
    %3604 = vmatpush1.msra.mxu0 %v3013
    %3605 = vmatprep.subr.mxu0 %v3018
    %3606 = vmatpush1.msra.mxu0 %v3017
    %3607 = vmatprep.subr.mxu0 %v3022
    %3608 = vmatpush1.msra.mxu0 %v3021
    %3609 = vmatprep.subr.mxu0 %v3026
    %3610 = vmatpush1.msra.mxu0 %v3025
    %3611 = vmatprep.subr.mxu0 %v3030
    %3612 = vmatpush1.msra.mxu0 %v3029
    %3613 = vmatprep.subr.mxu0 %v3034
    %3614 = vmatpush1.msra.mxu0 %v3033
    %3615 = vmatprep.subr.mxu0 %v3038
    %3616 = vmatpush1.msra.mxu0 %v3037
    %3617 = vmatprep.subr.mxu0 %v3042
    %3618 = vmatpush1.msra.mxu0 %v3041
    %3619 = vmatprep.subr.mxu0 %v3046
    %3620 = vmatpush1.msra.mxu0 %v3045
    %3621 = vmatprep.subr.mxu0 %v3050
    %3622 = vmatpush1.msra.mxu0 %v3049
    %3623 = vmatprep.subr.mxu0 %v3054
    %3624 = vmatpush1.msra.mxu0 %v3053
    %3625 = vmatprep.subr.mxu0 %v3058
    %3626 = vmatpush1.msra.mxu0 %v3057
    %3627 = vmatprep.subr.mxu0 %v3062
    %3628 = vmatpush1.msra.mxu0 %v3061
    %3629 = vmatprep.subr.mxu0 %v3066
    %3630 = vmatpush1.msra.mxu0 %v3065
    %3631 = vmatprep.subr.mxu0 %v3070
    %3632 = vmatpush1.msra.mxu0 %v3069
    %3633 = vmatprep.subr.mxu0 %v3074
    %3634 = vmatpush1.msra.mxu0 %v3073
    %3635 = vmatprep.subr.mxu0 %v3078
    %3636 = vmatpush1.msra.mxu0 %v3077
    %3637 = vmatprep.subr.mxu0 %v3082
    %3638 = vmatpush1.msra.mxu0 %v3081
    %3639 = vmatprep.subr.mxu0 %v3086
    %3640 = vmatpush1.msra.mxu0 %v3085
    %3641 = vmatprep.subr.mxu0 %v3090
    %3642 = vmatpush1.msra.mxu0 %v3089
    %3643 = vmatprep.subr.mxu0 %v3094
    %3644 = vmatpush1.msra.mxu0 %v3093
    %3645 = vmatprep.subr.mxu0 %v3098
    %3646 = vmatpush1.msra.mxu0 %v3097
    %3647 = vmatprep.subr.mxu0 %v3102
    %3648 = vmatpush1.msra.mxu0 %v3101
    %3649 = vmatprep.mubr.f32.mxu0 %v3388
    %3650 = vmatmul.mubr.f32.gmra.mrb[0].mxu0 %v3387
    %v3651 = vpop.f32.mrb[0].mxu0
    %v3652 = vadd.f32 %v3426, %v3651
    %v3653 = vpop.f32.mrb[0].mxu0
    %v3654 = vadd.f32 %v3430, %v3653
    %3655 = vmatprep.mubr.f32.mxu0 %v3392
    %3656 = vmatmul.mubr.f32.gmra.mrb[0].mxu0 %v3391
    %v3657 = vpop.f32.mrb[0].mxu0
    %v3658 = vadd.f32 %v3426, %v3657
    %v3659 = vpop.f32.mrb[0].mxu0
    %v3660 = vadd.f32 %v3430, %v3659
    %3661 = vdwg.mxu0
    %3662 = vmatprep.subr.mxu0 %v3106
    %3663 = vmatpush1.msra.mxu0 %v3105
    %3664 = vmatprep.subr.mxu0 %v3110
    %3665 = vmatpush1.msra.mxu0 %v3109
    %3666 = vmatprep.subr.mxu0 %v3114
    %3667 = vmatpush1.msra.mxu0 %v3113
    %3668 = vmatprep.subr.mxu0 %v3118
    %3669 = vmatpush1.msra.mxu0 %v3117
    %3670 = vmatprep.subr.mxu0 %v3122
    %3671 = vmatpush1.msra.mxu0 %v3121
    %3672 = vmatprep.subr.mxu0 %v3126
    %3673 = vmatpush1.msra.mxu0 %v3125
    %3674 = vmatprep.subr.mxu0 %v3130
    %3675 = vmatpush1.msra.mxu0 %v3129
    %3676 = vmatprep.subr.mxu0 %v3134
    %3677 = vmatpush1.msra.mxu0 %v3133
    %3678 = vmatprep.subr.mxu0 %v3138
    %3679 = vmatpush1.msra.mxu0 %v3137
    %3680 = vmatprep.subr.mxu0 %v3142
    %3681 = vmatpush1.msra.mxu0 %v3141
    %3682 = vmatprep.subr.mxu0 %v3146
    %3683 = vmatpush1.msra.mxu0 %v3145
    %3684 = vmatprep.subr.mxu0 %v3150
    %3685 = vmatpush1.msra.mxu0 %v3149
    %3686 = vmatprep.subr.mxu0 %v3154
    %3687 = vmatpush1.msra.mxu0 %v3153
    %3688 = vmatprep.subr.mxu0 %v3158
    %3689 = vmatpush1.msra.mxu0 %v3157
    %3690 = vmatprep.subr.mxu0 %v3162
    %3691 = vmatpush1.msra.mxu0 %v3161
    %3692 = vmatprep.subr.mxu0 %v3166
    %3693 = vmatpush1.msra.mxu0 %v3165
    %3694 = vmatprep.subr.mxu0 %v3170
    %3695 = vmatpush1.msra.mxu0 %v3169
    %3696 = vmatprep.subr.mxu0 %v3174
    %3697 = vmatpush1.msra.mxu0 %v3173
    %3698 = vmatprep.subr.mxu0 %v3178
    %3699 = vmatpush1.msra.mxu0 %v3177
    %3700 = vmatprep.subr.mxu0 %v3182
    %3701 = vmatpush1.msra.mxu0 %v3181
    %3702 = vmatprep.subr.mxu0 %v3186
    %3703 = vmatpush1.msra.mxu0 %v3185
    %3704 = vmatprep.subr.mxu0 %v3190
    %3705 = vmatpush1.msra.mxu0 %v3189
    %3706 = vmatprep.subr.mxu0 %v3194
    %3707 = vmatpush1.msra.mxu0 %v3193
    %3708 = vmatprep.subr.mxu0 %v3198
    %3709 = vmatpush1.msra.mxu0 %v3197
    %3710 = vmatprep.subr.mxu0 %v3202
    %3711 = vmatpush1.msra.mxu0 %v3201
    %3712 = vmatprep.subr.mxu0 %v3206
    %3713 = vmatpush1.msra.mxu0 %v3205
    %3714 = vmatprep.subr.mxu0 %v3210
    %3715 = vmatpush1.msra.mxu0 %v3209
    %3716 = vmatprep.subr.mxu0 %v3214
    %3717 = vmatpush1.msra.mxu0 %v3213
    %3718 = vmatprep.subr.mxu0 %v3218
    %3719 = vmatpush1.msra.mxu0 %v3217
    %3720 = vmatprep.subr.mxu0 %v3222
    %3721 = vmatpush1.msra.mxu0 %v3221
    %3722 = vmatprep.subr.mxu0 %v3226
    %3723 = vmatpush1.msra.mxu0 %v3225
    %3724 = vmatprep.subr.mxu0 %v3230
    %3725 = vmatpush1.msra.mxu0 %v3229
    %3726 = vmatprep.mubr.f32.mxu0 %v3390
    %3727 = vmatmul.mubr.f32.gmra.mrb[0].mxu0 %v3389
    %v3728 = vpop.f32.mrb[0].mxu0
    %v3729 = vadd.f32 %v3652, %v3728
    %v3730 = vpop.f32.mrb[0].mxu0
    %v3731 = vadd.f32 %v3654, %v3730
    %3732 = vmatprep.mubr.f32.mxu0 %v3394
    %3733 = vmatmul.mubr.f32.gmra.mrb[0].mxu0 %v3393
    %v3734 = vpop.f32.mrb[0].mxu0
    %v3735 = vadd.f32 %v3658, %v3734
    %v3736 = vpop.f32.mrb[0].mxu0
    %v3737 = vadd.f32 %v3660, %v3736
    %3738 = vdwg.mxu0
    %v3739 = vadd.f32 %v2811, 1.0
    %v3740 = vadd.f32 %v2813, 1.0
    %v3741 = vadd.f32 %v2965, 1.0
    %v3742 = vadd.f32 %v2967, 1.0
    %v3743 = vadd.f32 %v2817, 1.0
    %v3744 = vadd.f32 %v2819, 1.0
    %v3745 = vadd.f32 %v2971, 1.0
    %v3746 = vadd.f32 %v2973, 1.0
    %v3747 = vmul.f32 %v998, %v3739
    %v3748 = vmul.f32 %v999, %v3740
    %v3749 = vmul.f32 %v1000, %v3741
    %v3750 = vmul.f32 %v1001, %v3742
    %v3751 = vmul.f32 %v1002, %v3743
    %v3752 = vmul.f32 %v1003, %v3744
    %v3753 = vmul.f32 %v1004, %v3745
    %v3754 = vmul.f32 %v1005, %v3746
    %v3755 = vadd.f32 %v3747, %v3575
    %v3756 = vadd.f32 %v3748, %v3577
    %v3757 = vadd.f32 %v3749, %v3729
    %v3758 = vadd.f32 %v3750, %v3731
    %v3759 = vadd.f32 %v3751, %v3581
    %v3760 = vadd.f32 %v3752, %v3583
    %v3761 = vadd.f32 %v3753, %v3735
    %v3762 = vadd.f32 %v3754, %v3737
    %vm3763 = vcmp.ge.f32.partialorder %v3755, 0.0
    %vm3764 = vcmp.ge.f32.partialorder %v3756, 0.0
    %vm3765 = vcmp.ge.f32.partialorder %v3757, 0.0
    %vm3766 = vcmp.ge.f32.partialorder %v3758, 0.0
    %vm3767 = vcmp.ge.f32.partialorder %v3759, 0.0
    %vm3768 = vcmp.ge.f32.partialorder %v3760, 0.0
    %vm3769 = vcmp.ge.f32.partialorder %v3761, 0.0
    %vm3770 = vcmp.ge.f32.partialorder %v3762, 0.0
    %v3771 = vmul.f32 %v3755, 0.01
    %v3772 = vmul.f32 %v3756, 0.01
    %v3773 = vmul.f32 %v3757, 0.01
    %v3774 = vmul.f32 %v3758, 0.01
    %v3775 = vmul.f32 %v3759, 0.01
    %v3776 = vmul.f32 %v3760, 0.01
    %v3777 = vmul.f32 %v3761, 0.01
    %v3778 = vmul.f32 %v3762, 0.01
    %v3779 = vsel %vm3763, %v3755, %v3771
    %v3780 = vsel %vm3764, %v3756, %v3772
    %v3781 = vsel %vm3765, %v3757, %v3773
    %v3782 = vsel %vm3766, %v3758, %v3774
    %v3783 = vsel %vm3767, %v3759, %v3775
    %v3784 = vsel %vm3768, %v3760, %v3776
    %v3785 = vsel %vm3769, %v3761, %v3777
    %v3786 = vsel %vm3770, %v3762, %v3778
    %3787 = vst [vmem:[#allocation17] sm:$0xff] %v3779
    %3788 = vst [vmem:[#allocation17 + $0x8] sm:$0xff] %v3780
    %3789 = vst [vmem:[#allocation17 + $0x10] sm:$0xff] %v3781
    %3790 = vst [vmem:[#allocation17 + $0x18] sm:$0xff] %v3782
    %3791 = vst [vmem:[#allocation17 + $0x20] sm:$0xff] %v3783
    %3792 = vst [vmem:[#allocation17 + $0x28] sm:$0xff] %v3784
    %3793 = vst [vmem:[#allocation17 + $0x30] sm:$0xff] %v3785
    %3794 = vst [vmem:[#allocation17 + $0x38] sm:$0xff] %v3786
    // Predicated region
    $region74: #{tpu_custom_call.1} parent=1 // pred_check
      _
    $region75: #{tpu_custom_call.1} parent=1 // pred_check_branch
      %3796 = sbr.rel (0) target = $region77
    $region76: #{tpu_custom_call.1} parent=1 // pred_region
      %s3798 = ssub.s32 1024, 1024
      %3799 = vsyncadd [#allocation4], %s3798
      %s3800 = sshll.u32 [#allocation17], 4
      %s3801 = int_to_ptr.vmem [resolvable:$true] %s3800
      %3806 = dma.vmem_to_hbm [thread:$0]  %s3801, 1024, %s9, [#allocation4], 512, 512, 32
    $region77: #{tpu_custom_call.1} parent=1 // pred_fallthru
      _
    // Predicated region
    $region78: #{tpu_custom_call.1} parent=1 // pred_check
      _
    $region79: #{tpu_custom_call.1} parent=1 // pred_check_branch
      %3808 = sbr.rel (0) target = $region81
    $region80: #{tpu_custom_call.1} parent=1 // pred_region
      %3809 = dma.done [#allocation4], 1024
    $region81: #{tpu_custom_call.1} parent=1 // pred_fallthru
      _
    %3810 = vsyncpa [#allocation3], 1
    %3811 = vsyncpa [#allocation6], 1
    %3812 = vsyncpa [#allocation9], 1
    %3813 = vsyncpa [#allocation12], 1
    %3814 = vsyncpa [#allocation15], 1
    %3815 = vsyncpa [#allocation4], 1

</llo_original>
